<compile_context>
chip_gen: v7x
topology: tpu7x:2x2x1
jax: 0.10.0
libtpu: 0.0.40
codegen_flags: <defaults>
</compile_context>

<pallas_src>
import numpy as np
import jax
import jax.numpy as jnp
from jax.experimental import pallas as pl
from jax.experimental.pallas import tpu as pltpu


# ----------------------------------------------------------------------------
# Kernel 1: per-snapshot GCN (2 layers) + top-1 sort-pool.
# Grid over blocks of Tb snapshots; no cross-step state -> "parallel" grid.
# ----------------------------------------------------------------------------
def _make_gcn_pool_kernel(Tb, N, H):
    def kernel(counts_ref,                       # (T,) int32 SMEM (prefetch)
               a_ref, x_ref,                     # (Tb,N,N) / (Tb,N,Fp) bf16
               w1_ref, b1_ref, w2_ref, b2_ref,   # GCN weights
               out_ref):                         # (Tb, H) f32 pooled block
        g = pl.program_id(0)
        w1 = w1_ref[...]
        b1 = b1_ref[...]
        w2 = w2_ref[...]
        b2 = b2_ref[...]
        iota_s = jax.lax.broadcasted_iota(jnp.int32, (N, 1), 0)   # sublane
        iota_l = jax.lax.broadcasted_iota(jnp.int32, (1, N), 1)   # lane

        for i in range(Tb):                      # static unroll (Tb is small)
            a = a_ref[i]                         # (N, N) bf16 normalized adj
            x = x_ref[i]                         # (N, Fp) bf16 feats + labels

            # 2-layer GCN: bf16 MXU matmuls with f32 accumulation.  Padded
            # rows/cols of A and X are zero, so valid rows need no explicit
            # mask; padding only matters for the sort-pool argmax below.
            xw = jnp.dot(x, w1, preferred_element_type=jnp.float32)
            h1 = jnp.maximum(
                jnp.dot(a, xw.astype(jnp.bfloat16),
                        preferred_element_type=jnp.float32) + b1, 0.0)
            hw = jnp.dot(h1.astype(jnp.bfloat16), w2,
                         preferred_element_type=jnp.float32)
            h2 = jnp.maximum(
                jnp.dot(a, hw.astype(jnp.bfloat16),
                        preferred_element_type=jnp.float32) + b2, 0.0)

            # global_sort_pool truncated to hidden_dim == H -> features of the
            # node with the largest last channel (first index on exact ties).
            # Compare/select math stays in f32; the gather is a (1,N)@(N,H)
            # one-hot matmul on the (otherwise idle) MXU.
            nvalid = counts_ref[g * Tb + i]
            last = h2[:, H - 1:H]                                   # (N, 1)
            masked = jnp.where(iota_s < nvalid, last, jnp.float32(-1e30))
            mx = jnp.max(masked, axis=0, keepdims=True)             # (1, 1)
            idx = jnp.min(jnp.where(masked >= mx, iota_s, jnp.int32(N)),
                          axis=0, keepdims=True)                    # (1, 1)
            onehot = (iota_l == idx).astype(jnp.float32)            # (1, N)
            pooled = jnp.dot(onehot, h2,
                             preferred_element_type=jnp.float32)    # (1, H)
            out_ref[i:i + 1, :] = pooled

    return kernel


# ----------------------------------------------------------------------------
# Kernel 2: tiny epilogue — GRU over the (T, H) pooled sequence + classifier.
# ----------------------------------------------------------------------------
def _make_gru_cls_kernel(T, H, Gp):
    def kernel(seq_ref,                                   # (T, H) f32
               wih_ref, whh_ref, bi_ref, bhn_ref,         # GRU (gate-padded)
               wc1_ref, bc1_ref, wc2_ref, bc2_ref,        # classifier
               out_ref):                                  # (1, 1)
        if T > 1:
            # Hoisted input projection: one (T,H)@(H,3*Gp) matmul.  r/z biases
            # are pre-summed host-side; each gate block is padded to Gp=128
            # lanes so the slices below land on lane-tile boundaries.
            seq = seq_ref[...]
            xproj = jnp.dot(seq, wih_ref[...],
                            preferred_element_type=jnp.float32) + bi_ref[...]
            h = jnp.zeros((1, Gp), jnp.float32)
            for k in range(T):                            # static unroll
                xt = xproj[k:k + 1, :]                    # (1, 3*Gp)
                hp = jnp.dot(h, whh_ref[...],
                             preferred_element_type=jnp.float32)
                r = jax.nn.sigmoid(xt[:, 0:Gp] + hp[:, 0:Gp])
                z = jax.nn.sigmoid(xt[:, Gp:2 * Gp] + hp[:, Gp:2 * Gp])
                n = jnp.tanh(xt[:, 2 * Gp:3 * Gp]
                             + r * (hp[:, 2 * Gp:3 * Gp] + bhn_ref[...]))
                h = (1.0 - z) * n + z * h                 # pad lanes stay 0
            cls_in, wc1 = h, wc1_ref[...]                 # (1,Gp), (Gp,H2)
        else:
            # PyTorch reference skips the GRU for a single snapshot.
            cls_in, wc1 = seq_ref[...], wc1_ref[0:H, :]   # (1,H), (H,H2)

        # Classifier: Linear -> ReLU -> Dropout(eval: identity) -> Linear
        # -> Sigmoid.
        # TODO(synk): training-mode Dropout(0.2) not implemented (inference).
        hid = jnp.maximum(
            jnp.dot(cls_in, wc1, preferred_element_type=jnp.float32)
            + bc1_ref[...], 0.0)
        y = jnp.dot(hid, wc2_ref[...],
                    preferred_element_type=jnp.float32) + bc2_ref[...]
        out_ref[...] = jax.nn.sigmoid(y)

    return kernel


# ----------------------------------------------------------------------------
# Runner
# ----------------------------------------------------------------------------
def _choose_tb(T, N, Fp, budget_bytes=24 << 20):
    """Largest divisor of T whose double-buffered bf16 (A, X) blocks fit the
    VMEM budget (safe on v5e/v6e scoped defaults and v7x's 64 MiB physical)."""
    per = 2 * (N * N + N * Fp)                  # bf16 bytes per snapshot
    tb = max(1, min(T, budget_bytes // (2 * per)))
    while T % tb:
        tb -= 1
    return int(tb)


def _run_strgnn(A, X, counts, p):
    T, N, _ = A.shape
    Fp = X.shape[2]
    H, Gp = p["H"], p["Gp"]
    Tb = _choose_tb(T, N, Fp)
    G = T // Tb

    # TODO(synk): for very large node buckets (N >= ~2800 bf16) tile A over
    # node-row blocks (extra grid axis) instead of loading full (N,N) blocks.
    block_bytes = 2 * Tb * (N * N + N * Fp)     # one bf16 (A, X) block
    vmem_limit = int(min(64 << 20, max(32 << 20, 2 * block_bytes + (8 << 20))))

    seq = pl.pallas_call(
        _make_gcn_pool_kernel(Tb, N, H),
        out_shape=jax.ShapeDtypeStruct((G, Tb, H), jnp.float32),
        grid_spec=pltpu.PrefetchScalarGridSpec(
            num_scalar_prefetch=1,              # counts -> SMEM
            grid=(G,),
            in_specs=[
                pl.BlockSpec((Tb, N, N), lambda g, c: (g, 0, 0)),
                pl.BlockSpec((Tb, N, Fp), lambda g, c: (g, 0, 0)),
                pl.BlockSpec((Fp, H), lambda g, c: (0, 0)),
                pl.BlockSpec((1, H), lambda g, c: (0, 0)),
                pl.BlockSpec((H, H), lambda g, c: (0, 0)),
                pl.BlockSpec((1, H), lambda g, c: (0, 0)),
            ],
            out_specs=pl.BlockSpec((None, Tb, H), lambda g, c: (g, 0, 0)),
        ),
        compiler_params=pltpu.CompilerParams(
            # De-fused epilogue -> no cross-step scratch -> megacore-parallel.
            dimension_semantics=("parallel",),
            vmem_limit_bytes=vmem_limit),
    )(counts, A, X, p["w1"], p["b1"], p["w2"], p["b2"])

    seq = seq.reshape(T, H)                     # ~1 KiB intermediate

    # TODO(synk): batch independent edge windows on a leading "parallel" axis
    # for deployment-scale throughput; single-window interface kept here.
    out = pl.pallas_call(
        _make_gru_cls_kernel(T, H, Gp),
        out_shape=jax.ShapeDtypeStruct((1, 1), jnp.float32),
    )(seq, p["w_ih"], p["w_hh"], p["b_i"], p["b_hn"],
      p["wc1"], p["bc1"], p["wc2"], p["bc2"])
    return out


# ----------------------------------------------------------------------------
# Host-side glue (identical semantics to the PyTorch reference)
# ----------------------------------------------------------------------------
def _extract_h_hop_subgraph(edge_index, center_nodes, k_hop):
    ei = np.asarray(edge_index)
    sub = set(int(c) for c in center_nodes)
    for _ in range(k_hop):
        new = set()
        for node in sub:
            new.update(ei[1][ei[0] == node].tolist())
            new.update(ei[0][ei[1] == node].tolist())
        sub.update(new)
    nodes = list(sub)
    mapping = {old: i for i, old in enumerate(nodes)}
    if ei.shape[1] > 0 and len(nodes) > 0:
        keep = np.isin(ei[0], nodes) & np.isin(ei[1], nodes)
        e = ei[:, keep]
        e = np.stack([
            np.array([mapping[int(s)] for s in e[0]], dtype=np.int64),
            np.array([mapping[int(t)] for t in e[1]], dtype=np.int64),
        ])
    else:
        e = np.zeros((2, 0), np.int64)
    return nodes, e, mapping


def _gcn_norm_dense(edges, n):
    """Dense D^-1/2 (A + I) D^-1/2 (PyG gcn_norm, flow source->target)."""
    A = np.zeros((n, n), np.float32)
    if edges.shape[1] > 0:
        np.add.at(A, (edges[1], edges[0]), 1.0)      # A[target, source] += 1
    diag = np.arange(n)
    A[diag, diag] += (A[diag, diag] == 0).astype(np.float32)  # missing self loops
    deg = A.sum(axis=1)                              # in-degree incl. self loop
    dinv = 1.0 / np.sqrt(deg)
    return (dinv[:, None] * A * dinv[None, :]).astype(np.float32)


def _bucket_nodes(n):
    """Bucket padded node count: 128 minimum, then multiples of 256 (avoids
    the up-to-4x waste of power-of-two bucketing at large N)."""
    n = max(int(n), 1)
    if n <= 128:
        return 128
    return int(np.ceil(n / 256) * 256)


def strgnn_forward(temporal_data, params, k_hop=2):
    F_raw, Fp, label_dim = params["F_raw"], params["Fp"], 3

    prepared, sizes = [], []
    for x, edge_index, target_nodes in temporal_data:
        nodes, sub_e, _ = _extract_h_hop_subgraph(edge_index, target_nodes, k_hop)
        prepared.append((np.asarray(x, np.float32), nodes, sub_e,
                         set(int(t) for t in target_nodes)))
        sizes.append(len(nodes))
    n_max = _bucket_nodes(max(max(sizes), 1))

    A_b, X_b, cnts = [], [], []
    for x_np, nodes, sub_e, tgt in prepared:
        n = len(nodes)
        A_pad = np.zeros((n_max, n_max), np.float32)
        X_pad = np.zeros((n_max, Fp), np.float32)
        if n > 0:
            A_pad[:n, :n] = _gcn_norm_dense(sub_e, n)
            labels = np.zeros((n, label_dim), np.float32)
            for i, nd in enumerate(nodes):
                labels[i] = [1.0, 0.0, 0.0] if nd in tgt else [0.0, 1.0, 0.0]
            X_pad[:n, :F_raw] = np.concatenate([x_np[nodes], labels], axis=1)
        A_b.append(A_pad)
        X_b.append(X_pad)
        cnts.append(n)

    A = jnp.asarray(np.stack(A_b), jnp.bfloat16)      # bf16 halves DMA bytes
    X = jnp.asarray(np.stack(X_b), jnp.bfloat16)
    counts = jnp.asarray(np.asarray(cnts, np.int32))

    score = _run_strgnn(A, X, counts, params)         # (1, 1)
    return jnp.squeeze(score)                         # scalar anomaly score


# ----------------------------------------------------------------------------
# Deterministic parameter initialization (shapes from StrGNN.__init__),
# laid out / padded for the kernels.
# ----------------------------------------------------------------------------
def init_params(key, node_feat_dim=16, hidden_dim=64, label_dim=3):
    H = hidden_dim
    F_raw = node_feat_dim + label_dim
    Fp = int(np.ceil(F_raw / 8) * 8)                  # lane-friendlier F
    Gp = int(np.ceil(H / 128) * 128)                  # gate/hidden pad width
    H2 = H // 2
    ks = jax.random.split(key, 10)

    def u(k, shape, scale):
        return np.asarray(
            jax.random.uniform(k, shape, jnp.float32, -1.0, 1.0) * scale)

    p = {"H": H, "F_raw": F_raw, "Fp": Fp, "Gp": Gp}

    # GCNConv weights stored (in, out), bf16 (f32 accumulation in-kernel);
    # bias zero-init like PyG default, kept f32.
    w1 = np.zeros((Fp, H), np.float32)
    w1[:F_raw] = u(ks[0], (F_raw, H), 1.0 / np.sqrt(F_raw))
    p["w1"] = jnp.asarray(w1, jnp.bfloat16)
    p["b1"] = jnp.zeros((1, H), jnp.float32)
    p["w2"] = jnp.asarray(u(ks[1], (H, H), 1.0 / np.sqrt(H)), jnp.bfloat16)
    p["b2"] = jnp.zeros((1, H), jnp.float32)

    # GRU: PyTorch layout (3H, H), row order [r, z, n].  Split, transpose to
    # (in, out), pad each gate block to Gp lanes (and the hidden input dim of
    # Whh to Gp rows) so the in-kernel gate slices are 128-lane aligned and
    # the padded hidden lanes stay exactly zero.
    s = 1.0 / np.sqrt(H)
    w_ih = u(ks[2], (3 * H, H), s)
    w_hh = u(ks[3], (3 * H, H), s)
    b_ih = u(ks[4], (3 * H,), s)
    b_hh = u(ks[5], (3 * H,), s)
    wih = np.zeros((H, 3 * Gp), np.float32)
    whh = np.zeros((Gp, 3 * Gp), np.float32)
    bi = np.zeros((1, 3 * Gp), np.float32)
    for g in range(3):
        wih[:, g * Gp:g * Gp + H] = w_ih[g * H:(g + 1) * H].T
        whh[:H, g * Gp:g * Gp + H] = w_hh[g * H:(g + 1) * H].T
        bi[0, g * Gp:g * Gp + H] = b_ih[g * H:(g + 1) * H]
        if g < 2:                                      # pre-sum r/z biases
            bi[0, g * Gp:g * Gp + H] += b_hh[g * H:(g + 1) * H]
    bhn = np.zeros((1, Gp), np.float32)
    bhn[0, :H] = b_hh[2 * H:]
    p["w_ih"] = jnp.asarray(wih)                       # (H, 3*Gp)
    p["w_hh"] = jnp.asarray(whh)                       # (Gp, 3*Gp)
    p["b_i"] = jnp.asarray(bi)                         # (1, 3*Gp)
    p["b_hn"] = jnp.asarray(bhn)                       # (1, Gp)

    # Classifier (Linear weights (in, out)); wc1 rows padded to Gp with zeros
    # so the GRU's Gp-wide hidden state feeds it directly.
    wc1 = np.zeros((Gp, H2), np.float32)
    wc1[:H] = u(ks[6], (H, H2), 1.0 / np.sqrt(H))
    p["wc1"] = jnp.asarray(wc1)
    p["bc1"] = jnp.asarray(u(ks[7], (1, H2), 1.0 / np.sqrt(H)))
    p["wc2"] = jnp.asarray(u(ks[8], (H2, 1), 1.0 / np.sqrt(H2)))
    p["bc2"] = jnp.asarray(u(ks[9], (1, 1), 1.0 / np.sqrt(H2)))
    return p


# ----------------------------------------------------------------------------
if __name__ == "__main__":
    key = jax.random.PRNGKey(0)
    pkey, dkey = jax.random.split(key)
    params = init_params(pkey, node_feat_dim=16, hidden_dim=64, label_dim=3)

    # Synthetic temporal graph data: T snapshots of (x, edge_index, targets).
    node_feat_dim, num_nodes, T, E = 16, 12, 4, 30
    temporal_data = []
    for _ in range(T):
        k1, k2, dkey = jax.random.split(dkey, 3)
        x = jax.random.normal(k1, (num_nodes, node_feat_dim), jnp.float32)
        edges = np.asarray(jax.random.randint(k2, (2, E), 0, num_nodes))
        target_nodes = [0, 1]
        temporal_data.append((x, edges, target_nodes))

    score = strgnn_forward(temporal_data, params, k_hop=2)
    jax.block_until_ready(score)
    print("KERNEL_OK")
</pallas_src>

<mosaic_0001>
module attributes {stable_mosaic.version = 11 : i64} {
  func.func @kernel(%arg0: i32, %arg1: memref<4xi32, #tpu.memory_space<smem>>, %arg2: memref<4x128x128xbf16, #tpu.memory_space<vmem>>, %arg3: memref<4x128x24xbf16, #tpu.memory_space<vmem>>, %arg4: memref<24x64xbf16, #tpu.memory_space<vmem>>, %arg5: memref<1x64xf32, #tpu.memory_space<vmem>>, %arg6: memref<64x64xbf16, #tpu.memory_space<vmem>>, %arg7: memref<1x64xf32, #tpu.memory_space<vmem>>, %arg8: memref<1x4x64xf32, #tpu.memory_space<vmem>>) attributes {dimension_semantics = [#tpu.dimension_semantics<parallel>], iteration_bounds = array<i64: 1>, scalar_prefetch = 1 : i64, scratch_operands = 0 : i64, tpu.core_type = #tpu.core_type<tc>, window_params = [{transform_indices = @transform_0, window_bounds = array<i64: 4, 128, 128>}, {transform_indices = @transform_1, window_bounds = array<i64: 4, 128, 24>}, {pipeline_mode = #tpu.pipeline_mode<synchronous>, transform_indices = @transform_2, window_bounds = array<i64: 24, 64>}, {pipeline_mode = #tpu.pipeline_mode<synchronous>, transform_indices = @transform_3, window_bounds = array<i64: 1, 64>}, {pipeline_mode = #tpu.pipeline_mode<synchronous>, transform_indices = @transform_4, window_bounds = array<i64: 64, 64>}, {pipeline_mode = #tpu.pipeline_mode<synchronous>, transform_indices = @transform_5, window_bounds = array<i64: 1, 64>}, {transform_indices = @transform_6, window_bounds = array<i64: 1, 4, 64>}]} {
    %c0 = arith.constant 0 : index
    %c0_0 = arith.constant 0 : index
    %0 = vector.load %arg4[%c0, %c0_0] : memref<24x64xbf16, #tpu.memory_space<vmem>>, vector<24x64xbf16>
    %c0_1 = arith.constant 0 : index
    %c0_2 = arith.constant 0 : index
    %1 = vector.load %arg5[%c0_1, %c0_2] : memref<1x64xf32, #tpu.memory_space<vmem>>, vector<1x64xf32>
    %c0_3 = arith.constant 0 : index
    %c0_4 = arith.constant 0 : index
    %2 = vector.load %arg6[%c0_3, %c0_4] : memref<64x64xbf16, #tpu.memory_space<vmem>>, vector<64x64xbf16>
    %c0_5 = arith.constant 0 : index
    %c0_6 = arith.constant 0 : index
    %3 = vector.load %arg7[%c0_5, %c0_6] : memref<1x64xf32, #tpu.memory_space<vmem>>, vector<1x64xf32>
    %4 = tpu.iota {dimensions = array<i32: 0>} : vector<128x1xi32>
    %5 = tpu.iota {dimensions = array<i32: 1>} : vector<1x128xi32>
    %c0_7 = arith.constant 0 : index
    %c0_8 = arith.constant 0 : index
    %c0_9 = arith.constant 0 : index
    %6 = vector.load %arg2[%c0_7, %c0_8, %c0_9] : memref<4x128x128xbf16, #tpu.memory_space<vmem>>, vector<1x128x128xbf16>
    %7 = vector.shape_cast %6 : vector<1x128x128xbf16> to vector<128x128xbf16>
    %c0_10 = arith.constant 0 : index
    %c0_11 = arith.constant 0 : index
    %c0_12 = arith.constant 0 : index
    %8 = vector.load %arg3[%c0_10, %c0_11, %c0_12] : memref<4x128x24xbf16, #tpu.memory_space<vmem>>, vector<1x128x24xbf16>
    %9 = vector.shape_cast %8 : vector<1x128x24xbf16> to vector<128x24xbf16>
    %cst = arith.constant dense<0.000000e+00> : vector<128x64xf32>
    %10 = tpu.matmul %9, %0, %cst {dimension_numbers = #tpu.dot_dimension_numbers<[1], [0], [0], [1], [0, 0, 1, 1], [], []>} : vector<128x24xbf16>, vector<24x64xbf16>, vector<128x64xf32> -> vector<128x64xf32>
    %11 = arith.truncf %10 : vector<128x64xf32> to vector<128x64xbf16>
    %cst_13 = arith.constant dense<0.000000e+00> : vector<128x64xf32>
    %12 = tpu.matmul %7, %11, %cst_13 {dimension_numbers = #tpu.dot_dimension_numbers<[1], [0], [0], [1], [0, 0, 1, 1], [], []>} : vector<128x128xbf16>, vector<128x64xbf16>, vector<128x64xf32> -> vector<128x64xf32>
    %13 = vector.broadcast %1 : vector<1x64xf32> to vector<128x64xf32>
    %14 = arith.addf %12, %13 : vector<128x64xf32>
    %cst_14 = arith.constant 0.000000e+00 : f32
    %15 = vector.broadcast %cst_14 : f32 to vector<128x64xf32>
    %16 = arith.maximumf %14, %15 : vector<128x64xf32>
    %17 = arith.truncf %16 : vector<128x64xf32> to vector<128x64xbf16>
    %cst_15 = arith.constant dense<0.000000e+00> : vector<128x64xf32>
    %18 = tpu.matmul %17, %2, %cst_15 {dimension_numbers = #tpu.dot_dimension_numbers<[1], [0], [0], [1], [0, 0, 1, 1], [], []>} : vector<128x64xbf16>, vector<64x64xbf16>, vector<128x64xf32> -> vector<128x64xf32>
    %19 = arith.truncf %18 : vector<128x64xf32> to vector<128x64xbf16>
    %cst_16 = arith.constant dense<0.000000e+00> : vector<128x64xf32>
    %20 = tpu.matmul %7, %19, %cst_16 {dimension_numbers = #tpu.dot_dimension_numbers<[1], [0], [0], [1], [0, 0, 1, 1], [], []>} : vector<128x128xbf16>, vector<128x64xbf16>, vector<128x64xf32> -> vector<128x64xf32>
    %21 = vector.broadcast %3 : vector<1x64xf32> to vector<128x64xf32>
    %22 = arith.addf %20, %21 : vector<128x64xf32>
    %cst_17 = arith.constant 0.000000e+00 : f32
    %23 = vector.broadcast %cst_17 : f32 to vector<128x64xf32>
    %24 = arith.maximumf %22, %23 : vector<128x64xf32>
    %c4_i32 = arith.constant 4 : i32
    %25 = arith.muli %arg0, %c4_i32 : i32
    %c0_i32 = arith.constant 0 : i32
    %26 = arith.addi %25, %c0_i32 : i32
    %27 = arith.index_cast %26 : i32 to index
    %28 = memref.load %arg1[%27] : memref<4xi32, #tpu.memory_space<smem>>
    %29 = vector.extract_strided_slice %24 {offsets = [0, 63], sizes = [128, 1], strides = [1, 1]} : vector<128x64xf32> to vector<128x1xf32>
    %30 = vector.broadcast %28 : i32 to vector<128x1xi32>
    %31 = arith.cmpi slt, %4, %30 : vector<128x1xi32>
    %cst_18 = arith.constant -1.000000e+30 : f32
    %32 = vector.broadcast %cst_18 : f32 to vector<128x1xf32>
    %33 = arith.select %31, %29, %32 : vector<128x1xi1>, vector<128x1xf32>
    %cst_19 = arith.constant dense<0xFF800000> : vector<1xf32>
    %34 = vector.multi_reduction <maximumf>, %33, %cst_19 [0] : vector<128x1xf32> to vector<1xf32>
    %35 = vector.shape_cast %34 : vector<1xf32> to vector<1x1xf32>
    %36 = vector.broadcast %35 : vector<1x1xf32> to vector<128x1xf32>
    %37 = arith.cmpf oge, %33, %36 : vector<128x1xf32>
    %c128_i32 = arith.constant 128 : i32
    %38 = vector.broadcast %c128_i32 : i32 to vector<128x1xi32>
    %39 = arith.select %37, %4, %38 : vector<128x1xi1>, vector<128x1xi32>
    %cst_20 = arith.constant dense<2147483647> : vector<1xi32>
    %40 = vector.multi_reduction <minsi>, %39, %cst_20 [0] : vector<128x1xi32> to vector<1xi32>
    %41 = vector.shape_cast %40 : vector<1xi32> to vector<1x1xi32>
    %42 = vector.broadcast %41 : vector<1x1xi32> to vector<1x128xi32>
    %43 = arith.cmpi eq, %5, %42 : vector<1x128xi32>
    %44 = arith.extui %43 : vector<1x128xi1> to vector<1x128xi32>
    %45 = arith.sitofp %44 : vector<1x128xi32> to vector<1x128xf32>
    %cst_21 = arith.constant dense<0.000000e+00> : vector<1x64xf32>
    %46 = tpu.matmul %45, %24, %cst_21 {dimension_numbers = #tpu.dot_dimension_numbers<[1], [0], [0], [1], [0, 0, 1, 1], [], []>} : vector<1x128xf32>, vector<128x64xf32>, vector<1x64xf32> -> vector<1x64xf32>
    %c0_22 = arith.constant 0 : index
    %c0_23 = arith.constant 0 : index
    %c0_24 = arith.constant 0 : index
    %47 = vector.load %arg8[%c0_22, %c0_23, %c0_24] : memref<1x4x64xf32, #tpu.memory_space<vmem>>, vector<1x1x64xf32>
    %48 = vector.shape_cast %47 : vector<1x1x64xf32> to vector<1x64xf32>
    %49 = vector.shape_cast %46 : vector<1x64xf32> to vector<1x1x64xf32>
    tpu.vector_store %arg8[%c0_22, %c0_23, %c0_24], %49 {strides = array<i32>} : memref<1x4x64xf32, #tpu.memory_space<vmem>>, vector<1x1x64xf32>,
    %c1 = arith.constant 1 : index
    %c0_25 = arith.constant 0 : index
    %c0_26 = arith.constant 0 : index
    %50 = vector.load %arg2[%c1, %c0_25, %c0_26] : memref<4x128x128xbf16, #tpu.memory_space<vmem>>, vector<1x128x128xbf16>
    %51 = vector.shape_cast %50 : vector<1x128x128xbf16> to vector<128x128xbf16>
    %c1_27 = arith.constant 1 : index
    %c0_28 = arith.constant 0 : index
    %c0_29 = arith.constant 0 : index
    %52 = vector.load %arg3[%c1_27, %c0_28, %c0_29] : memref<4x128x24xbf16, #tpu.memory_space<vmem>>, vector<1x128x24xbf16>
    %53 = vector.shape_cast %52 : vector<1x128x24xbf16> to vector<128x24xbf16>
    %cst_30 = arith.constant dense<0.000000e+00> : vector<128x64xf32>
    %54 = tpu.matmul %53, %0, %cst_30 {dimension_numbers = #tpu.dot_dimension_numbers<[1], [0], [0], [1], [0, 0, 1, 1], [], []>} : vector<128x24xbf16>, vector<24x64xbf16>, vector<128x64xf32> -> vector<128x64xf32>
    %55 = arith.truncf %54 : vector<128x64xf32> to vector<128x64xbf16>
    %cst_31 = arith.constant dense<0.000000e+00> : vector<128x64xf32>
    %56 = tpu.matmul %51, %55, %cst_31 {dimension_numbers = #tpu.dot_dimension_numbers<[1], [0], [0], [1], [0, 0, 1, 1], [], []>} : vector<128x128xbf16>, vector<128x64xbf16>, vector<128x64xf32> -> vector<128x64xf32>
    %57 = vector.broadcast %1 : vector<1x64xf32> to vector<128x64xf32>
    %58 = arith.addf %56, %57 : vector<128x64xf32>
    %cst_32 = arith.constant 0.000000e+00 : f32
    %59 = vector.broadcast %cst_32 : f32 to vector<128x64xf32>
    %60 = arith.maximumf %58, %59 : vector<128x64xf32>
    %61 = arith.truncf %60 : vector<128x64xf32> to vector<128x64xbf16>
    %cst_33 = arith.constant dense<0.000000e+00> : vector<128x64xf32>
    %62 = tpu.matmul %61, %2, %cst_33 {dimension_numbers = #tpu.dot_dimension_numbers<[1], [0], [0], [1], [0, 0, 1, 1], [], []>} : vector<128x64xbf16>, vector<64x64xbf16>, vector<128x64xf32> -> vector<128x64xf32>
    %63 = arith.truncf %62 : vector<128x64xf32> to vector<128x64xbf16>
    %cst_34 = arith.constant dense<0.000000e+00> : vector<128x64xf32>
    %64 = tpu.matmul %51, %63, %cst_34 {dimension_numbers = #tpu.dot_dimension_numbers<[1], [0], [0], [1], [0, 0, 1, 1], [], []>} : vector<128x128xbf16>, vector<128x64xbf16>, vector<128x64xf32> -> vector<128x64xf32>
    %65 = vector.broadcast %3 : vector<1x64xf32> to vector<128x64xf32>
    %66 = arith.addf %64, %65 : vector<128x64xf32>
    %cst_35 = arith.constant 0.000000e+00 : f32
    %67 = vector.broadcast %cst_35 : f32 to vector<128x64xf32>
    %68 = arith.maximumf %66, %67 : vector<128x64xf32>
    %c4_i32_36 = arith.constant 4 : i32
    %69 = arith.muli %arg0, %c4_i32_36 : i32
    %c1_i32 = arith.constant 1 : i32
    %70 = arith.addi %69, %c1_i32 : i32
    %71 = arith.index_cast %70 : i32 to index
    %72 = memref.load %arg1[%71] : memref<4xi32, #tpu.memory_space<smem>>
    %73 = vector.extract_strided_slice %68 {offsets = [0, 63], sizes = [128, 1], strides = [1, 1]} : vector<128x64xf32> to vector<128x1xf32>
    %74 = vector.broadcast %72 : i32 to vector<128x1xi32>
    %75 = arith.cmpi slt, %4, %74 : vector<128x1xi32>
    %cst_37 = arith.constant -1.000000e+30 : f32
    %76 = vector.broadcast %cst_37 : f32 to vector<128x1xf32>
    %77 = arith.select %75, %73, %76 : vector<128x1xi1>, vector<128x1xf32>
    %cst_38 = arith.constant dense<0xFF800000> : vector<1xf32>
    %78 = vector.multi_reduction <maximumf>, %77, %cst_38 [0] : vector<128x1xf32> to vector<1xf32>
    %79 = vector.shape_cast %78 : vector<1xf32> to vector<1x1xf32>
    %80 = vector.broadcast %79 : vector<1x1xf32> to vector<128x1xf32>
    %81 = arith.cmpf oge, %77, %80 : vector<128x1xf32>
    %c128_i32_39 = arith.constant 128 : i32
    %82 = vector.broadcast %c128_i32_39 : i32 to vector<128x1xi32>
    %83 = arith.select %81, %4, %82 : vector<128x1xi1>, vector<128x1xi32>
    %cst_40 = arith.constant dense<2147483647> : vector<1xi32>
    %84 = vector.multi_reduction <minsi>, %83, %cst_40 [0] : vector<128x1xi32> to vector<1xi32>
    %85 = vector.shape_cast %84 : vector<1xi32> to vector<1x1xi32>
    %86 = vector.broadcast %85 : vector<1x1xi32> to vector<1x128xi32>
    %87 = arith.cmpi eq, %5, %86 : vector<1x128xi32>
    %88 = arith.extui %87 : vector<1x128xi1> to vector<1x128xi32>
    %89 = arith.sitofp %88 : vector<1x128xi32> to vector<1x128xf32>
    %cst_41 = arith.constant dense<0.000000e+00> : vector<1x64xf32>
    %90 = tpu.matmul %89, %68, %cst_41 {dimension_numbers = #tpu.dot_dimension_numbers<[1], [0], [0], [1], [0, 0, 1, 1], [], []>} : vector<1x128xf32>, vector<128x64xf32>, vector<1x64xf32> -> vector<1x64xf32>
    %c0_42 = arith.constant 0 : index
    %c1_43 = arith.constant 1 : index
    %c0_44 = arith.constant 0 : index
    %91 = vector.load %arg8[%c0_42, %c1_43, %c0_44] : memref<1x4x64xf32, #tpu.memory_space<vmem>>, vector<1x1x64xf32>
    %92 = vector.shape_cast %91 : vector<1x1x64xf32> to vector<1x64xf32>
    %93 = vector.shape_cast %90 : vector<1x64xf32> to vector<1x1x64xf32>
    tpu.vector_store %arg8[%c0_42, %c1_43, %c0_44], %93 {strides = array<i32>} : memref<1x4x64xf32, #tpu.memory_space<vmem>>, vector<1x1x64xf32>,
    %c2 = arith.constant 2 : index
    %c0_45 = arith.constant 0 : index
    %c0_46 = arith.constant 0 : index
    %94 = vector.load %arg2[%c2, %c0_45, %c0_46] : memref<4x128x128xbf16, #tpu.memory_space<vmem>>, vector<1x128x128xbf16>
    %95 = vector.shape_cast %94 : vector<1x128x128xbf16> to vector<128x128xbf16>
    %c2_47 = arith.constant 2 : index
    %c0_48 = arith.constant 0 : index
    %c0_49 = arith.constant 0 : index
    %96 = vector.load %arg3[%c2_47, %c0_48, %c0_49] : memref<4x128x24xbf16, #tpu.memory_space<vmem>>, vector<1x128x24xbf16>
    %97 = vector.shape_cast %96 : vector<1x128x24xbf16> to vector<128x24xbf16>
    %cst_50 = arith.constant dense<0.000000e+00> : vector<128x64xf32>
    %98 = tpu.matmul %97, %0, %cst_50 {dimension_numbers = #tpu.dot_dimension_numbers<[1], [0], [0], [1], [0, 0, 1, 1], [], []>} : vector<128x24xbf16>, vector<24x64xbf16>, vector<128x64xf32> -> vector<128x64xf32>
    %99 = arith.truncf %98 : vector<128x64xf32> to vector<128x64xbf16>
    %cst_51 = arith.constant dense<0.000000e+00> : vector<128x64xf32>
    %100 = tpu.matmul %95, %99, %cst_51 {dimension_numbers = #tpu.dot_dimension_numbers<[1], [0], [0], [1], [0, 0, 1, 1], [], []>} : vector<128x128xbf16>, vector<128x64xbf16>, vector<128x64xf32> -> vector<128x64xf32>
    %101 = vector.broadcast %1 : vector<1x64xf32> to vector<128x64xf32>
    %102 = arith.addf %100, %101 : vector<128x64xf32>
    %cst_52 = arith.constant 0.000000e+00 : f32
    %103 = vector.broadcast %cst_52 : f32 to vector<128x64xf32>
    %104 = arith.maximumf %102, %103 : vector<128x64xf32>
    %105 = arith.truncf %104 : vector<128x64xf32> to vector<128x64xbf16>
    %cst_53 = arith.constant dense<0.000000e+00> : vector<128x64xf32>
    %106 = tpu.matmul %105, %2, %cst_53 {dimension_numbers = #tpu.dot_dimension_numbers<[1], [0], [0], [1], [0, 0, 1, 1], [], []>} : vector<128x64xbf16>, vector<64x64xbf16>, vector<128x64xf32> -> vector<128x64xf32>
    %107 = arith.truncf %106 : vector<128x64xf32> to vector<128x64xbf16>
    %cst_54 = arith.constant dense<0.000000e+00> : vector<128x64xf32>
    %108 = tpu.matmul %95, %107, %cst_54 {dimension_numbers = #tpu.dot_dimension_numbers<[1], [0], [0], [1], [0, 0, 1, 1], [], []>} : vector<128x128xbf16>, vector<128x64xbf16>, vector<128x64xf32> -> vector<128x64xf32>
    %109 = vector.broadcast %3 : vector<1x64xf32> to vector<128x64xf32>
    %110 = arith.addf %108, %109 : vector<128x64xf32>
    %cst_55 = arith.constant 0.000000e+00 : f32
    %111 = vector.broadcast %cst_55 : f32 to vector<128x64xf32>
    %112 = arith.maximumf %110, %111 : vector<128x64xf32>
    %c4_i32_56 = arith.constant 4 : i32
    %113 = arith.muli %arg0, %c4_i32_56 : i32
    %c2_i32 = arith.constant 2 : i32
    %114 = arith.addi %113, %c2_i32 : i32
    %115 = arith.index_cast %114 : i32 to index
    %116 = memref.load %arg1[%115] : memref<4xi32, #tpu.memory_space<smem>>
    %117 = vector.extract_strided_slice %112 {offsets = [0, 63], sizes = [128, 1], strides = [1, 1]} : vector<128x64xf32> to vector<128x1xf32>
    %118 = vector.broadcast %116 : i32 to vector<128x1xi32>
    %119 = arith.cmpi slt, %4, %118 : vector<128x1xi32>
    %cst_57 = arith.constant -1.000000e+30 : f32
    %120 = vector.broadcast %cst_57 : f32 to vector<128x1xf32>
    %121 = arith.select %119, %117, %120 : vector<128x1xi1>, vector<128x1xf32>
    %cst_58 = arith.constant dense<0xFF800000> : vector<1xf32>
    %122 = vector.multi_reduction <maximumf>, %121, %cst_58 [0] : vector<128x1xf32> to vector<1xf32>
    %123 = vector.shape_cast %122 : vector<1xf32> to vector<1x1xf32>
    %124 = vector.broadcast %123 : vector<1x1xf32> to vector<128x1xf32>
    %125 = arith.cmpf oge, %121, %124 : vector<128x1xf32>
    %c128_i32_59 = arith.constant 128 : i32
    %126 = vector.broadcast %c128_i32_59 : i32 to vector<128x1xi32>
    %127 = arith.select %125, %4, %126 : vector<128x1xi1>, vector<128x1xi32>
    %cst_60 = arith.constant dense<2147483647> : vector<1xi32>
    %128 = vector.multi_reduction <minsi>, %127, %cst_60 [0] : vector<128x1xi32> to vector<1xi32>
    %129 = vector.shape_cast %128 : vector<1xi32> to vector<1x1xi32>
    %130 = vector.broadcast %129 : vector<1x1xi32> to vector<1x128xi32>
    %131 = arith.cmpi eq, %5, %130 : vector<1x128xi32>
    %132 = arith.extui %131 : vector<1x128xi1> to vector<1x128xi32>
    %133 = arith.sitofp %132 : vector<1x128xi32> to vector<1x128xf32>
    %cst_61 = arith.constant dense<0.000000e+00> : vector<1x64xf32>
    %134 = tpu.matmul %133, %112, %cst_61 {dimension_numbers = #tpu.dot_dimension_numbers<[1], [0], [0], [1], [0, 0, 1, 1], [], []>} : vector<1x128xf32>, vector<128x64xf32>, vector<1x64xf32> -> vector<1x64xf32>
    %c0_62 = arith.constant 0 : index
    %c2_63 = arith.constant 2 : index
    %c0_64 = arith.constant 0 : index
    %135 = vector.load %arg8[%c0_62, %c2_63, %c0_64] : memref<1x4x64xf32, #tpu.memory_space<vmem>>, vector<1x1x64xf32>
    %136 = vector.shape_cast %135 : vector<1x1x64xf32> to vector<1x64xf32>
    %137 = vector.shape_cast %134 : vector<1x64xf32> to vector<1x1x64xf32>
    tpu.vector_store %arg8[%c0_62, %c2_63, %c0_64], %137 {strides = array<i32>} : memref<1x4x64xf32, #tpu.memory_space<vmem>>, vector<1x1x64xf32>,
    %c3 = arith.constant 3 : index
    %c0_65 = arith.constant 0 : index
    %c0_66 = arith.constant 0 : index
    %138 = vector.load %arg2[%c3, %c0_65, %c0_66] : memref<4x128x128xbf16, #tpu.memory_space<vmem>>, vector<1x128x128xbf16>
    %139 = vector.shape_cast %138 : vector<1x128x128xbf16> to vector<128x128xbf16>
    %c3_67 = arith.constant 3 : index
    %c0_68 = arith.constant 0 : index
    %c0_69 = arith.constant 0 : index
    %140 = vector.load %arg3[%c3_67, %c0_68, %c0_69] : memref<4x128x24xbf16, #tpu.memory_space<vmem>>, vector<1x128x24xbf16>
    %141 = vector.shape_cast %140 : vector<1x128x24xbf16> to vector<128x24xbf16>
    %cst_70 = arith.constant dense<0.000000e+00> : vector<128x64xf32>
    %142 = tpu.matmul %141, %0, %cst_70 {dimension_numbers = #tpu.dot_dimension_numbers<[1], [0], [0], [1], [0, 0, 1, 1], [], []>} : vector<128x24xbf16>, vector<24x64xbf16>, vector<128x64xf32> -> vector<128x64xf32>
    %143 = arith.truncf %142 : vector<128x64xf32> to vector<128x64xbf16>
    %cst_71 = arith.constant dense<0.000000e+00> : vector<128x64xf32>
    %144 = tpu.matmul %139, %143, %cst_71 {dimension_numbers = #tpu.dot_dimension_numbers<[1], [0], [0], [1], [0, 0, 1, 1], [], []>} : vector<128x128xbf16>, vector<128x64xbf16>, vector<128x64xf32> -> vector<128x64xf32>
    %145 = vector.broadcast %1 : vector<1x64xf32> to vector<128x64xf32>
    %146 = arith.addf %144, %145 : vector<128x64xf32>
    %cst_72 = arith.constant 0.000000e+00 : f32
    %147 = vector.broadcast %cst_72 : f32 to vector<128x64xf32>
    %148 = arith.maximumf %146, %147 : vector<128x64xf32>
    %149 = arith.truncf %148 : vector<128x64xf32> to vector<128x64xbf16>
    %cst_73 = arith.constant dense<0.000000e+00> : vector<128x64xf32>
    %150 = tpu.matmul %149, %2, %cst_73 {dimension_numbers = #tpu.dot_dimension_numbers<[1], [0], [0], [1], [0, 0, 1, 1], [], []>} : vector<128x64xbf16>, vector<64x64xbf16>, vector<128x64xf32> -> vector<128x64xf32>
    %151 = arith.truncf %150 : vector<128x64xf32> to vector<128x64xbf16>
    %cst_74 = arith.constant dense<0.000000e+00> : vector<128x64xf32>
    %152 = tpu.matmul %139, %151, %cst_74 {dimension_numbers = #tpu.dot_dimension_numbers<[1], [0], [0], [1], [0, 0, 1, 1], [], []>} : vector<128x128xbf16>, vector<128x64xbf16>, vector<128x64xf32> -> vector<128x64xf32>
    %153 = vector.broadcast %3 : vector<1x64xf32> to vector<128x64xf32>
    %154 = arith.addf %152, %153 : vector<128x64xf32>
    %cst_75 = arith.constant 0.000000e+00 : f32
    %155 = vector.broadcast %cst_75 : f32 to vector<128x64xf32>
    %156 = arith.maximumf %154, %155 : vector<128x64xf32>
    %c4_i32_76 = arith.constant 4 : i32
    %157 = arith.muli %arg0, %c4_i32_76 : i32
    %c3_i32 = arith.constant 3 : i32
    %158 = arith.addi %157, %c3_i32 : i32
    %159 = arith.index_cast %158 : i32 to index
    %160 = memref.load %arg1[%159] : memref<4xi32, #tpu.memory_space<smem>>
    %161 = vector.extract_strided_slice %156 {offsets = [0, 63], sizes = [128, 1], strides = [1, 1]} : vector<128x64xf32> to vector<128x1xf32>
    %162 = vector.broadcast %160 : i32 to vector<128x1xi32>
    %163 = arith.cmpi slt, %4, %162 : vector<128x1xi32>
    %cst_77 = arith.constant -1.000000e+30 : f32
    %164 = vector.broadcast %cst_77 : f32 to vector<128x1xf32>
    %165 = arith.select %163, %161, %164 : vector<128x1xi1>, vector<128x1xf32>
    %cst_78 = arith.constant dense<0xFF800000> : vector<1xf32>
    %166 = vector.multi_reduction <maximumf>, %165, %cst_78 [0] : vector<128x1xf32> to vector<1xf32>
    %167 = vector.shape_cast %166 : vector<1xf32> to vector<1x1xf32>
    %168 = vector.broadcast %167 : vector<1x1xf32> to vector<128x1xf32>
    %169 = arith.cmpf oge, %165, %168 : vector<128x1xf32>
    %c128_i32_79 = arith.constant 128 : i32
    %170 = vector.broadcast %c128_i32_79 : i32 to vector<128x1xi32>
    %171 = arith.select %169, %4, %170 : vector<128x1xi1>, vector<128x1xi32>
    %cst_80 = arith.constant dense<2147483647> : vector<1xi32>
    %172 = vector.multi_reduction <minsi>, %171, %cst_80 [0] : vector<128x1xi32> to vector<1xi32>
    %173 = vector.shape_cast %172 : vector<1xi32> to vector<1x1xi32>
    %174 = vector.broadcast %173 : vector<1x1xi32> to vector<1x128xi32>
    %175 = arith.cmpi eq, %5, %174 : vector<1x128xi32>
    %176 = arith.extui %175 : vector<1x128xi1> to vector<1x128xi32>
    %177 = arith.sitofp %176 : vector<1x128xi32> to vector<1x128xf32>
    %cst_81 = arith.constant dense<0.000000e+00> : vector<1x64xf32>
    %178 = tpu.matmul %177, %156, %cst_81 {dimension_numbers = #tpu.dot_dimension_numbers<[1], [0], [0], [1], [0, 0, 1, 1], [], []>} : vector<1x128xf32>, vector<128x64xf32>, vector<1x64xf32> -> vector<1x64xf32>
    %c0_82 = arith.constant 0 : index
    %c3_83 = arith.constant 3 : index
    %c0_84 = arith.constant 0 : index
    %179 = vector.load %arg8[%c0_82, %c3_83, %c0_84] : memref<1x4x64xf32, #tpu.memory_space<vmem>>, vector<1x1x64xf32>
    %180 = vector.shape_cast %179 : vector<1x1x64xf32> to vector<1x64xf32>
    %181 = vector.shape_cast %178 : vector<1x64xf32> to vector<1x1x64xf32>
    tpu.vector_store %arg8[%c0_82, %c3_83, %c0_84], %181 {strides = array<i32>} : memref<1x4x64xf32, #tpu.memory_space<vmem>>, vector<1x1x64xf32>,
    return
  }
  func.func @transform_0(%arg0: i32, %arg1: memref<4xi32, #tpu.memory_space<smem>>) -> (i32, i32, i32) {
    %c0_i32 = arith.constant 0 : i32
    %c0_i32_0 = arith.constant 0 : i32
    %c0_i32_1 = arith.constant 0 : i32
    return %arg0, %c0_i32, %c0_i32_0 : i32, i32, i32
  }
  func.func @transform_1(%arg0: i32, %arg1: memref<4xi32, #tpu.memory_space<smem>>) -> (i32, i32, i32) {
    %c0_i32 = arith.constant 0 : i32
    %c0_i32_0 = arith.constant 0 : i32
    %c0_i32_1 = arith.constant 0 : i32
    return %arg0, %c0_i32, %c0_i32_0 : i32, i32, i32
  }
  func.func @transform_2(%arg0: i32, %arg1: memref<4xi32, #tpu.memory_space<smem>>) -> (i32, i32) {
    %c0_i32 = arith.constant 0 : i32
    %c0_i32_0 = arith.constant 0 : i32
    %c0_i32_1 = arith.constant 0 : i32
    return %c0_i32, %c0_i32_0 : i32, i32
  }
  func.func @transform_3(%arg0: i32, %arg1: memref<4xi32, #tpu.memory_space<smem>>) -> (i32, i32) {
    %c0_i32 = arith.constant 0 : i32
    %c0_i32_0 = arith.constant 0 : i32
    %c0_i32_1 = arith.constant 0 : i32
    return %c0_i32, %c0_i32_0 : i32, i32
  }
  func.func @transform_4(%arg0: i32, %arg1: memref<4xi32, #tpu.memory_space<smem>>) -> (i32, i32) {
    %c0_i32 = arith.constant 0 : i32
    %c0_i32_0 = arith.constant 0 : i32
    %c0_i32_1 = arith.constant 0 : i32
    return %c0_i32, %c0_i32_0 : i32, i32
  }
  func.func @transform_5(%arg0: i32, %arg1: memref<4xi32, #tpu.memory_space<smem>>) -> (i32, i32) {
    %c0_i32 = arith.constant 0 : i32
    %c0_i32_0 = arith.constant 0 : i32
    %c0_i32_1 = arith.constant 0 : i32
    return %c0_i32, %c0_i32_0 : i32, i32
  }
  func.func @transform_6(%arg0: i32, %arg1: memref<4xi32, #tpu.memory_space<smem>>) -> (i32, i32, i32) {
    %c0_i32 = arith.constant 0 : i32
    %c0_i32_0 = arith.constant 0 : i32
    %c0_i32_1 = arith.constant 0 : i32
    return %arg0, %c0_i32, %c0_i32_0 : i32, i32, i32
  }
}

</mosaic_0001>

<llo_original>
// kernel: tpu_custom_call.1
$region0: #{tpu_custom_call.1}
  #allocation0 [shape = 'u32[]', space=smem, size = 0x4, offset = 0x4, fixed_abs, tag = 'smem constant byte address 0x4 - core index']
  #allocation1 [shape = 'u32[144,128]{1,0:T(1,128)}', space=vmem, size = 0x12000, scoped, tag = 'internal scratch']
  #allocation2 [shape = 's32[1]{0}', space=sflag, size = 0x4, scoped, tag = 'scoped memory for tpu_custom_call.1']
  #allocation3 [shape = 'u8[512]{0}', space=smem, size = 0x200, scoped, tag = 'prefetched SMEM operand 0']
  %s0 = inlined_call_operand.vmem [shape: s32[4], index: 0, kind: input, shape index: {}]
  %s1 = inlined_call_operand.vmem [shape: bf16[4,128,128], index: 1, kind: input, shape index: {}]
  %s2 = inlined_call_operand.vmem [shape: bf16[4,128,24], index: 2, kind: input, shape index: {}]
  %s3 = inlined_call_operand.vmem [shape: bf16[24,64], index: 3, kind: input, shape index: {}]
  %s4 = inlined_call_operand.vmem [shape: f32[1,64], index: 4, kind: input, shape index: {}]
  %s5 = inlined_call_operand.vmem [shape: bf16[64,64], index: 5, kind: input, shape index: {}]
  %s6 = inlined_call_operand.vmem [shape: f32[1,64], index: 6, kind: input, shape index: {}]
  %s7 = inlined_call_operand.hbm [shape: f32[1,4,64], index: 7, kind: output, shape index: {}]
  %s8 = sld [smem:[#allocation0]]
  $region34: #{tpu_custom_call.1} parent=0
    _
  %s10 = ssub.s32 1, %s8
  %s11 = scalar_select 0, %s10, %s8
  %s12 = sshll.u32 %s0, 4
  %s13 = int_to_ptr.vmem [resolvable:$true] %s12
  %15 = dma.vmem_to_smem %s13, 16, [#allocation3], [#allocation2]
  %16 = dma.done [#allocation2], 16
  %17 = sfence
  $region1: #{tpu_custom_call.1} parent=0
    #allocation4 [shape = 'u8[2048]{0}', space=vmem, size = 0x800, scoped, tag = 'output window, operand 0, single buffered']
    #allocation5 [shape = 's32[1]{0}', space=sflag, size = 0x4, scoped, tag = 'scoped memory for tpu_custom_call.1']
    %18 = vsyncpa [#allocation5], 0
    // Predicated region
    $region2: #{tpu_custom_call.1} parent=1 // pred_check
      _
    $region3: #{tpu_custom_call.1} parent=1 // pred_check_branch
      %20 = sbr.rel (0) target = $region5
    $region4: #{tpu_custom_call.1} parent=1 // pred_region
      _
    $region5: #{tpu_custom_call.1} parent=1 // pred_fallthru
      _
    // Predicated region
    $region6: #{tpu_custom_call.1} parent=1 // pred_check
      _
    $region7: #{tpu_custom_call.1} parent=1 // pred_check_branch
      %22 = sbr.rel (0) target = $region9
    $region8: #{tpu_custom_call.1} parent=1 // pred_region
      _
    $region9: #{tpu_custom_call.1} parent=1 // pred_fallthru
      _
    // Predicated region
    $region10: #{tpu_custom_call.1} parent=1 // pred_check
      _
    $region11: #{tpu_custom_call.1} parent=1 // pred_check_branch
      %24 = sbr.rel (0) target = $region13
    $region12: #{tpu_custom_call.1} parent=1 // pred_region
      _
    $region13: #{tpu_custom_call.1} parent=1 // pred_fallthru
      _
    // Predicated region
    $region14: #{tpu_custom_call.1} parent=1 // pred_check
      _
    $region15: #{tpu_custom_call.1} parent=1 // pred_check_branch
      %26 = sbr.rel (0) target = $region17
    $region16: #{tpu_custom_call.1} parent=1 // pred_region
      _
    $region17: #{tpu_custom_call.1} parent=1 // pred_fallthru
      _
    // Predicated region
    $region18: #{tpu_custom_call.1} parent=1 // pred_check
      _
    $region19: #{tpu_custom_call.1} parent=1 // pred_check_branch
      %28 = sbr.rel (0) target = $region21
    $region20: #{tpu_custom_call.1} parent=1 // pred_region
      _
    $region21: #{tpu_custom_call.1} parent=1 // pred_fallthru
      _
    // Predicated region
    $region22: #{tpu_custom_call.1} parent=1 // pred_check
      _
    $region23: #{tpu_custom_call.1} parent=1 // pred_check_branch
      %30 = sbr.rel (0) target = $region25
    $region24: #{tpu_custom_call.1} parent=1 // pred_region
      _
    $region25: #{tpu_custom_call.1} parent=1 // pred_fallthru
      _
    %v32 = vld [vmem:[%s3] sm:$0xf]
    %v33 = vld [vmem:[%s3 + $0x4] sm:$0xf]
    %v34 = vld [vmem:[%s3 + $0x8] sm:$0xf]
    %v35 = vld [vmem:[%s4] sm:$0x1]
    %v36 = vld [vmem:[%s5] sm:$0xf]
    %v37 = vld [vmem:[%s5 + $0x4] sm:$0xf]
    %v38 = vld [vmem:[%s5 + $0x8] sm:$0xf]
    %v39 = vld [vmem:[%s5 + $0xc] sm:$0xf]
    %v40 = vld [vmem:[%s5 + $0x10] sm:$0xf]
    %v41 = vld [vmem:[%s5 + $0x14] sm:$0xf]
    %v42 = vld [vmem:[%s5 + $0x18] sm:$0xf]
    %v43 = vld [vmem:[%s5 + $0x1c] sm:$0xf]
    %v44 = vld [vmem:[%s6] sm:$0x1]
    %v45 = vlaneseq
    %v46 = vshrl.u32 %v45, 7
    %v47 = vadd.s32 %v46, 8
    %v48 = vadd.s32 %v46, 16
    %v49 = vadd.s32 %v46, 24
    %v50 = vadd.s32 %v46, 32
    %v51 = vadd.s32 %v46, 40
    %v52 = vadd.s32 %v46, 48
    %v53 = vadd.s32 %v46, 56
    %v54 = vadd.s32 %v46, 64
    %v55 = vadd.s32 %v46, 72
    %v56 = vadd.s32 %v46, 80
    %v57 = vadd.s32 %v46, 88
    %v58 = vadd.s32 %v46, 96
    %v59 = vadd.s32 %v46, 104
    %v60 = vadd.s32 %v46, 112
    %v61 = vadd.s32 %v46, 120
    %v62 = vlaneseq
    %v63 = vand.u32 %v62, 127
    %v64 = vld [vmem:[%s1] sm:$0xf]
    %v65 = vld [vmem:[%s1 + $0x4] sm:$0xf]
    %v66 = vld [vmem:[%s1 + $0x8] sm:$0xf]
    %v67 = vld [vmem:[%s1 + $0xc] sm:$0xf]
    %v68 = vld [vmem:[%s1 + $0x10] sm:$0xf]
    %v69 = vld [vmem:[%s1 + $0x14] sm:$0xf]
    %v70 = vld [vmem:[%s1 + $0x18] sm:$0xf]
    %v71 = vld [vmem:[%s1 + $0x1c] sm:$0xf]
    %v72 = vld [vmem:[%s1 + $0x20] sm:$0xf]
    %v73 = vld [vmem:[%s1 + $0x24] sm:$0xf]
    %v74 = vld [vmem:[%s1 + $0x28] sm:$0xf]
    %v75 = vld [vmem:[%s1 + $0x2c] sm:$0xf]
    %v76 = vld [vmem:[%s1 + $0x30] sm:$0xf]
    %v77 = vld [vmem:[%s1 + $0x34] sm:$0xf]
    %v78 = vld [vmem:[%s1 + $0x38] sm:$0xf]
    %v79 = vld [vmem:[%s1 + $0x3c] sm:$0xf]
    %v80 = vld [vmem:[%s2] sm:$0xf]
    %v81 = vld [vmem:[%s2 + $0x4] sm:$0xf]
    %v82 = vld [vmem:[%s2 + $0x8] sm:$0xf]
    %v83 = vld [vmem:[%s2 + $0xc] sm:$0xf]
    %v84 = vld [vmem:[%s2 + $0x10] sm:$0xf]
    %v85 = vld [vmem:[%s2 + $0x14] sm:$0xf]
    %v86 = vld [vmem:[%s2 + $0x18] sm:$0xf]
    %v87 = vld [vmem:[%s2 + $0x1c] sm:$0xf]
    %v88 = vld [vmem:[%s2 + $0x20] sm:$0xf]
    %v89 = vld [vmem:[%s2 + $0x24] sm:$0xf]
    %v90 = vld [vmem:[%s2 + $0x28] sm:$0xf]
    %v91 = vld [vmem:[%s2 + $0x2c] sm:$0xf]
    %v92 = vld [vmem:[%s2 + $0x30] sm:$0xf]
    %v93 = vld [vmem:[%s2 + $0x34] sm:$0xf]
    %v94 = vld [vmem:[%s2 + $0x38] sm:$0xf]
    %v95 = vld [vmem:[%s2 + $0x3c] sm:$0xf]
    %v112 = vunpack.c.l.b16 %v80
    %v113 = vunpack.c.l.b16 %v81
    %v114 = vunpack.c.l.b16 %v82
    %v115 = vunpack.c.l.b16 %v83
    %v116 = vunpack.c.l.b16 %v84
    %v117 = vunpack.c.l.b16 %v85
    %v118 = vunpack.c.l.b16 %v86
    %v119 = vunpack.c.l.b16 %v87
    %v120 = vunpack.c.l.b16 %v88
    %v121 = vunpack.c.l.b16 %v89
    %v122 = vunpack.c.l.b16 %v90
    %v123 = vunpack.c.l.b16 %v91
    %v124 = vunpack.c.l.b16 %v92
    %v125 = vunpack.c.l.b16 %v93
    %v126 = vunpack.c.l.b16 %v94
    %v127 = vunpack.c.l.b16 %v95
    %v128 = vpack.c.b16 %v113, %v112
    %v129 = vpack.c.b16 %v115, %v114
    %v130 = vpack.c.b16 %v117, %v116
    %v131 = vpack.c.b16 %v119, %v118
    %v132 = vpack.c.b16 %v121, %v120
    %v133 = vpack.c.b16 %v123, %v122
    %v134 = vpack.c.b16 %v125, %v124
    %v135 = vpack.c.b16 %v127, %v126
    %v139 = vunpack.c.l.b16 %v32
    %v140 = vunpack.c.l.b16 %v33
    %v141 = vunpack.c.l.b16 %v34
    %v142 = vpack.c.b16 %v140, %v139
    %v143 = vpack.c.b16 %v141, %v141
    %vm145 = vcmask 195584
    %v147 = vsel %vm145, %v128, 0
    %v150 = vsel %vm145, %v129, 0
    %v153 = vsel %vm145, %v130, 0
    %v156 = vsel %vm145, %v131, 0
    %v159 = vsel %vm145, %v132, 0
    %v162 = vsel %vm145, %v133, 0
    %v165 = vsel %vm145, %v134, 0
    %v168 = vsel %vm145, %v135, 0
    %vm170 = vcmask 1043456
    %v172 = vsel %vm170, %v143, 0
    %174 = vmatprep.subr.bf16.mxu0 0
    %175 = vmatpush1.bf16.msra.mxu0 %v142
    %176 = vmatprep.subr.bf16.mxu0 0
    %177 = vmatpush1.bf16.msra.mxu0 %v172
    %178 = vmatprep.subr.bf16.mxu0 0
    %179 = vmatpush1.bf16.msra.mxu0 0
    %180 = vmatprep.subr.bf16.mxu0 0
    %181 = vmatpush1.bf16.msra.mxu0 0
    %182 = vmatprep.subr.bf16.mxu0 0
    %183 = vmatpush1.bf16.msra.mxu0 0
    %184 = vmatprep.subr.bf16.mxu0 0
    %185 = vmatpush1.bf16.msra.mxu0 0
    %186 = vmatprep.subr.bf16.mxu0 0
    %187 = vmatpush1.bf16.msra.mxu0 0
    %188 = vmatprep.subr.bf16.mxu0 0
    %189 = vmatpush1.bf16.msra.mxu0 0
    %190 = vmatprep.subr.bf16.mxu0 0
    %191 = vmatpush1.bf16.msra.mxu0 0
    %192 = vmatprep.subr.bf16.mxu0 0
    %193 = vmatpush1.bf16.msra.mxu0 0
    %194 = vmatprep.subr.bf16.mxu0 0
    %195 = vmatpush1.bf16.msra.mxu0 0
    %196 = vmatprep.subr.bf16.mxu0 0
    %197 = vmatpush1.bf16.msra.mxu0 0
    %198 = vmatprep.subr.bf16.mxu0 0
    %199 = vmatpush1.bf16.msra.mxu0 0
    %200 = vmatprep.subr.bf16.mxu0 0
    %201 = vmatpush1.bf16.msra.mxu0 0
    %202 = vmatprep.subr.bf16.mxu0 0
    %203 = vmatpush1.bf16.msra.mxu0 0
    %204 = vmatprep.subr.bf16.mxu0 0
    %205 = vmatpush1.bf16.msra.mxu0 0
    %206 = vmatprep.mubr.bf16.mxu0 0
    %207 = vmatmul.mubr.bf16.gmra.mrb[0].mxu0 %v147
    %v208 = vpop.f32.mrb[0].mxu0
    %v209 = vadd.f32 0.0, %v208
    %v210 = vpop.f32.mrb[0].mxu0
    %v211 = vpop.f32.mrb[0].mxu0
    %v212 = vadd.f32 0.0, %v211
    %v213 = vpop.f32.mrb[0].mxu0
    %214 = vmatprep.mubr.bf16.mxu0 0
    %215 = vmatmul.mubr.bf16.gmra.mrb[0].mxu0 %v150
    %v216 = vpop.f32.mrb[0].mxu0
    %v217 = vadd.f32 0.0, %v216
    %v218 = vpop.f32.mrb[0].mxu0
    %v219 = vpop.f32.mrb[0].mxu0
    %v220 = vadd.f32 0.0, %v219
    %v221 = vpop.f32.mrb[0].mxu0
    %222 = vmatprep.mubr.bf16.mxu0 0
    %223 = vmatmul.mubr.bf16.gmra.mrb[0].mxu0 %v153
    %v224 = vpop.f32.mrb[0].mxu0
    %v225 = vadd.f32 0.0, %v224
    %v226 = vpop.f32.mrb[0].mxu0
    %v227 = vpop.f32.mrb[0].mxu0
    %v228 = vadd.f32 0.0, %v227
    %v229 = vpop.f32.mrb[0].mxu0
    %230 = vmatprep.mubr.bf16.mxu0 0
    %231 = vmatmul.mubr.bf16.gmra.mrb[0].mxu0 %v156
    %v232 = vpop.f32.mrb[0].mxu0
    %v233 = vadd.f32 0.0, %v232
    %v234 = vpop.f32.mrb[0].mxu0
    %v235 = vpop.f32.mrb[0].mxu0
    %v236 = vadd.f32 0.0, %v235
    %v237 = vpop.f32.mrb[0].mxu0
    %238 = vmatprep.mubr.bf16.mxu0 0
    %239 = vmatmul.mubr.bf16.gmra.mrb[0].mxu0 %v159
    %v240 = vpop.f32.mrb[0].mxu0
    %v241 = vadd.f32 0.0, %v240
    %v242 = vpop.f32.mrb[0].mxu0
    %v243 = vpop.f32.mrb[0].mxu0
    %v244 = vadd.f32 0.0, %v243
    %v245 = vpop.f32.mrb[0].mxu0
    %246 = vmatprep.mubr.bf16.mxu0 0
    %247 = vmatmul.mubr.bf16.gmra.mrb[0].mxu0 %v162
    %v248 = vpop.f32.mrb[0].mxu0
    %v249 = vadd.f32 0.0, %v248
    %v250 = vpop.f32.mrb[0].mxu0
    %v251 = vpop.f32.mrb[0].mxu0
    %v252 = vadd.f32 0.0, %v251
    %v253 = vpop.f32.mrb[0].mxu0
    %254 = vmatprep.mubr.bf16.mxu0 0
    %255 = vmatmul.mubr.bf16.gmra.mrb[0].mxu0 %v165
    %v256 = vpop.f32.mrb[0].mxu0
    %v257 = vadd.f32 0.0, %v256
    %v258 = vpop.f32.mrb[0].mxu0
    %v259 = vpop.f32.mrb[0].mxu0
    %v260 = vadd.f32 0.0, %v259
    %v261 = vpop.f32.mrb[0].mxu0
    %262 = vmatprep.mubr.bf16.mxu0 0
    %263 = vmatmul.mubr.bf16.gmra.mrb[0].mxu0 %v168
    %v264 = vpop.f32.mrb[0].mxu0
    %v265 = vadd.f32 0.0, %v264
    %v266 = vpop.f32.mrb[0].mxu0
    %v267 = vpop.f32.mrb[0].mxu0
    %v268 = vadd.f32 0.0, %v267
    %v269 = vpop.f32.mrb[0].mxu0
    %270 = vdwg.mxu0
    %v271 = vpack.c.bf16 %v212, %v209
    %v272 = vpack.c.bf16 %v220, %v217
    %v273 = vpack.c.bf16 %v228, %v225
    %v274 = vpack.c.bf16 %v236, %v233
    %v275 = vpack.c.bf16 %v244, %v241
    %v276 = vpack.c.bf16 %v252, %v249
    %v277 = vpack.c.bf16 %v260, %v257
    %v278 = vpack.c.bf16 %v268, %v265
    %v280 = vlaneseq
    %v281 = vshrl.u32 %v280, 7
    %v282 = vsub.s32 0, %v281
    %v283 = vrot.slane %v35, %v282
    %v301 = vunpack.c.l.b16 %v64
    %v302 = vunpack.c.l.b16 %v65
    %v303 = vunpack.c.l.b16 %v66
    %v304 = vunpack.c.l.b16 %v67
    %v305 = vunpack.c.l.b16 %v68
    %v306 = vunpack.c.l.b16 %v69
    %v307 = vunpack.c.l.b16 %v70
    %v308 = vunpack.c.l.b16 %v71
    %v309 = vunpack.c.l.b16 %v72
    %v310 = vunpack.c.l.b16 %v73
    %v311 = vunpack.c.l.b16 %v74
    %v312 = vunpack.c.l.b16 %v75
    %v313 = vunpack.c.l.b16 %v76
    %v314 = vunpack.c.l.b16 %v77
    %v315 = vunpack.c.l.b16 %v78
    %v316 = vunpack.c.l.b16 %v79
    %v317 = vpack.c.b16 %v302, %v301
    %v318 = vpack.c.b16 %v304, %v303
    %v319 = vpack.c.b16 %v306, %v305
    %v320 = vpack.c.b16 %v308, %v307
    %v321 = vpack.c.b16 %v310, %v309
    %v322 = vpack.c.b16 %v312, %v311
    %v323 = vpack.c.b16 %v314, %v313
    %v324 = vpack.c.b16 %v316, %v315
    %333 = vmatprep.subr.bf16.mxu0 0
    %334 = vmatpush1.bf16.msra.mxu0 %v271
    %335 = vmatprep.subr.bf16.mxu0 0
    %336 = vmatpush1.bf16.msra.mxu0 %v272
    %337 = vmatprep.subr.bf16.mxu0 0
    %338 = vmatpush1.bf16.msra.mxu0 %v273
    %339 = vmatprep.subr.bf16.mxu0 0
    %340 = vmatpush1.bf16.msra.mxu0 %v274
    %341 = vmatprep.subr.bf16.mxu0 0
    %342 = vmatpush1.bf16.msra.mxu0 %v275
    %343 = vmatprep.subr.bf16.mxu0 0
    %344 = vmatpush1.bf16.msra.mxu0 %v276
    %345 = vmatprep.subr.bf16.mxu0 0
    %346 = vmatpush1.bf16.msra.mxu0 %v277
    %347 = vmatprep.subr.bf16.mxu0 0
    %348 = vmatpush1.bf16.msra.mxu0 %v278
    %349 = vmatprep.subr.bf16.mxu0 0
    %350 = vmatpush1.bf16.msra.mxu0 0
    %351 = vmatprep.subr.bf16.mxu0 0
    %352 = vmatpush1.bf16.msra.mxu0 0
    %353 = vmatprep.subr.bf16.mxu0 0
    %354 = vmatpush1.bf16.msra.mxu0 0
    %355 = vmatprep.subr.bf16.mxu0 0
    %356 = vmatpush1.bf16.msra.mxu0 0
    %357 = vmatprep.subr.bf16.mxu0 0
    %358 = vmatpush1.bf16.msra.mxu0 0
    %359 = vmatprep.subr.bf16.mxu0 0
    %360 = vmatpush1.bf16.msra.mxu0 0
    %361 = vmatprep.subr.bf16.mxu0 0
    %362 = vmatpush1.bf16.msra.mxu0 0
    %363 = vmatprep.subr.bf16.mxu0 0
    %364 = vmatpush1.bf16.msra.mxu0 0
    %365 = vmatprep.mubr.bf16.mxu0 0
    %366 = vmatmul.mubr.bf16.gmra.mrb[0].mxu0 %v317
    %v367 = vpop.f32.mrb[0].mxu0
    %v368 = vadd.f32 %v283, %v367
    %v369 = vpop.f32.mrb[0].mxu0
    %v370 = vpop.f32.mrb[0].mxu0
    %v371 = vadd.f32 %v283, %v370
    %v372 = vpop.f32.mrb[0].mxu0
    %373 = vmatprep.mubr.bf16.mxu0 0
    %374 = vmatmul.mubr.bf16.gmra.mrb[0].mxu0 %v318
    %v375 = vpop.f32.mrb[0].mxu0
    %v376 = vadd.f32 %v283, %v375
    %v377 = vpop.f32.mrb[0].mxu0
    %v378 = vpop.f32.mrb[0].mxu0
    %v379 = vadd.f32 %v283, %v378
    %v380 = vpop.f32.mrb[0].mxu0
    %381 = vmatprep.mubr.bf16.mxu0 0
    %382 = vmatmul.mubr.bf16.gmra.mrb[0].mxu0 %v319
    %v383 = vpop.f32.mrb[0].mxu0
    %v384 = vadd.f32 %v283, %v383
    %v385 = vpop.f32.mrb[0].mxu0
    %v386 = vpop.f32.mrb[0].mxu0
    %v387 = vadd.f32 %v283, %v386
    %v388 = vpop.f32.mrb[0].mxu0
    %389 = vmatprep.mubr.bf16.mxu0 0
    %390 = vmatmul.mubr.bf16.gmra.mrb[0].mxu0 %v320
    %v391 = vpop.f32.mrb[0].mxu0
    %v392 = vadd.f32 %v283, %v391
    %v393 = vpop.f32.mrb[0].mxu0
    %v394 = vpop.f32.mrb[0].mxu0
    %v395 = vadd.f32 %v283, %v394
    %v396 = vpop.f32.mrb[0].mxu0
    %397 = vmatprep.mubr.bf16.mxu0 0
    %398 = vmatmul.mubr.bf16.gmra.mrb[0].mxu0 %v321
    %v399 = vpop.f32.mrb[0].mxu0
    %v400 = vadd.f32 %v283, %v399
    %v401 = vpop.f32.mrb[0].mxu0
    %v402 = vpop.f32.mrb[0].mxu0
    %v403 = vadd.f32 %v283, %v402
    %v404 = vpop.f32.mrb[0].mxu0
    %405 = vmatprep.mubr.bf16.mxu0 0
    %406 = vmatmul.mubr.bf16.gmra.mrb[0].mxu0 %v322
    %v407 = vpop.f32.mrb[0].mxu0
    %v408 = vadd.f32 %v283, %v407
    %v409 = vpop.f32.mrb[0].mxu0
    %v410 = vpop.f32.mrb[0].mxu0
    %v411 = vadd.f32 %v283, %v410
    %v412 = vpop.f32.mrb[0].mxu0
    %413 = vmatprep.mubr.bf16.mxu0 0
    %414 = vmatmul.mubr.bf16.gmra.mrb[0].mxu0 %v323
    %v415 = vpop.f32.mrb[0].mxu0
    %v416 = vadd.f32 %v283, %v415
    %v417 = vpop.f32.mrb[0].mxu0
    %v418 = vpop.f32.mrb[0].mxu0
    %v419 = vadd.f32 %v283, %v418
    %v420 = vpop.f32.mrb[0].mxu0
    %421 = vmatprep.mubr.bf16.mxu0 0
    %422 = vmatmul.mubr.bf16.gmra.mrb[0].mxu0 %v324
    %v423 = vpop.f32.mrb[0].mxu0
    %v424 = vadd.f32 %v283, %v423
    %v425 = vpop.f32.mrb[0].mxu0
    %v426 = vpop.f32.mrb[0].mxu0
    %v427 = vadd.f32 %v283, %v426
    %v428 = vpop.f32.mrb[0].mxu0
    %429 = vdwg.mxu0
    %v430 = vmax.f32 %v368, 0.0
    %v431 = vmax.f32 %v371, 0.0
    %v432 = vmax.f32 %v376, 0.0
    %v433 = vmax.f32 %v379, 0.0
    %v434 = vmax.f32 %v384, 0.0
    %v435 = vmax.f32 %v387, 0.0
    %v436 = vmax.f32 %v392, 0.0
    %v437 = vmax.f32 %v395, 0.0
    %v438 = vmax.f32 %v400, 0.0
    %v439 = vmax.f32 %v403, 0.0
    %v440 = vmax.f32 %v408, 0.0
    %v441 = vmax.f32 %v411, 0.0
    %v442 = vmax.f32 %v416, 0.0
    %v443 = vmax.f32 %v419, 0.0
    %v444 = vmax.f32 %v424, 0.0
    %v445 = vmax.f32 %v427, 0.0
    %v446 = vpack.c.bf16 %v431, %v430
    %v447 = vpack.c.bf16 %v433, %v432
    %v448 = vpack.c.bf16 %v435, %v434
    %v449 = vpack.c.bf16 %v437, %v436
    %v450 = vpack.c.bf16 %v439, %v438
    %v451 = vpack.c.bf16 %v441, %v440
    %v452 = vpack.c.bf16 %v443, %v442
    %v453 = vpack.c.bf16 %v445, %v444
    %v462 = vunpack.c.l.b16 %v36
    %v463 = vunpack.c.l.b16 %v37
    %v464 = vunpack.c.l.b16 %v38
    %v465 = vunpack.c.l.b16 %v39
    %v466 = vunpack.c.l.b16 %v40
    %v467 = vunpack.c.l.b16 %v41
    %v468 = vunpack.c.l.b16 %v42
    %v469 = vunpack.c.l.b16 %v43
    %v470 = vpack.c.b16 %v463, %v462
    %v471 = vpack.c.b16 %v465, %v464
    %v472 = vpack.c.b16 %v467, %v466
    %v473 = vpack.c.b16 %v469, %v468
    %vm478 = vcmask 523264
    %v480 = vsel %vm478, %v446, 0
    %v483 = vsel %vm478, %v447, 0
    %v486 = vsel %vm478, %v448, 0
    %v489 = vsel %vm478, %v449, 0
    %v492 = vsel %vm478, %v450, 0
    %v495 = vsel %vm478, %v451, 0
    %v498 = vsel %vm478, %v452, 0
    %v501 = vsel %vm478, %v453, 0
    %503 = vmatprep.subr.bf16.mxu0 0
    %504 = vmatpush1.bf16.msra.mxu0 %v470
    %505 = vmatprep.subr.bf16.mxu0 0
    %506 = vmatpush1.bf16.msra.mxu0 %v471
    %507 = vmatprep.subr.bf16.mxu0 0
    %508 = vmatpush1.bf16.msra.mxu0 %v472
    %509 = vmatprep.subr.bf16.mxu0 0
    %510 = vmatpush1.bf16.msra.mxu0 %v473
    %511 = vmatprep.subr.bf16.mxu0 0
    %512 = vmatpush1.bf16.msra.mxu0 0
    %513 = vmatprep.subr.bf16.mxu0 0
    %514 = vmatpush1.bf16.msra.mxu0 0
    %515 = vmatprep.subr.bf16.mxu0 0
    %516 = vmatpush1.bf16.msra.mxu0 0
    %517 = vmatprep.subr.bf16.mxu0 0
    %518 = vmatpush1.bf16.msra.mxu0 0
    %519 = vmatprep.subr.bf16.mxu0 0
    %520 = vmatpush1.bf16.msra.mxu0 0
    %521 = vmatprep.subr.bf16.mxu0 0
    %522 = vmatpush1.bf16.msra.mxu0 0
    %523 = vmatprep.subr.bf16.mxu0 0
    %524 = vmatpush1.bf16.msra.mxu0 0
    %525 = vmatprep.subr.bf16.mxu0 0
    %526 = vmatpush1.bf16.msra.mxu0 0
    %527 = vmatprep.subr.bf16.mxu0 0
    %528 = vmatpush1.bf16.msra.mxu0 0
    %529 = vmatprep.subr.bf16.mxu0 0
    %530 = vmatpush1.bf16.msra.mxu0 0
    %531 = vmatprep.subr.bf16.mxu0 0
    %532 = vmatpush1.bf16.msra.mxu0 0
    %533 = vmatprep.subr.bf16.mxu0 0
    %534 = vmatpush1.bf16.msra.mxu0 0
    %535 = vmatprep.mubr.bf16.mxu0 0
    %536 = vmatmul.mubr.bf16.gmra.mrb[0].mxu0 %v480
    %v537 = vpop.f32.mrb[0].mxu0
    %v538 = vadd.f32 0.0, %v537
    %v539 = vpop.f32.mrb[0].mxu0
    %v540 = vpop.f32.mrb[0].mxu0
    %v541 = vadd.f32 0.0, %v540
    %v542 = vpop.f32.mrb[0].mxu0
    %543 = vmatprep.mubr.bf16.mxu0 0
    %544 = vmatmul.mubr.bf16.gmra.mrb[0].mxu0 %v483
    %v545 = vpop.f32.mrb[0].mxu0
    %v546 = vadd.f32 0.0, %v545
    %v547 = vpop.f32.mrb[0].mxu0
    %v548 = vpop.f32.mrb[0].mxu0
    %v549 = vadd.f32 0.0, %v548
    %v550 = vpop.f32.mrb[0].mxu0
    %551 = vmatprep.mubr.bf16.mxu0 0
    %552 = vmatmul.mubr.bf16.gmra.mrb[0].mxu0 %v486
    %v553 = vpop.f32.mrb[0].mxu0
    %v554 = vadd.f32 0.0, %v553
    %v555 = vpop.f32.mrb[0].mxu0
    %v556 = vpop.f32.mrb[0].mxu0
    %v557 = vadd.f32 0.0, %v556
    %v558 = vpop.f32.mrb[0].mxu0
    %559 = vmatprep.mubr.bf16.mxu0 0
    %560 = vmatmul.mubr.bf16.gmra.mrb[0].mxu0 %v489
    %v561 = vpop.f32.mrb[0].mxu0
    %v562 = vadd.f32 0.0, %v561
    %v563 = vpop.f32.mrb[0].mxu0
    %v564 = vpop.f32.mrb[0].mxu0
    %v565 = vadd.f32 0.0, %v564
    %v566 = vpop.f32.mrb[0].mxu0
    %567 = vmatprep.mubr.bf16.mxu0 0
    %568 = vmatmul.mubr.bf16.gmra.mrb[0].mxu0 %v492
    %v569 = vpop.f32.mrb[0].mxu0
    %v570 = vadd.f32 0.0, %v569
    %v571 = vpop.f32.mrb[0].mxu0
    %v572 = vpop.f32.mrb[0].mxu0
    %v573 = vadd.f32 0.0, %v572
    %v574 = vpop.f32.mrb[0].mxu0
    %575 = vmatprep.mubr.bf16.mxu0 0
    %576 = vmatmul.mubr.bf16.gmra.mrb[0].mxu0 %v495
    %v577 = vpop.f32.mrb[0].mxu0
    %v578 = vadd.f32 0.0, %v577
    %v579 = vpop.f32.mrb[0].mxu0
    %v580 = vpop.f32.mrb[0].mxu0
    %v581 = vadd.f32 0.0, %v580
    %v582 = vpop.f32.mrb[0].mxu0
    %583 = vmatprep.mubr.bf16.mxu0 0
    %584 = vmatmul.mubr.bf16.gmra.mrb[0].mxu0 %v498
    %v585 = vpop.f32.mrb[0].mxu0
    %v586 = vadd.f32 0.0, %v585
    %v587 = vpop.f32.mrb[0].mxu0
    %v588 = vpop.f32.mrb[0].mxu0
    %v589 = vadd.f32 0.0, %v588
    %v590 = vpop.f32.mrb[0].mxu0
    %591 = vmatprep.mubr.bf16.mxu0 0
    %592 = vmatmul.mubr.bf16.gmra.mrb[0].mxu0 %v501
    %v593 = vpop.f32.mrb[0].mxu0
    %v594 = vadd.f32 0.0, %v593
    %v595 = vpop.f32.mrb[0].mxu0
    %v596 = vpop.f32.mrb[0].mxu0
    %v597 = vadd.f32 0.0, %v596
    %v598 = vpop.f32.mrb[0].mxu0
    %599 = vdwg.mxu0
    %v600 = vpack.c.bf16 %v541, %v538
    %v601 = vpack.c.bf16 %v549, %v546
    %v602 = vpack.c.bf16 %v557, %v554
    %v603 = vpack.c.bf16 %v565, %v562
    %v604 = vpack.c.bf16 %v573, %v570
    %v605 = vpack.c.bf16 %v581, %v578
    %v606 = vpack.c.bf16 %v589, %v586
    %v607 = vpack.c.bf16 %v597, %v594
    %v609 = vlaneseq
    %v610 = vshrl.u32 %v609, 7
    %v611 = vsub.s32 0, %v610
    %v612 = vrot.slane %v44, %v611
    %614 = vmatprep.subr.bf16.mxu0 0
    %615 = vmatpush1.bf16.msra.mxu0 %v600
    %616 = vmatprep.subr.bf16.mxu0 0
    %617 = vmatpush1.bf16.msra.mxu0 %v601
    %618 = vmatprep.subr.bf16.mxu0 0
    %619 = vmatpush1.bf16.msra.mxu0 %v602
    %620 = vmatprep.subr.bf16.mxu0 0
    %621 = vmatpush1.bf16.msra.mxu0 %v603
    %622 = vmatprep.subr.bf16.mxu0 0
    %623 = vmatpush1.bf16.msra.mxu0 %v604
    %624 = vmatprep.subr.bf16.mxu0 0
    %625 = vmatpush1.bf16.msra.mxu0 %v605
    %626 = vmatprep.subr.bf16.mxu0 0
    %627 = vmatpush1.bf16.msra.mxu0 %v606
    %628 = vmatprep.subr.bf16.mxu0 0
    %629 = vmatpush1.bf16.msra.mxu0 %v607
    %630 = vmatprep.subr.bf16.mxu0 0
    %631 = vmatpush1.bf16.msra.mxu0 0
    %632 = vmatprep.subr.bf16.mxu0 0
    %633 = vmatpush1.bf16.msra.mxu0 0
    %634 = vmatprep.subr.bf16.mxu0 0
    %635 = vmatpush1.bf16.msra.mxu0 0
    %636 = vmatprep.subr.bf16.mxu0 0
    %637 = vmatpush1.bf16.msra.mxu0 0
    %638 = vmatprep.subr.bf16.mxu0 0
    %639 = vmatpush1.bf16.msra.mxu0 0
    %640 = vmatprep.subr.bf16.mxu0 0
    %641 = vmatpush1.bf16.msra.mxu0 0
    %642 = vmatprep.subr.bf16.mxu0 0
    %643 = vmatpush1.bf16.msra.mxu0 0
    %644 = vmatprep.subr.bf16.mxu0 0
    %645 = vmatpush1.bf16.msra.mxu0 0
    %646 = vmatprep.mubr.bf16.mxu0 0
    %647 = vmatmul.mubr.bf16.gmra.mrb[0].mxu0 %v317
    %v648 = vpop.f32.mrb[0].mxu0
    %v649 = vadd.f32 %v612, %v648
    %v650 = vpop.f32.mrb[0].mxu0
    %v651 = vpop.f32.mrb[0].mxu0
    %v652 = vadd.f32 %v612, %v651
    %v653 = vpop.f32.mrb[0].mxu0
    %654 = vmatprep.mubr.bf16.mxu0 0
    %655 = vmatmul.mubr.bf16.gmra.mrb[0].mxu0 %v318
    %v656 = vpop.f32.mrb[0].mxu0
    %v657 = vadd.f32 %v612, %v656
    %v658 = vpop.f32.mrb[0].mxu0
    %v659 = vpop.f32.mrb[0].mxu0
    %v660 = vadd.f32 %v612, %v659
    %v661 = vpop.f32.mrb[0].mxu0
    %662 = vmatprep.mubr.bf16.mxu0 0
    %663 = vmatmul.mubr.bf16.gmra.mrb[0].mxu0 %v319
    %v664 = vpop.f32.mrb[0].mxu0
    %v665 = vadd.f32 %v612, %v664
    %v666 = vpop.f32.mrb[0].mxu0
    %v667 = vpop.f32.mrb[0].mxu0
    %v668 = vadd.f32 %v612, %v667
    %v669 = vpop.f32.mrb[0].mxu0
    %670 = vmatprep.mubr.bf16.mxu0 0
    %671 = vmatmul.mubr.bf16.gmra.mrb[0].mxu0 %v320
    %v672 = vpop.f32.mrb[0].mxu0
    %v673 = vadd.f32 %v612, %v672
    %v674 = vpop.f32.mrb[0].mxu0
    %v675 = vpop.f32.mrb[0].mxu0
    %v676 = vadd.f32 %v612, %v675
    %v677 = vpop.f32.mrb[0].mxu0
    %678 = vmatprep.mubr.bf16.mxu0 0
    %679 = vmatmul.mubr.bf16.gmra.mrb[0].mxu0 %v321
    %v680 = vpop.f32.mrb[0].mxu0
    %v681 = vadd.f32 %v612, %v680
    %v682 = vpop.f32.mrb[0].mxu0
    %v683 = vpop.f32.mrb[0].mxu0
    %v684 = vadd.f32 %v612, %v683
    %v685 = vpop.f32.mrb[0].mxu0
    %686 = vmatprep.mubr.bf16.mxu0 0
    %687 = vmatmul.mubr.bf16.gmra.mrb[0].mxu0 %v322
    %v688 = vpop.f32.mrb[0].mxu0
    %v689 = vadd.f32 %v612, %v688
    %v690 = vpop.f32.mrb[0].mxu0
    %v691 = vpop.f32.mrb[0].mxu0
    %v692 = vadd.f32 %v612, %v691
    %v693 = vpop.f32.mrb[0].mxu0
    %694 = vmatprep.mubr.bf16.mxu0 0
    %695 = vmatmul.mubr.bf16.gmra.mrb[0].mxu0 %v323
    %v696 = vpop.f32.mrb[0].mxu0
    %v697 = vadd.f32 %v612, %v696
    %v698 = vpop.f32.mrb[0].mxu0
    %v699 = vpop.f32.mrb[0].mxu0
    %v700 = vadd.f32 %v612, %v699
    %v701 = vpop.f32.mrb[0].mxu0
    %702 = vmatprep.mubr.bf16.mxu0 0
    %703 = vmatmul.mubr.bf16.gmra.mrb[0].mxu0 %v324
    %v704 = vpop.f32.mrb[0].mxu0
    %v705 = vadd.f32 %v612, %v704
    %v706 = vpop.f32.mrb[0].mxu0
    %v707 = vpop.f32.mrb[0].mxu0
    %v708 = vadd.f32 %v612, %v707
    %v709 = vpop.f32.mrb[0].mxu0
    %710 = vdwg.mxu0
    %v711 = vmax.f32 %v649, 0.0
    %v712 = vmax.f32 %v652, 0.0
    %v713 = vmax.f32 %v657, 0.0
    %v714 = vmax.f32 %v660, 0.0
    %v715 = vmax.f32 %v665, 0.0
    %v716 = vmax.f32 %v668, 0.0
    %v717 = vmax.f32 %v673, 0.0
    %v718 = vmax.f32 %v676, 0.0
    %v719 = vmax.f32 %v681, 0.0
    %v720 = vmax.f32 %v684, 0.0
    %v721 = vmax.f32 %v689, 0.0
    %v722 = vmax.f32 %v692, 0.0
    %v723 = vmax.f32 %v697, 0.0
    %v724 = vmax.f32 %v700, 0.0
    %v725 = vmax.f32 %v705, 0.0
    %v726 = vmax.f32 %v708, 0.0
    %s727 = smul.u32 0, 4
    %s728 = sld [smem:[#allocation3 + %s727]]
    %v729 = vstv %s728
    %vm730 = vcmp.lt.s32.totalorder %v46, %v729
    %vm731 = vcmp.lt.s32.totalorder %v47, %v729
    %vm732 = vcmp.lt.s32.totalorder %v48, %v729
    %vm733 = vcmp.lt.s32.totalorder %v49, %v729
    %vm734 = vcmp.lt.s32.totalorder %v50, %v729
    %vm735 = vcmp.lt.s32.totalorder %v51, %v729
    %vm736 = vcmp.lt.s32.totalorder %v52, %v729
    %vm737 = vcmp.lt.s32.totalorder %v53, %v729
    %vm738 = vcmp.lt.s32.totalorder %v54, %v729
    %vm739 = vcmp.lt.s32.totalorder %v55, %v729
    %vm740 = vcmp.lt.s32.totalorder %v56, %v729
    %vm741 = vcmp.lt.s32.totalorder %v57, %v729
    %vm742 = vcmp.lt.s32.totalorder %v58, %v729
    %vm743 = vcmp.lt.s32.totalorder %v59, %v729
    %vm744 = vcmp.lt.s32.totalorder %v60, %v729
    %vm745 = vcmp.lt.s32.totalorder %v61, %v729
    %v746 = vsel %vm730, %v711, -1e+30
    %v747 = vsel %vm731, %v712, -1e+30
    %v748 = vsel %vm732, %v713, -1e+30
    %v749 = vsel %vm733, %v714, -1e+30
    %v750 = vsel %vm734, %v715, -1e+30
    %v751 = vsel %vm735, %v716, -1e+30
    %v752 = vsel %vm736, %v717, -1e+30
    %v753 = vsel %vm737, %v718, -1e+30
    %v754 = vsel %vm738, %v719, -1e+30
    %v755 = vsel %vm739, %v720, -1e+30
    %v756 = vsel %vm740, %v721, -1e+30
    %v757 = vsel %vm741, %v722, -1e+30
    %v758 = vsel %vm742, %v723, -1e+30
    %v759 = vsel %vm743, %v724, -1e+30
    %v760 = vsel %vm744, %v725, -1e+30
    %v761 = vsel %vm745, %v726, -1e+30
    %vm762 = vcmask 523768
    %v763 = vsel %vm762, %v746, -inf
    %v764 = vsel %vm762, %v747, -inf
    %v765 = vsel %vm762, %v748, -inf
    %v766 = vsel %vm762, %v749, -inf
    %v767 = vsel %vm762, %v750, -inf
    %v768 = vmax.f32 %v763, %v767
    %v769 = vsel %vm762, %v751, -inf
    %v770 = vmax.f32 %v764, %v769
    %v771 = vsel %vm762, %v752, -inf
    %v772 = vmax.f32 %v765, %v771
    %v773 = vsel %vm762, %v753, -inf
    %v774 = vmax.f32 %v766, %v773
    %v775 = vsel %vm762, %v754, -inf
    %v776 = vmax.f32 %v768, %v775
    %v777 = vsel %vm762, %v755, -inf
    %v778 = vmax.f32 %v770, %v777
    %v779 = vsel %vm762, %v756, -inf
    %v780 = vmax.f32 %v772, %v779
    %v781 = vsel %vm762, %v757, -inf
    %v782 = vmax.f32 %v774, %v781
    %v783 = vsel %vm762, %v758, -inf
    %v784 = vmax.f32 %v776, %v783
    %v785 = vsel %vm762, %v759, -inf
    %v786 = vmax.f32 %v778, %v785
    %v787 = vsel %vm762, %v760, -inf
    %v788 = vmax.f32 %v780, %v787
    %v789 = vsel %vm762, %v761, -inf
    %v790 = vmax.f32 %v782, %v789
    %v791 = vmax.f32 %v784, %v786
    %v792 = vmax.f32 %v788, %v790
    %v793 = vmax.f32 %v791, %v792
    %v794 = vrot.slane %v793, 4
    %v795 = vmax.f32 %v793, %v794
    %v796 = vrot.slane %v795, 2
    %v797 = vmax.f32 %v795, %v796
    %v798 = vrot.slane %v797, 1
    %v799 = vmax.f32 %v797, %v798
    %vm800 = vcmp.ge.f32.partialorder %v746, %v799
    %vm801 = vcmp.ge.f32.partialorder %v747, %v799
    %vm802 = vcmp.ge.f32.partialorder %v748, %v799
    %vm803 = vcmp.ge.f32.partialorder %v749, %v799
    %vm804 = vcmp.ge.f32.partialorder %v750, %v799
    %vm805 = vcmp.ge.f32.partialorder %v751, %v799
    %vm806 = vcmp.ge.f32.partialorder %v752, %v799
    %vm807 = vcmp.ge.f32.partialorder %v753, %v799
    %vm808 = vcmp.ge.f32.partialorder %v754, %v799
    %vm809 = vcmp.ge.f32.partialorder %v755, %v799
    %vm810 = vcmp.ge.f32.partialorder %v756, %v799
    %vm811 = vcmp.ge.f32.partialorder %v757, %v799
    %vm812 = vcmp.ge.f32.partialorder %v758, %v799
    %vm813 = vcmp.ge.f32.partialorder %v759, %v799
    %vm814 = vcmp.ge.f32.partialorder %v760, %v799
    %vm815 = vcmp.ge.f32.partialorder %v761, %v799
    %v816 = vsel %vm800, %v46, 128
    %v817 = vsel %vm801, %v47, 128
    %v818 = vsel %vm802, %v48, 128
    %v819 = vsel %vm803, %v49, 128
    %v820 = vsel %vm804, %v50, 128
    %v821 = vsel %vm805, %v51, 128
    %v822 = vsel %vm806, %v52, 128
    %v823 = vsel %vm807, %v53, 128
    %v824 = vsel %vm808, %v54, 128
    %v825 = vsel %vm809, %v55, 128
    %v826 = vsel %vm810, %v56, 128
    %v827 = vsel %vm811, %v57, 128
    %v828 = vsel %vm812, %v58, 128
    %v829 = vsel %vm813, %v59, 128
    %v830 = vsel %vm814, %v60, 128
    %v831 = vsel %vm815, %v61, 128
    %v832 = vsel %vm762, %v816, 2147483647
    %v833 = vsel %vm762, %v817, 2147483647
    %v834 = vsel %vm762, %v818, 2147483647
    %v835 = vsel %vm762, %v819, 2147483647
    %v836 = vsel %vm762, %v820, 2147483647
    %vm837 = vcmp.lt.s32.totalorder %v832, %v836
    %v838 = vsel %vm837, %v832, %v836
    %v839 = vsel %vm762, %v821, 2147483647
    %vm840 = vcmp.lt.s32.totalorder %v833, %v839
    %v841 = vsel %vm840, %v833, %v839
    %v842 = vsel %vm762, %v822, 2147483647
    %vm843 = vcmp.lt.s32.totalorder %v834, %v842
    %v844 = vsel %vm843, %v834, %v842
    %v845 = vsel %vm762, %v823, 2147483647
    %vm846 = vcmp.lt.s32.totalorder %v835, %v845
    %v847 = vsel %vm846, %v835, %v845
    %v848 = vsel %vm762, %v824, 2147483647
    %vm849 = vcmp.lt.s32.totalorder %v838, %v848
    %v850 = vsel %vm849, %v838, %v848
    %v851 = vsel %vm762, %v825, 2147483647
    %vm852 = vcmp.lt.s32.totalorder %v841, %v851
    %v853 = vsel %vm852, %v841, %v851
    %v854 = vsel %vm762, %v826, 2147483647
    %vm855 = vcmp.lt.s32.totalorder %v844, %v854
    %v856 = vsel %vm855, %v844, %v854
    %v857 = vsel %vm762, %v827, 2147483647
    %vm858 = vcmp.lt.s32.totalorder %v847, %v857
    %v859 = vsel %vm858, %v847, %v857
    %v860 = vsel %vm762, %v828, 2147483647
    %vm861 = vcmp.lt.s32.totalorder %v850, %v860
    %v862 = vsel %vm861, %v850, %v860
    %v863 = vsel %vm762, %v829, 2147483647
    %vm864 = vcmp.lt.s32.totalorder %v853, %v863
    %v865 = vsel %vm864, %v853, %v863
    %v866 = vsel %vm762, %v830, 2147483647
    %vm867 = vcmp.lt.s32.totalorder %v856, %v866
    %v868 = vsel %vm867, %v856, %v866
    %v869 = vsel %vm762, %v831, 2147483647
    %vm870 = vcmp.lt.s32.totalorder %v859, %v869
    %v871 = vsel %vm870, %v859, %v869
    %vm872 = vcmp.lt.s32.totalorder %v862, %v865
    %v873 = vsel %vm872, %v862, %v865
    %vm874 = vcmp.lt.s32.totalorder %v868, %v871
    %v875 = vsel %vm874, %v868, %v871
    %vm876 = vcmp.lt.s32.totalorder %v873, %v875
    %v877 = vsel %vm876, %v873, %v875
    %v878 = vrot.slane %v877, 4
    %vm879 = vcmp.lt.s32.totalorder %v877, %v878
    %v880 = vsel %vm879, %v877, %v878
    %v881 = vrot.slane %v880, 2
    %vm882 = vcmp.lt.s32.totalorder %v880, %v881
    %v883 = vsel %vm882, %v880, %v881
    %v884 = vrot.slane %v883, 1
    %vm885 = vcmp.lt.s32.totalorder %v883, %v884
    %v886 = vsel %vm885, %v883, %v884
    %887 = vset.pattern.permute.xlu0 63
    %888 = vperm.xlu0 %887, %v886
    %v889 = vpop.permute.xlu0 %888
    %vm890 = vcmp.eq.s32.totalorder %v63, %v889
    %v891 = vsel %vm890, 1, 0
    %v892 = vcvt.s32.f32 %v891
    %893 = vmatprep.subr.mxu0 0.0
    %894 = vmatpush1.msra.mxu0 %v711
    %895 = vmatprep.subr.mxu0 0.0
    %896 = vmatpush1.msra.mxu0 %v712
    %897 = vmatprep.subr.mxu0 0.0
    %898 = vmatpush1.msra.mxu0 %v713
    %899 = vmatprep.subr.mxu0 0.0
    %900 = vmatpush1.msra.mxu0 %v714
    %901 = vmatprep.subr.mxu0 0.0
    %902 = vmatpush1.msra.mxu0 %v715
    %903 = vmatprep.subr.mxu0 0.0
    %904 = vmatpush1.msra.mxu0 %v716
    %905 = vmatprep.subr.mxu0 0.0
    %906 = vmatpush1.msra.mxu0 %v717
    %907 = vmatprep.subr.mxu0 0.0
    %908 = vmatpush1.msra.mxu0 %v718
    %909 = vmatprep.subr.mxu0 0.0
    %910 = vmatpush1.msra.mxu0 %v719
    %911 = vmatprep.subr.mxu0 0.0
    %912 = vmatpush1.msra.mxu0 %v720
    %913 = vmatprep.subr.mxu0 0.0
    %914 = vmatpush1.msra.mxu0 %v721
    %915 = vmatprep.subr.mxu0 0.0
    %916 = vmatpush1.msra.mxu0 %v722
    %917 = vmatprep.subr.mxu0 0.0
    %918 = vmatpush1.msra.mxu0 %v723
    %919 = vmatprep.subr.mxu0 0.0
    %920 = vmatpush1.msra.mxu0 %v724
    %921 = vmatprep.subr.mxu0 0.0
    %922 = vmatpush1.msra.mxu0 %v725
    %923 = vmatprep.subr.mxu0 0.0
    %924 = vmatpush1.msra.mxu0 %v726
    %925 = vmatprep.subr.mxu0 0.0
    %926 = vmatpush1.msra.mxu0 0.0
    %927 = vmatprep.subr.mxu0 0.0
    %928 = vmatpush1.msra.mxu0 0.0
    %929 = vmatprep.subr.mxu0 0.0
    %930 = vmatpush1.msra.mxu0 0.0
    %931 = vmatprep.subr.mxu0 0.0
    %932 = vmatpush1.msra.mxu0 0.0
    %933 = vmatprep.subr.mxu0 0.0
    %934 = vmatpush1.msra.mxu0 0.0
    %935 = vmatprep.subr.mxu0 0.0
    %936 = vmatpush1.msra.mxu0 0.0
    %937 = vmatprep.subr.mxu0 0.0
    %938 = vmatpush1.msra.mxu0 0.0
    %939 = vmatprep.subr.mxu0 0.0
    %940 = vmatpush1.msra.mxu0 0.0
    %941 = vmatprep.subr.mxu0 0.0
    %942 = vmatpush1.msra.mxu0 0.0
    %943 = vmatprep.subr.mxu0 0.0
    %944 = vmatpush1.msra.mxu0 0.0
    %945 = vmatprep.subr.mxu0 0.0
    %946 = vmatpush1.msra.mxu0 0.0
    %947 = vmatprep.subr.mxu0 0.0
    %948 = vmatpush1.msra.mxu0 0.0
    %949 = vmatprep.subr.mxu0 0.0
    %950 = vmatpush1.msra.mxu0 0.0
    %951 = vmatprep.subr.mxu0 0.0
    %952 = vmatpush1.msra.mxu0 0.0
    %953 = vmatprep.subr.mxu0 0.0
    %954 = vmatpush1.msra.mxu0 0.0
    %955 = vmatprep.subr.mxu0 0.0
    %956 = vmatpush1.msra.mxu0 0.0
    %957 = vmatprep.mubr.f32.mxu0 0.0
    %958 = vmatmul.mubr.f32.gmra.mrb[0].mxu0 %v892
    %v959 = vpop.f32.mrb[0].mxu0
    %v960 = vadd.f32 0.0, %v959
    %v961 = vpop.f32.mrb[0].mxu0
    %962 = vdwg.mxu0
    %vm963 = vcmask 516096
    %964 = vst.msk [vmem:[#allocation4] sm:$0x1] %vm963, %v960
    %s965 = scalar_lea.vmem %s1, 64
    %v966 = vld [vmem:[%s965] sm:$0xf]
    %v967 = vld [vmem:[%s965 + $0x4] sm:$0xf]
    %v968 = vld [vmem:[%s965 + $0x8] sm:$0xf]
    %v969 = vld [vmem:[%s965 + $0xc] sm:$0xf]
    %v970 = vld [vmem:[%s965 + $0x10] sm:$0xf]
    %v971 = vld [vmem:[%s965 + $0x14] sm:$0xf]
    %v972 = vld [vmem:[%s965 + $0x18] sm:$0xf]
    %v973 = vld [vmem:[%s965 + $0x1c] sm:$0xf]
    %v974 = vld [vmem:[%s965 + $0x20] sm:$0xf]
    %v975 = vld [vmem:[%s965 + $0x24] sm:$0xf]
    %v976 = vld [vmem:[%s965 + $0x28] sm:$0xf]
    %v977 = vld [vmem:[%s965 + $0x2c] sm:$0xf]
    %v978 = vld [vmem:[%s965 + $0x30] sm:$0xf]
    %v979 = vld [vmem:[%s965 + $0x34] sm:$0xf]
    %v980 = vld [vmem:[%s965 + $0x38] sm:$0xf]
    %v981 = vld [vmem:[%s965 + $0x3c] sm:$0xf]
    %s982 = scalar_lea.vmem %s2, 64
    %v983 = vld [vmem:[%s982] sm:$0xf]
    %v984 = vld [vmem:[%s982 + $0x4] sm:$0xf]
    %v985 = vld [vmem:[%s982 + $0x8] sm:$0xf]
    %v986 = vld [vmem:[%s982 + $0xc] sm:$0xf]
    %v987 = vld [vmem:[%s982 + $0x10] sm:$0xf]
    %v988 = vld [vmem:[%s982 + $0x14] sm:$0xf]
    %v989 = vld [vmem:[%s982 + $0x18] sm:$0xf]
    %v990 = vld [vmem:[%s982 + $0x1c] sm:$0xf]
    %v991 = vld [vmem:[%s982 + $0x20] sm:$0xf]
    %v992 = vld [vmem:[%s982 + $0x24] sm:$0xf]
    %v993 = vld [vmem:[%s982 + $0x28] sm:$0xf]
    %v994 = vld [vmem:[%s982 + $0x2c] sm:$0xf]
    %v995 = vld [vmem:[%s982 + $0x30] sm:$0xf]
    %v996 = vld [vmem:[%s982 + $0x34] sm:$0xf]
    %v997 = vld [vmem:[%s982 + $0x38] sm:$0xf]
    %v998 = vld [vmem:[%s982 + $0x3c] sm:$0xf]
    %v1015 = vunpack.c.l.b16 %v983
    %v1016 = vunpack.c.l.b16 %v984
    %v1017 = vunpack.c.l.b16 %v985
    %v1018 = vunpack.c.l.b16 %v986
    %v1019 = vunpack.c.l.b16 %v987
    %v1020 = vunpack.c.l.b16 %v988
    %v1021 = vunpack.c.l.b16 %v989
    %v1022 = vunpack.c.l.b16 %v990
    %v1023 = vunpack.c.l.b16 %v991
    %v1024 = vunpack.c.l.b16 %v992
    %v1025 = vunpack.c.l.b16 %v993
    %v1026 = vunpack.c.l.b16 %v994
    %v1027 = vunpack.c.l.b16 %v995
    %v1028 = vunpack.c.l.b16 %v996
    %v1029 = vunpack.c.l.b16 %v997
    %v1030 = vunpack.c.l.b16 %v998
    %v1031 = vpack.c.b16 %v1016, %v1015
    %v1032 = vpack.c.b16 %v1018, %v1017
    %v1033 = vpack.c.b16 %v1020, %v1019
    %v1034 = vpack.c.b16 %v1022, %v1021
    %v1035 = vpack.c.b16 %v1024, %v1023
    %v1036 = vpack.c.b16 %v1026, %v1025
    %v1037 = vpack.c.b16 %v1028, %v1027
    %v1038 = vpack.c.b16 %v1030, %v1029
    %v1040 = vsel %vm145, %v1031, 0
    %v1043 = vsel %vm145, %v1032, 0
    %v1046 = vsel %vm145, %v1033, 0
    %v1049 = vsel %vm145, %v1034, 0
    %v1052 = vsel %vm145, %v1035, 0
    %v1055 = vsel %vm145, %v1036, 0
    %v1058 = vsel %vm145, %v1037, 0
    %v1061 = vsel %vm145, %v1038, 0
    %1063 = vmatprep.subr.bf16.mxu0 0
    %1064 = vmatpush1.bf16.msra.mxu0 %v142
    %1065 = vmatprep.subr.bf16.mxu0 0
    %1066 = vmatpush1.bf16.msra.mxu0 %v172
    %1067 = vmatprep.subr.bf16.mxu0 0
    %1068 = vmatpush1.bf16.msra.mxu0 0
    %1069 = vmatprep.subr.bf16.mxu0 0
    %1070 = vmatpush1.bf16.msra.mxu0 0
    %1071 = vmatprep.subr.bf16.mxu0 0
    %1072 = vmatpush1.bf16.msra.mxu0 0
    %1073 = vmatprep.subr.bf16.mxu0 0
    %1074 = vmatpush1.bf16.msra.mxu0 0
    %1075 = vmatprep.subr.bf16.mxu0 0
    %1076 = vmatpush1.bf16.msra.mxu0 0
    %1077 = vmatprep.subr.bf16.mxu0 0
    %1078 = vmatpush1.bf16.msra.mxu0 0
    %1079 = vmatprep.subr.bf16.mxu0 0
    %1080 = vmatpush1.bf16.msra.mxu0 0
    %1081 = vmatprep.subr.bf16.mxu0 0
    %1082 = vmatpush1.bf16.msra.mxu0 0
    %1083 = vmatprep.subr.bf16.mxu0 0
    %1084 = vmatpush1.bf16.msra.mxu0 0
    %1085 = vmatprep.subr.bf16.mxu0 0
    %1086 = vmatpush1.bf16.msra.mxu0 0
    %1087 = vmatprep.subr.bf16.mxu0 0
    %1088 = vmatpush1.bf16.msra.mxu0 0
    %1089 = vmatprep.subr.bf16.mxu0 0
    %1090 = vmatpush1.bf16.msra.mxu0 0
    %1091 = vmatprep.subr.bf16.mxu0 0
    %1092 = vmatpush1.bf16.msra.mxu0 0
    %1093 = vmatprep.subr.bf16.mxu0 0
    %1094 = vmatpush1.bf16.msra.mxu0 0
    %1095 = vmatprep.mubr.bf16.mxu0 0
    %1096 = vmatmul.mubr.bf16.gmra.mrb[0].mxu0 %v1040
    %v1097 = vpop.f32.mrb[0].mxu0
    %v1098 = vadd.f32 0.0, %v1097
    %v1099 = vpop.f32.mrb[0].mxu0
    %v1100 = vpop.f32.mrb[0].mxu0
    %v1101 = vadd.f32 0.0, %v1100
    %v1102 = vpop.f32.mrb[0].mxu0
    %1103 = vmatprep.mubr.bf16.mxu0 0
    %1104 = vmatmul.mubr.bf16.gmra.mrb[0].mxu0 %v1043
    %v1105 = vpop.f32.mrb[0].mxu0
    %v1106 = vadd.f32 0.0, %v1105
    %v1107 = vpop.f32.mrb[0].mxu0
    %v1108 = vpop.f32.mrb[0].mxu0
    %v1109 = vadd.f32 0.0, %v1108
    %v1110 = vpop.f32.mrb[0].mxu0
    %1111 = vmatprep.mubr.bf16.mxu0 0
    %1112 = vmatmul.mubr.bf16.gmra.mrb[0].mxu0 %v1046
    %v1113 = vpop.f32.mrb[0].mxu0
    %v1114 = vadd.f32 0.0, %v1113
    %v1115 = vpop.f32.mrb[0].mxu0
    %v1116 = vpop.f32.mrb[0].mxu0
    %v1117 = vadd.f32 0.0, %v1116
    %v1118 = vpop.f32.mrb[0].mxu0
    %1119 = vmatprep.mubr.bf16.mxu0 0
    %1120 = vmatmul.mubr.bf16.gmra.mrb[0].mxu0 %v1049
    %v1121 = vpop.f32.mrb[0].mxu0
    %v1122 = vadd.f32 0.0, %v1121
    %v1123 = vpop.f32.mrb[0].mxu0
    %v1124 = vpop.f32.mrb[0].mxu0
    %v1125 = vadd.f32 0.0, %v1124
    %v1126 = vpop.f32.mrb[0].mxu0
    %1127 = vmatprep.mubr.bf16.mxu0 0
    %1128 = vmatmul.mubr.bf16.gmra.mrb[0].mxu0 %v1052
    %v1129 = vpop.f32.mrb[0].mxu0
    %v1130 = vadd.f32 0.0, %v1129
    %v1131 = vpop.f32.mrb[0].mxu0
    %v1132 = vpop.f32.mrb[0].mxu0
    %v1133 = vadd.f32 0.0, %v1132
    %v1134 = vpop.f32.mrb[0].mxu0
    %1135 = vmatprep.mubr.bf16.mxu0 0
    %1136 = vmatmul.mubr.bf16.gmra.mrb[0].mxu0 %v1055
    %v1137 = vpop.f32.mrb[0].mxu0
    %v1138 = vadd.f32 0.0, %v1137
    %v1139 = vpop.f32.mrb[0].mxu0
    %v1140 = vpop.f32.mrb[0].mxu0
    %v1141 = vadd.f32 0.0, %v1140
    %v1142 = vpop.f32.mrb[0].mxu0
    %1143 = vmatprep.mubr.bf16.mxu0 0
    %1144 = vmatmul.mubr.bf16.gmra.mrb[0].mxu0 %v1058
    %v1145 = vpop.f32.mrb[0].mxu0
    %v1146 = vadd.f32 0.0, %v1145
    %v1147 = vpop.f32.mrb[0].mxu0
    %v1148 = vpop.f32.mrb[0].mxu0
    %v1149 = vadd.f32 0.0, %v1148
    %v1150 = vpop.f32.mrb[0].mxu0
    %1151 = vmatprep.mubr.bf16.mxu0 0
    %1152 = vmatmul.mubr.bf16.gmra.mrb[0].mxu0 %v1061
    %v1153 = vpop.f32.mrb[0].mxu0
    %v1154 = vadd.f32 0.0, %v1153
    %v1155 = vpop.f32.mrb[0].mxu0
    %v1156 = vpop.f32.mrb[0].mxu0
    %v1157 = vadd.f32 0.0, %v1156
    %v1158 = vpop.f32.mrb[0].mxu0
    %1159 = vdwg.mxu0
    %v1160 = vpack.c.bf16 %v1101, %v1098
    %v1161 = vpack.c.bf16 %v1109, %v1106
    %v1162 = vpack.c.bf16 %v1117, %v1114
    %v1163 = vpack.c.bf16 %v1125, %v1122
    %v1164 = vpack.c.bf16 %v1133, %v1130
    %v1165 = vpack.c.bf16 %v1141, %v1138
    %v1166 = vpack.c.bf16 %v1149, %v1146
    %v1167 = vpack.c.bf16 %v1157, %v1154
    %v1184 = vunpack.c.l.b16 %v966
    %v1185 = vunpack.c.l.b16 %v967
    %v1186 = vunpack.c.l.b16 %v968
    %v1187 = vunpack.c.l.b16 %v969
    %v1188 = vunpack.c.l.b16 %v970
    %v1189 = vunpack.c.l.b16 %v971
    %v1190 = vunpack.c.l.b16 %v972
    %v1191 = vunpack.c.l.b16 %v973
    %v1192 = vunpack.c.l.b16 %v974
    %v1193 = vunpack.c.l.b16 %v975
    %v1194 = vunpack.c.l.b16 %v976
    %v1195 = vunpack.c.l.b16 %v977
    %v1196 = vunpack.c.l.b16 %v978
    %v1197 = vunpack.c.l.b16 %v979
    %v1198 = vunpack.c.l.b16 %v980
    %v1199 = vunpack.c.l.b16 %v981
    %v1200 = vpack.c.b16 %v1185, %v1184
    %v1201 = vpack.c.b16 %v1187, %v1186
    %v1202 = vpack.c.b16 %v1189, %v1188
    %v1203 = vpack.c.b16 %v1191, %v1190
    %v1204 = vpack.c.b16 %v1193, %v1192
    %v1205 = vpack.c.b16 %v1195, %v1194
    %v1206 = vpack.c.b16 %v1197, %v1196
    %v1207 = vpack.c.b16 %v1199, %v1198
    %1216 = vmatprep.subr.bf16.mxu0 0
    %1217 = vmatpush1.bf16.msra.mxu0 %v1160
    %1218 = vmatprep.subr.bf16.mxu0 0
    %1219 = vmatpush1.bf16.msra.mxu0 %v1161
    %1220 = vmatprep.subr.bf16.mxu0 0
    %1221 = vmatpush1.bf16.msra.mxu0 %v1162
    %1222 = vmatprep.subr.bf16.mxu0 0
    %1223 = vmatpush1.bf16.msra.mxu0 %v1163
    %1224 = vmatprep.subr.bf16.mxu0 0
    %1225 = vmatpush1.bf16.msra.mxu0 %v1164
    %1226 = vmatprep.subr.bf16.mxu0 0
    %1227 = vmatpush1.bf16.msra.mxu0 %v1165
    %1228 = vmatprep.subr.bf16.mxu0 0
    %1229 = vmatpush1.bf16.msra.mxu0 %v1166
    %1230 = vmatprep.subr.bf16.mxu0 0
    %1231 = vmatpush1.bf16.msra.mxu0 %v1167
    %1232 = vmatprep.subr.bf16.mxu0 0
    %1233 = vmatpush1.bf16.msra.mxu0 0
    %1234 = vmatprep.subr.bf16.mxu0 0
    %1235 = vmatpush1.bf16.msra.mxu0 0
    %1236 = vmatprep.subr.bf16.mxu0 0
    %1237 = vmatpush1.bf16.msra.mxu0 0
    %1238 = vmatprep.subr.bf16.mxu0 0
    %1239 = vmatpush1.bf16.msra.mxu0 0
    %1240 = vmatprep.subr.bf16.mxu0 0
    %1241 = vmatpush1.bf16.msra.mxu0 0
    %1242 = vmatprep.subr.bf16.mxu0 0
    %1243 = vmatpush1.bf16.msra.mxu0 0
    %1244 = vmatprep.subr.bf16.mxu0 0
    %1245 = vmatpush1.bf16.msra.mxu0 0
    %1246 = vmatprep.subr.bf16.mxu0 0
    %1247 = vmatpush1.bf16.msra.mxu0 0
    %1248 = vmatprep.mubr.bf16.mxu0 0
    %1249 = vmatmul.mubr.bf16.gmra.mrb[0].mxu0 %v1200
    %v1250 = vpop.f32.mrb[0].mxu0
    %v1251 = vadd.f32 %v283, %v1250
    %v1252 = vpop.f32.mrb[0].mxu0
    %v1253 = vpop.f32.mrb[0].mxu0
    %v1254 = vadd.f32 %v283, %v1253
    %v1255 = vpop.f32.mrb[0].mxu0
    %1256 = vmatprep.mubr.bf16.mxu0 0
    %1257 = vmatmul.mubr.bf16.gmra.mrb[0].mxu0 %v1201
    %v1258 = vpop.f32.mrb[0].mxu0
    %v1259 = vadd.f32 %v283, %v1258
    %v1260 = vpop.f32.mrb[0].mxu0
    %v1261 = vpop.f32.mrb[0].mxu0
    %v1262 = vadd.f32 %v283, %v1261
    %v1263 = vpop.f32.mrb[0].mxu0
    %1264 = vmatprep.mubr.bf16.mxu0 0
    %1265 = vmatmul.mubr.bf16.gmra.mrb[0].mxu0 %v1202
    %v1266 = vpop.f32.mrb[0].mxu0
    %v1267 = vadd.f32 %v283, %v1266
    %v1268 = vpop.f32.mrb[0].mxu0
    %v1269 = vpop.f32.mrb[0].mxu0
    %v1270 = vadd.f32 %v283, %v1269
    %v1271 = vpop.f32.mrb[0].mxu0
    %1272 = vmatprep.mubr.bf16.mxu0 0
    %1273 = vmatmul.mubr.bf16.gmra.mrb[0].mxu0 %v1203
    %v1274 = vpop.f32.mrb[0].mxu0
    %v1275 = vadd.f32 %v283, %v1274
    %v1276 = vpop.f32.mrb[0].mxu0
    %v1277 = vpop.f32.mrb[0].mxu0
    %v1278 = vadd.f32 %v283, %v1277
    %v1279 = vpop.f32.mrb[0].mxu0
    %1280 = vmatprep.mubr.bf16.mxu0 0
    %1281 = vmatmul.mubr.bf16.gmra.mrb[0].mxu0 %v1204
    %v1282 = vpop.f32.mrb[0].mxu0
    %v1283 = vadd.f32 %v283, %v1282
    %v1284 = vpop.f32.mrb[0].mxu0
    %v1285 = vpop.f32.mrb[0].mxu0
    %v1286 = vadd.f32 %v283, %v1285
    %v1287 = vpop.f32.mrb[0].mxu0
    %1288 = vmatprep.mubr.bf16.mxu0 0
    %1289 = vmatmul.mubr.bf16.gmra.mrb[0].mxu0 %v1205
    %v1290 = vpop.f32.mrb[0].mxu0
    %v1291 = vadd.f32 %v283, %v1290
    %v1292 = vpop.f32.mrb[0].mxu0
    %v1293 = vpop.f32.mrb[0].mxu0
    %v1294 = vadd.f32 %v283, %v1293
    %v1295 = vpop.f32.mrb[0].mxu0
    %1296 = vmatprep.mubr.bf16.mxu0 0
    %1297 = vmatmul.mubr.bf16.gmra.mrb[0].mxu0 %v1206
    %v1298 = vpop.f32.mrb[0].mxu0
    %v1299 = vadd.f32 %v283, %v1298
    %v1300 = vpop.f32.mrb[0].mxu0
    %v1301 = vpop.f32.mrb[0].mxu0
    %v1302 = vadd.f32 %v283, %v1301
    %v1303 = vpop.f32.mrb[0].mxu0
    %1304 = vmatprep.mubr.bf16.mxu0 0
    %1305 = vmatmul.mubr.bf16.gmra.mrb[0].mxu0 %v1207
    %v1306 = vpop.f32.mrb[0].mxu0
    %v1307 = vadd.f32 %v283, %v1306
    %v1308 = vpop.f32.mrb[0].mxu0
    %v1309 = vpop.f32.mrb[0].mxu0
    %v1310 = vadd.f32 %v283, %v1309
    %v1311 = vpop.f32.mrb[0].mxu0
    %1312 = vdwg.mxu0
    %v1313 = vmax.f32 %v1251, 0.0
    %v1314 = vmax.f32 %v1254, 0.0
    %v1315 = vmax.f32 %v1259, 0.0
    %v1316 = vmax.f32 %v1262, 0.0
    %v1317 = vmax.f32 %v1267, 0.0
    %v1318 = vmax.f32 %v1270, 0.0
    %v1319 = vmax.f32 %v1275, 0.0
    %v1320 = vmax.f32 %v1278, 0.0
    %v1321 = vmax.f32 %v1283, 0.0
    %v1322 = vmax.f32 %v1286, 0.0
    %v1323 = vmax.f32 %v1291, 0.0
    %v1324 = vmax.f32 %v1294, 0.0
    %v1325 = vmax.f32 %v1299, 0.0
    %v1326 = vmax.f32 %v1302, 0.0
    %v1327 = vmax.f32 %v1307, 0.0
    %v1328 = vmax.f32 %v1310, 0.0
    %v1329 = vpack.c.bf16 %v1314, %v1313
    %v1330 = vpack.c.bf16 %v1316, %v1315
    %v1331 = vpack.c.bf16 %v1318, %v1317
    %v1332 = vpack.c.bf16 %v1320, %v1319
    %v1333 = vpack.c.bf16 %v1322, %v1321
    %v1334 = vpack.c.bf16 %v1324, %v1323
    %v1335 = vpack.c.bf16 %v1326, %v1325
    %v1336 = vpack.c.bf16 %v1328, %v1327
    %v1338 = vsel %vm478, %v1329, 0
    %v1341 = vsel %vm478, %v1330, 0
    %v1344 = vsel %vm478, %v1331, 0
    %v1347 = vsel %vm478, %v1332, 0
    %v1350 = vsel %vm478, %v1333, 0
    %v1353 = vsel %vm478, %v1334, 0
    %v1356 = vsel %vm478, %v1335, 0
    %v1359 = vsel %vm478, %v1336, 0
    %1361 = vmatprep.subr.bf16.mxu0 0
    %1362 = vmatpush1.bf16.msra.mxu0 %v470
    %1363 = vmatprep.subr.bf16.mxu0 0
    %1364 = vmatpush1.bf16.msra.mxu0 %v471
    %1365 = vmatprep.subr.bf16.mxu0 0
    %1366 = vmatpush1.bf16.msra.mxu0 %v472
    %1367 = vmatprep.subr.bf16.mxu0 0
    %1368 = vmatpush1.bf16.msra.mxu0 %v473
    %1369 = vmatprep.subr.bf16.mxu0 0
    %1370 = vmatpush1.bf16.msra.mxu0 0
    %1371 = vmatprep.subr.bf16.mxu0 0
    %1372 = vmatpush1.bf16.msra.mxu0 0
    %1373 = vmatprep.subr.bf16.mxu0 0
    %1374 = vmatpush1.bf16.msra.mxu0 0
    %1375 = vmatprep.subr.bf16.mxu0 0
    %1376 = vmatpush1.bf16.msra.mxu0 0
    %1377 = vmatprep.subr.bf16.mxu0 0
    %1378 = vmatpush1.bf16.msra.mxu0 0
    %1379 = vmatprep.subr.bf16.mxu0 0
    %1380 = vmatpush1.bf16.msra.mxu0 0
    %1381 = vmatprep.subr.bf16.mxu0 0
    %1382 = vmatpush1.bf16.msra.mxu0 0
    %1383 = vmatprep.subr.bf16.mxu0 0
    %1384 = vmatpush1.bf16.msra.mxu0 0
    %1385 = vmatprep.subr.bf16.mxu0 0
    %1386 = vmatpush1.bf16.msra.mxu0 0
    %1387 = vmatprep.subr.bf16.mxu0 0
    %1388 = vmatpush1.bf16.msra.mxu0 0
    %1389 = vmatprep.subr.bf16.mxu0 0
    %1390 = vmatpush1.bf16.msra.mxu0 0
    %1391 = vmatprep.subr.bf16.mxu0 0
    %1392 = vmatpush1.bf16.msra.mxu0 0
    %1393 = vmatprep.mubr.bf16.mxu0 0
    %1394 = vmatmul.mubr.bf16.gmra.mrb[0].mxu0 %v1338
    %v1395 = vpop.f32.mrb[0].mxu0
    %v1396 = vadd.f32 0.0, %v1395
    %v1397 = vpop.f32.mrb[0].mxu0
    %v1398 = vpop.f32.mrb[0].mxu0
    %v1399 = vadd.f32 0.0, %v1398
    %v1400 = vpop.f32.mrb[0].mxu0
    %1401 = vmatprep.mubr.bf16.mxu0 0
    %1402 = vmatmul.mubr.bf16.gmra.mrb[0].mxu0 %v1341
    %v1403 = vpop.f32.mrb[0].mxu0
    %v1404 = vadd.f32 0.0, %v1403
    %v1405 = vpop.f32.mrb[0].mxu0
    %v1406 = vpop.f32.mrb[0].mxu0
    %v1407 = vadd.f32 0.0, %v1406
    %v1408 = vpop.f32.mrb[0].mxu0
    %1409 = vmatprep.mubr.bf16.mxu0 0
    %1410 = vmatmul.mubr.bf16.gmra.mrb[0].mxu0 %v1344
    %v1411 = vpop.f32.mrb[0].mxu0
    %v1412 = vadd.f32 0.0, %v1411
    %v1413 = vpop.f32.mrb[0].mxu0
    %v1414 = vpop.f32.mrb[0].mxu0
    %v1415 = vadd.f32 0.0, %v1414
    %v1416 = vpop.f32.mrb[0].mxu0
    %1417 = vmatprep.mubr.bf16.mxu0 0
    %1418 = vmatmul.mubr.bf16.gmra.mrb[0].mxu0 %v1347
    %v1419 = vpop.f32.mrb[0].mxu0
    %v1420 = vadd.f32 0.0, %v1419
    %v1421 = vpop.f32.mrb[0].mxu0
    %v1422 = vpop.f32.mrb[0].mxu0
    %v1423 = vadd.f32 0.0, %v1422
    %v1424 = vpop.f32.mrb[0].mxu0
    %1425 = vmatprep.mubr.bf16.mxu0 0
    %1426 = vmatmul.mubr.bf16.gmra.mrb[0].mxu0 %v1350
    %v1427 = vpop.f32.mrb[0].mxu0
    %v1428 = vadd.f32 0.0, %v1427
    %v1429 = vpop.f32.mrb[0].mxu0
    %v1430 = vpop.f32.mrb[0].mxu0
    %v1431 = vadd.f32 0.0, %v1430
    %v1432 = vpop.f32.mrb[0].mxu0
    %1433 = vmatprep.mubr.bf16.mxu0 0
    %1434 = vmatmul.mubr.bf16.gmra.mrb[0].mxu0 %v1353
    %v1435 = vpop.f32.mrb[0].mxu0
    %v1436 = vadd.f32 0.0, %v1435
    %v1437 = vpop.f32.mrb[0].mxu0
    %v1438 = vpop.f32.mrb[0].mxu0
    %v1439 = vadd.f32 0.0, %v1438
    %v1440 = vpop.f32.mrb[0].mxu0
    %1441 = vmatprep.mubr.bf16.mxu0 0
    %1442 = vmatmul.mubr.bf16.gmra.mrb[0].mxu0 %v1356
    %v1443 = vpop.f32.mrb[0].mxu0
    %v1444 = vadd.f32 0.0, %v1443
    %v1445 = vpop.f32.mrb[0].mxu0
    %v1446 = vpop.f32.mrb[0].mxu0
    %v1447 = vadd.f32 0.0, %v1446
    %v1448 = vpop.f32.mrb[0].mxu0
    %1449 = vmatprep.mubr.bf16.mxu0 0
    %1450 = vmatmul.mubr.bf16.gmra.mrb[0].mxu0 %v1359
    %v1451 = vpop.f32.mrb[0].mxu0
    %v1452 = vadd.f32 0.0, %v1451
    %v1453 = vpop.f32.mrb[0].mxu0
    %v1454 = vpop.f32.mrb[0].mxu0
    %v1455 = vadd.f32 0.0, %v1454
    %v1456 = vpop.f32.mrb[0].mxu0
    %1457 = vdwg.mxu0
    %v1458 = vpack.c.bf16 %v1399, %v1396
    %v1459 = vpack.c.bf16 %v1407, %v1404
    %v1460 = vpack.c.bf16 %v1415, %v1412
    %v1461 = vpack.c.bf16 %v1423, %v1420
    %v1462 = vpack.c.bf16 %v1431, %v1428
    %v1463 = vpack.c.bf16 %v1439, %v1436
    %v1464 = vpack.c.bf16 %v1447, %v1444
    %v1465 = vpack.c.bf16 %v1455, %v1452
    %1466 = vmatprep.subr.bf16.mxu0 0
    %1467 = vmatpush1.bf16.msra.mxu0 %v1458
    %1468 = vmatprep.subr.bf16.mxu0 0
    %1469 = vmatpush1.bf16.msra.mxu0 %v1459
    %1470 = vmatprep.subr.bf16.mxu0 0
    %1471 = vmatpush1.bf16.msra.mxu0 %v1460
    %1472 = vmatprep.subr.bf16.mxu0 0
    %1473 = vmatpush1.bf16.msra.mxu0 %v1461
    %1474 = vmatprep.subr.bf16.mxu0 0
    %1475 = vmatpush1.bf16.msra.mxu0 %v1462
    %1476 = vmatprep.subr.bf16.mxu0 0
    %1477 = vmatpush1.bf16.msra.mxu0 %v1463
    %1478 = vmatprep.subr.bf16.mxu0 0
    %1479 = vmatpush1.bf16.msra.mxu0 %v1464
    %1480 = vmatprep.subr.bf16.mxu0 0
    %1481 = vmatpush1.bf16.msra.mxu0 %v1465
    %1482 = vmatprep.subr.bf16.mxu0 0
    %1483 = vmatpush1.bf16.msra.mxu0 0
    %1484 = vmatprep.subr.bf16.mxu0 0
    %1485 = vmatpush1.bf16.msra.mxu0 0
    %1486 = vmatprep.subr.bf16.mxu0 0
    %1487 = vmatpush1.bf16.msra.mxu0 0
    %1488 = vmatprep.subr.bf16.mxu0 0
    %1489 = vmatpush1.bf16.msra.mxu0 0
    %1490 = vmatprep.subr.bf16.mxu0 0
    %1491 = vmatpush1.bf16.msra.mxu0 0
    %1492 = vmatprep.subr.bf16.mxu0 0
    %1493 = vmatpush1.bf16.msra.mxu0 0
    %1494 = vmatprep.subr.bf16.mxu0 0
    %1495 = vmatpush1.bf16.msra.mxu0 0
    %1496 = vmatprep.subr.bf16.mxu0 0
    %1497 = vmatpush1.bf16.msra.mxu0 0
    %1498 = vmatprep.mubr.bf16.mxu0 0
    %1499 = vmatmul.mubr.bf16.gmra.mrb[0].mxu0 %v1200
    %v1500 = vpop.f32.mrb[0].mxu0
    %v1501 = vadd.f32 %v612, %v1500
    %v1502 = vpop.f32.mrb[0].mxu0
    %v1503 = vpop.f32.mrb[0].mxu0
    %v1504 = vadd.f32 %v612, %v1503
    %v1505 = vpop.f32.mrb[0].mxu0
    %1506 = vmatprep.mubr.bf16.mxu0 0
    %1507 = vmatmul.mubr.bf16.gmra.mrb[0].mxu0 %v1201
    %v1508 = vpop.f32.mrb[0].mxu0
    %v1509 = vadd.f32 %v612, %v1508
    %v1510 = vpop.f32.mrb[0].mxu0
    %v1511 = vpop.f32.mrb[0].mxu0
    %v1512 = vadd.f32 %v612, %v1511
    %v1513 = vpop.f32.mrb[0].mxu0
    %1514 = vmatprep.mubr.bf16.mxu0 0
    %1515 = vmatmul.mubr.bf16.gmra.mrb[0].mxu0 %v1202
    %v1516 = vpop.f32.mrb[0].mxu0
    %v1517 = vadd.f32 %v612, %v1516
    %v1518 = vpop.f32.mrb[0].mxu0
    %v1519 = vpop.f32.mrb[0].mxu0
    %v1520 = vadd.f32 %v612, %v1519
    %v1521 = vpop.f32.mrb[0].mxu0
    %1522 = vmatprep.mubr.bf16.mxu0 0
    %1523 = vmatmul.mubr.bf16.gmra.mrb[0].mxu0 %v1203
    %v1524 = vpop.f32.mrb[0].mxu0
    %v1525 = vadd.f32 %v612, %v1524
    %v1526 = vpop.f32.mrb[0].mxu0
    %v1527 = vpop.f32.mrb[0].mxu0
    %v1528 = vadd.f32 %v612, %v1527
    %v1529 = vpop.f32.mrb[0].mxu0
    %1530 = vmatprep.mubr.bf16.mxu0 0
    %1531 = vmatmul.mubr.bf16.gmra.mrb[0].mxu0 %v1204
    %v1532 = vpop.f32.mrb[0].mxu0
    %v1533 = vadd.f32 %v612, %v1532
    %v1534 = vpop.f32.mrb[0].mxu0
    %v1535 = vpop.f32.mrb[0].mxu0
    %v1536 = vadd.f32 %v612, %v1535
    %v1537 = vpop.f32.mrb[0].mxu0
    %1538 = vmatprep.mubr.bf16.mxu0 0
    %1539 = vmatmul.mubr.bf16.gmra.mrb[0].mxu0 %v1205
    %v1540 = vpop.f32.mrb[0].mxu0
    %v1541 = vadd.f32 %v612, %v1540
    %v1542 = vpop.f32.mrb[0].mxu0
    %v1543 = vpop.f32.mrb[0].mxu0
    %v1544 = vadd.f32 %v612, %v1543
    %v1545 = vpop.f32.mrb[0].mxu0
    %1546 = vmatprep.mubr.bf16.mxu0 0
    %1547 = vmatmul.mubr.bf16.gmra.mrb[0].mxu0 %v1206
    %v1548 = vpop.f32.mrb[0].mxu0
    %v1549 = vadd.f32 %v612, %v1548
    %v1550 = vpop.f32.mrb[0].mxu0
    %v1551 = vpop.f32.mrb[0].mxu0
    %v1552 = vadd.f32 %v612, %v1551
    %v1553 = vpop.f32.mrb[0].mxu0
    %1554 = vmatprep.mubr.bf16.mxu0 0
    %1555 = vmatmul.mubr.bf16.gmra.mrb[0].mxu0 %v1207
    %v1556 = vpop.f32.mrb[0].mxu0
    %v1557 = vadd.f32 %v612, %v1556
    %v1558 = vpop.f32.mrb[0].mxu0
    %v1559 = vpop.f32.mrb[0].mxu0
    %v1560 = vadd.f32 %v612, %v1559
    %v1561 = vpop.f32.mrb[0].mxu0
    %1562 = vdwg.mxu0
    %v1563 = vmax.f32 %v1501, 0.0
    %v1564 = vmax.f32 %v1504, 0.0
    %v1565 = vmax.f32 %v1509, 0.0
    %v1566 = vmax.f32 %v1512, 0.0
    %v1567 = vmax.f32 %v1517, 0.0
    %v1568 = vmax.f32 %v1520, 0.0
    %v1569 = vmax.f32 %v1525, 0.0
    %v1570 = vmax.f32 %v1528, 0.0
    %v1571 = vmax.f32 %v1533, 0.0
    %v1572 = vmax.f32 %v1536, 0.0
    %v1573 = vmax.f32 %v1541, 0.0
    %v1574 = vmax.f32 %v1544, 0.0
    %v1575 = vmax.f32 %v1549, 0.0
    %v1576 = vmax.f32 %v1552, 0.0
    %v1577 = vmax.f32 %v1557, 0.0
    %v1578 = vmax.f32 %v1560, 0.0
    %s1579 = sadd.s32 %s727, 1
    %s1580 = sld [smem:[#allocation3 + %s1579]]
    %v1581 = vstv %s1580
    %vm1582 = vcmp.lt.s32.totalorder %v46, %v1581
    %vm1583 = vcmp.lt.s32.totalorder %v47, %v1581
    %vm1584 = vcmp.lt.s32.totalorder %v48, %v1581
    %vm1585 = vcmp.lt.s32.totalorder %v49, %v1581
    %vm1586 = vcmp.lt.s32.totalorder %v50, %v1581
    %vm1587 = vcmp.lt.s32.totalorder %v51, %v1581
    %vm1588 = vcmp.lt.s32.totalorder %v52, %v1581
    %vm1589 = vcmp.lt.s32.totalorder %v53, %v1581
    %vm1590 = vcmp.lt.s32.totalorder %v54, %v1581
    %vm1591 = vcmp.lt.s32.totalorder %v55, %v1581
    %vm1592 = vcmp.lt.s32.totalorder %v56, %v1581
    %vm1593 = vcmp.lt.s32.totalorder %v57, %v1581
    %vm1594 = vcmp.lt.s32.totalorder %v58, %v1581
    %vm1595 = vcmp.lt.s32.totalorder %v59, %v1581
    %vm1596 = vcmp.lt.s32.totalorder %v60, %v1581
    %vm1597 = vcmp.lt.s32.totalorder %v61, %v1581
    %v1598 = vsel %vm1582, %v1563, -1e+30
    %v1599 = vsel %vm1583, %v1564, -1e+30
    %v1600 = vsel %vm1584, %v1565, -1e+30
    %v1601 = vsel %vm1585, %v1566, -1e+30
    %v1602 = vsel %vm1586, %v1567, -1e+30
    %v1603 = vsel %vm1587, %v1568, -1e+30
    %v1604 = vsel %vm1588, %v1569, -1e+30
    %v1605 = vsel %vm1589, %v1570, -1e+30
    %v1606 = vsel %vm1590, %v1571, -1e+30
    %v1607 = vsel %vm1591, %v1572, -1e+30
    %v1608 = vsel %vm1592, %v1573, -1e+30
    %v1609 = vsel %vm1593, %v1574, -1e+30
    %v1610 = vsel %vm1594, %v1575, -1e+30
    %v1611 = vsel %vm1595, %v1576, -1e+30
    %v1612 = vsel %vm1596, %v1577, -1e+30
    %v1613 = vsel %vm1597, %v1578, -1e+30
    %v1614 = vsel %vm762, %v1598, -inf
    %v1615 = vsel %vm762, %v1599, -inf
    %v1616 = vsel %vm762, %v1600, -inf
    %v1617 = vsel %vm762, %v1601, -inf
    %v1618 = vsel %vm762, %v1602, -inf
    %v1619 = vmax.f32 %v1614, %v1618
    %v1620 = vsel %vm762, %v1603, -inf
    %v1621 = vmax.f32 %v1615, %v1620
    %v1622 = vsel %vm762, %v1604, -inf
    %v1623 = vmax.f32 %v1616, %v1622
    %v1624 = vsel %vm762, %v1605, -inf
    %v1625 = vmax.f32 %v1617, %v1624
    %v1626 = vsel %vm762, %v1606, -inf
    %v1627 = vmax.f32 %v1619, %v1626
    %v1628 = vsel %vm762, %v1607, -inf
    %v1629 = vmax.f32 %v1621, %v1628
    %v1630 = vsel %vm762, %v1608, -inf
    %v1631 = vmax.f32 %v1623, %v1630
    %v1632 = vsel %vm762, %v1609, -inf
    %v1633 = vmax.f32 %v1625, %v1632
    %v1634 = vsel %vm762, %v1610, -inf
    %v1635 = vmax.f32 %v1627, %v1634
    %v1636 = vsel %vm762, %v1611, -inf
    %v1637 = vmax.f32 %v1629, %v1636
    %v1638 = vsel %vm762, %v1612, -inf
    %v1639 = vmax.f32 %v1631, %v1638
    %v1640 = vsel %vm762, %v1613, -inf
    %v1641 = vmax.f32 %v1633, %v1640
    %v1642 = vmax.f32 %v1635, %v1637
    %v1643 = vmax.f32 %v1639, %v1641
    %v1644 = vmax.f32 %v1642, %v1643
    %v1645 = vrot.slane %v1644, 4
    %v1646 = vmax.f32 %v1644, %v1645
    %v1647 = vrot.slane %v1646, 2
    %v1648 = vmax.f32 %v1646, %v1647
    %v1649 = vrot.slane %v1648, 1
    %v1650 = vmax.f32 %v1648, %v1649
    %vm1651 = vcmp.ge.f32.partialorder %v1598, %v1650
    %vm1652 = vcmp.ge.f32.partialorder %v1599, %v1650
    %vm1653 = vcmp.ge.f32.partialorder %v1600, %v1650
    %vm1654 = vcmp.ge.f32.partialorder %v1601, %v1650
    %vm1655 = vcmp.ge.f32.partialorder %v1602, %v1650
    %vm1656 = vcmp.ge.f32.partialorder %v1603, %v1650
    %vm1657 = vcmp.ge.f32.partialorder %v1604, %v1650
    %vm1658 = vcmp.ge.f32.partialorder %v1605, %v1650
    %vm1659 = vcmp.ge.f32.partialorder %v1606, %v1650
    %vm1660 = vcmp.ge.f32.partialorder %v1607, %v1650
    %vm1661 = vcmp.ge.f32.partialorder %v1608, %v1650
    %vm1662 = vcmp.ge.f32.partialorder %v1609, %v1650
    %vm1663 = vcmp.ge.f32.partialorder %v1610, %v1650
    %vm1664 = vcmp.ge.f32.partialorder %v1611, %v1650
    %vm1665 = vcmp.ge.f32.partialorder %v1612, %v1650
    %vm1666 = vcmp.ge.f32.partialorder %v1613, %v1650
    %v1667 = vsel %vm1651, %v46, 128
    %v1668 = vsel %vm1652, %v47, 128
    %v1669 = vsel %vm1653, %v48, 128
    %v1670 = vsel %vm1654, %v49, 128
    %v1671 = vsel %vm1655, %v50, 128
    %v1672 = vsel %vm1656, %v51, 128
    %v1673 = vsel %vm1657, %v52, 128
    %v1674 = vsel %vm1658, %v53, 128
    %v1675 = vsel %vm1659, %v54, 128
    %v1676 = vsel %vm1660, %v55, 128
    %v1677 = vsel %vm1661, %v56, 128
    %v1678 = vsel %vm1662, %v57, 128
    %v1679 = vsel %vm1663, %v58, 128
    %v1680 = vsel %vm1664, %v59, 128
    %v1681 = vsel %vm1665, %v60, 128
    %v1682 = vsel %vm1666, %v61, 128
    %v1683 = vsel %vm762, %v1667, 2147483647
    %v1684 = vsel %vm762, %v1668, 2147483647
    %v1685 = vsel %vm762, %v1669, 2147483647
    %v1686 = vsel %vm762, %v1670, 2147483647
    %v1687 = vsel %vm762, %v1671, 2147483647
    %vm1688 = vcmp.lt.s32.totalorder %v1683, %v1687
    %v1689 = vsel %vm1688, %v1683, %v1687
    %v1690 = vsel %vm762, %v1672, 2147483647
    %vm1691 = vcmp.lt.s32.totalorder %v1684, %v1690
    %v1692 = vsel %vm1691, %v1684, %v1690
    %v1693 = vsel %vm762, %v1673, 2147483647
    %vm1694 = vcmp.lt.s32.totalorder %v1685, %v1693
    %v1695 = vsel %vm1694, %v1685, %v1693
    %v1696 = vsel %vm762, %v1674, 2147483647
    %vm1697 = vcmp.lt.s32.totalorder %v1686, %v1696
    %v1698 = vsel %vm1697, %v1686, %v1696
    %v1699 = vsel %vm762, %v1675, 2147483647
    %vm1700 = vcmp.lt.s32.totalorder %v1689, %v1699
    %v1701 = vsel %vm1700, %v1689, %v1699
    %v1702 = vsel %vm762, %v1676, 2147483647
    %vm1703 = vcmp.lt.s32.totalorder %v1692, %v1702
    %v1704 = vsel %vm1703, %v1692, %v1702
    %v1705 = vsel %vm762, %v1677, 2147483647
    %vm1706 = vcmp.lt.s32.totalorder %v1695, %v1705
    %v1707 = vsel %vm1706, %v1695, %v1705
    %v1708 = vsel %vm762, %v1678, 2147483647
    %vm1709 = vcmp.lt.s32.totalorder %v1698, %v1708
    %v1710 = vsel %vm1709, %v1698, %v1708
    %v1711 = vsel %vm762, %v1679, 2147483647
    %vm1712 = vcmp.lt.s32.totalorder %v1701, %v1711
    %v1713 = vsel %vm1712, %v1701, %v1711
    %v1714 = vsel %vm762, %v1680, 2147483647
    %vm1715 = vcmp.lt.s32.totalorder %v1704, %v1714
    %v1716 = vsel %vm1715, %v1704, %v1714
    %v1717 = vsel %vm762, %v1681, 2147483647
    %vm1718 = vcmp.lt.s32.totalorder %v1707, %v1717
    %v1719 = vsel %vm1718, %v1707, %v1717
    %v1720 = vsel %vm762, %v1682, 2147483647
    %vm1721 = vcmp.lt.s32.totalorder %v1710, %v1720
    %v1722 = vsel %vm1721, %v1710, %v1720
    %vm1723 = vcmp.lt.s32.totalorder %v1713, %v1716
    %v1724 = vsel %vm1723, %v1713, %v1716
    %vm1725 = vcmp.lt.s32.totalorder %v1719, %v1722
    %v1726 = vsel %vm1725, %v1719, %v1722
    %vm1727 = vcmp.lt.s32.totalorder %v1724, %v1726
    %v1728 = vsel %vm1727, %v1724, %v1726
    %v1729 = vrot.slane %v1728, 4
    %vm1730 = vcmp.lt.s32.totalorder %v1728, %v1729
    %v1731 = vsel %vm1730, %v1728, %v1729
    %v1732 = vrot.slane %v1731, 2
    %vm1733 = vcmp.lt.s32.totalorder %v1731, %v1732
    %v1734 = vsel %vm1733, %v1731, %v1732
    %v1735 = vrot.slane %v1734, 1
    %vm1736 = vcmp.lt.s32.totalorder %v1734, %v1735
    %v1737 = vsel %vm1736, %v1734, %v1735
    %1738 = vset.pattern.permute.xlu0 63
    %1739 = vperm.xlu0 %1738, %v1737
    %v1740 = vpop.permute.xlu0 %1739
    %vm1741 = vcmp.eq.s32.totalorder %v63, %v1740
    %v1742 = vsel %vm1741, 1, 0
    %v1743 = vcvt.s32.f32 %v1742
    %1744 = vmatprep.subr.mxu0 0.0
    %1745 = vmatpush1.msra.mxu0 %v1563
    %1746 = vmatprep.subr.mxu0 0.0
    %1747 = vmatpush1.msra.mxu0 %v1564
    %1748 = vmatprep.subr.mxu0 0.0
    %1749 = vmatpush1.msra.mxu0 %v1565
    %1750 = vmatprep.subr.mxu0 0.0
    %1751 = vmatpush1.msra.mxu0 %v1566
    %1752 = vmatprep.subr.mxu0 0.0
    %1753 = vmatpush1.msra.mxu0 %v1567
    %1754 = vmatprep.subr.mxu0 0.0
    %1755 = vmatpush1.msra.mxu0 %v1568
    %1756 = vmatprep.subr.mxu0 0.0
    %1757 = vmatpush1.msra.mxu0 %v1569
    %1758 = vmatprep.subr.mxu0 0.0
    %1759 = vmatpush1.msra.mxu0 %v1570
    %1760 = vmatprep.subr.mxu0 0.0
    %1761 = vmatpush1.msra.mxu0 %v1571
    %1762 = vmatprep.subr.mxu0 0.0
    %1763 = vmatpush1.msra.mxu0 %v1572
    %1764 = vmatprep.subr.mxu0 0.0
    %1765 = vmatpush1.msra.mxu0 %v1573
    %1766 = vmatprep.subr.mxu0 0.0
    %1767 = vmatpush1.msra.mxu0 %v1574
    %1768 = vmatprep.subr.mxu0 0.0
    %1769 = vmatpush1.msra.mxu0 %v1575
    %1770 = vmatprep.subr.mxu0 0.0
    %1771 = vmatpush1.msra.mxu0 %v1576
    %1772 = vmatprep.subr.mxu0 0.0
    %1773 = vmatpush1.msra.mxu0 %v1577
    %1774 = vmatprep.subr.mxu0 0.0
    %1775 = vmatpush1.msra.mxu0 %v1578
    %1776 = vmatprep.subr.mxu0 0.0
    %1777 = vmatpush1.msra.mxu0 0.0
    %1778 = vmatprep.subr.mxu0 0.0
    %1779 = vmatpush1.msra.mxu0 0.0
    %1780 = vmatprep.subr.mxu0 0.0
    %1781 = vmatpush1.msra.mxu0 0.0
    %1782 = vmatprep.subr.mxu0 0.0
    %1783 = vmatpush1.msra.mxu0 0.0
    %1784 = vmatprep.subr.mxu0 0.0
    %1785 = vmatpush1.msra.mxu0 0.0
    %1786 = vmatprep.subr.mxu0 0.0
    %1787 = vmatpush1.msra.mxu0 0.0
    %1788 = vmatprep.subr.mxu0 0.0
    %1789 = vmatpush1.msra.mxu0 0.0
    %1790 = vmatprep.subr.mxu0 0.0
    %1791 = vmatpush1.msra.mxu0 0.0
    %1792 = vmatprep.subr.mxu0 0.0
    %1793 = vmatpush1.msra.mxu0 0.0
    %1794 = vmatprep.subr.mxu0 0.0
    %1795 = vmatpush1.msra.mxu0 0.0
    %1796 = vmatprep.subr.mxu0 0.0
    %1797 = vmatpush1.msra.mxu0 0.0
    %1798 = vmatprep.subr.mxu0 0.0
    %1799 = vmatpush1.msra.mxu0 0.0
    %1800 = vmatprep.subr.mxu0 0.0
    %1801 = vmatpush1.msra.mxu0 0.0
    %1802 = vmatprep.subr.mxu0 0.0
    %1803 = vmatpush1.msra.mxu0 0.0
    %1804 = vmatprep.subr.mxu0 0.0
    %1805 = vmatpush1.msra.mxu0 0.0
    %1806 = vmatprep.subr.mxu0 0.0
    %1807 = vmatpush1.msra.mxu0 0.0
    %1808 = vmatprep.mubr.f32.mxu0 0.0
    %1809 = vmatmul.mubr.f32.gmra.mrb[0].mxu0 %v1743
    %v1810 = vpop.f32.mrb[0].mxu0
    %v1811 = vadd.f32 0.0, %v1810
    %v1812 = vpop.f32.mrb[0].mxu0
    %1813 = vdwg.mxu0
    %1814 = vst.msk [vmem:[#allocation4 + $0x1] sm:$0x1] %vm963, %v1811
    %s1815 = scalar_lea.vmem %s1, 128
    %v1816 = vld [vmem:[%s1815] sm:$0xf]
    %v1817 = vld [vmem:[%s1815 + $0x4] sm:$0xf]
    %v1818 = vld [vmem:[%s1815 + $0x8] sm:$0xf]
    %v1819 = vld [vmem:[%s1815 + $0xc] sm:$0xf]
    %v1820 = vld [vmem:[%s1815 + $0x10] sm:$0xf]
    %v1821 = vld [vmem:[%s1815 + $0x14] sm:$0xf]
    %v1822 = vld [vmem:[%s1815 + $0x18] sm:$0xf]
    %v1823 = vld [vmem:[%s1815 + $0x1c] sm:$0xf]
    %v1824 = vld [vmem:[%s1815 + $0x20] sm:$0xf]
    %v1825 = vld [vmem:[%s1815 + $0x24] sm:$0xf]
    %v1826 = vld [vmem:[%s1815 + $0x28] sm:$0xf]
    %v1827 = vld [vmem:[%s1815 + $0x2c] sm:$0xf]
    %v1828 = vld [vmem:[%s1815 + $0x30] sm:$0xf]
    %v1829 = vld [vmem:[%s1815 + $0x34] sm:$0xf]
    %v1830 = vld [vmem:[%s1815 + $0x38] sm:$0xf]
    %v1831 = vld [vmem:[%s1815 + $0x3c] sm:$0xf]
    %s1832 = scalar_lea.vmem %s2, 128
    %v1833 = vld [vmem:[%s1832] sm:$0xf]
    %v1834 = vld [vmem:[%s1832 + $0x4] sm:$0xf]
    %v1835 = vld [vmem:[%s1832 + $0x8] sm:$0xf]
    %v1836 = vld [vmem:[%s1832 + $0xc] sm:$0xf]
    %v1837 = vld [vmem:[%s1832 + $0x10] sm:$0xf]
    %v1838 = vld [vmem:[%s1832 + $0x14] sm:$0xf]
    %v1839 = vld [vmem:[%s1832 + $0x18] sm:$0xf]
    %v1840 = vld [vmem:[%s1832 + $0x1c] sm:$0xf]
    %v1841 = vld [vmem:[%s1832 + $0x20] sm:$0xf]
    %v1842 = vld [vmem:[%s1832 + $0x24] sm:$0xf]
    %v1843 = vld [vmem:[%s1832 + $0x28] sm:$0xf]
    %v1844 = vld [vmem:[%s1832 + $0x2c] sm:$0xf]
    %v1845 = vld [vmem:[%s1832 + $0x30] sm:$0xf]
    %v1846 = vld [vmem:[%s1832 + $0x34] sm:$0xf]
    %v1847 = vld [vmem:[%s1832 + $0x38] sm:$0xf]
    %v1848 = vld [vmem:[%s1832 + $0x3c] sm:$0xf]
    %v1865 = vunpack.c.l.b16 %v1833
    %v1866 = vunpack.c.l.b16 %v1834
    %v1867 = vunpack.c.l.b16 %v1835
    %v1868 = vunpack.c.l.b16 %v1836
    %v1869 = vunpack.c.l.b16 %v1837
    %v1870 = vunpack.c.l.b16 %v1838
    %v1871 = vunpack.c.l.b16 %v1839
    %v1872 = vunpack.c.l.b16 %v1840
    %v1873 = vunpack.c.l.b16 %v1841
    %v1874 = vunpack.c.l.b16 %v1842
    %v1875 = vunpack.c.l.b16 %v1843
    %v1876 = vunpack.c.l.b16 %v1844
    %v1877 = vunpack.c.l.b16 %v1845
    %v1878 = vunpack.c.l.b16 %v1846
    %v1879 = vunpack.c.l.b16 %v1847
    %v1880 = vunpack.c.l.b16 %v1848
    %v1881 = vpack.c.b16 %v1866, %v1865
    %v1882 = vpack.c.b16 %v1868, %v1867
    %v1883 = vpack.c.b16 %v1870, %v1869
    %v1884 = vpack.c.b16 %v1872, %v1871
    %v1885 = vpack.c.b16 %v1874, %v1873
    %v1886 = vpack.c.b16 %v1876, %v1875
    %v1887 = vpack.c.b16 %v1878, %v1877
    %v1888 = vpack.c.b16 %v1880, %v1879
    %v1890 = vsel %vm145, %v1881, 0
    %v1893 = vsel %vm145, %v1882, 0
    %v1896 = vsel %vm145, %v1883, 0
    %v1899 = vsel %vm145, %v1884, 0
    %v1902 = vsel %vm145, %v1885, 0
    %v1905 = vsel %vm145, %v1886, 0
    %v1908 = vsel %vm145, %v1887, 0
    %v1911 = vsel %vm145, %v1888, 0
    %1913 = vmatprep.subr.bf16.mxu0 0
    %1914 = vmatpush1.bf16.msra.mxu0 %v142
    %1915 = vmatprep.subr.bf16.mxu0 0
    %1916 = vmatpush1.bf16.msra.mxu0 %v172
    %1917 = vmatprep.subr.bf16.mxu0 0
    %1918 = vmatpush1.bf16.msra.mxu0 0
    %1919 = vmatprep.subr.bf16.mxu0 0
    %1920 = vmatpush1.bf16.msra.mxu0 0
    %1921 = vmatprep.subr.bf16.mxu0 0
    %1922 = vmatpush1.bf16.msra.mxu0 0
    %1923 = vmatprep.subr.bf16.mxu0 0
    %1924 = vmatpush1.bf16.msra.mxu0 0
    %1925 = vmatprep.subr.bf16.mxu0 0
    %1926 = vmatpush1.bf16.msra.mxu0 0
    %1927 = vmatprep.subr.bf16.mxu0 0
    %1928 = vmatpush1.bf16.msra.mxu0 0
    %1929 = vmatprep.subr.bf16.mxu0 0
    %1930 = vmatpush1.bf16.msra.mxu0 0
    %1931 = vmatprep.subr.bf16.mxu0 0
    %1932 = vmatpush1.bf16.msra.mxu0 0
    %1933 = vmatprep.subr.bf16.mxu0 0
    %1934 = vmatpush1.bf16.msra.mxu0 0
    %1935 = vmatprep.subr.bf16.mxu0 0
    %1936 = vmatpush1.bf16.msra.mxu0 0
    %1937 = vmatprep.subr.bf16.mxu0 0
    %1938 = vmatpush1.bf16.msra.mxu0 0
    %1939 = vmatprep.subr.bf16.mxu0 0
    %1940 = vmatpush1.bf16.msra.mxu0 0
    %1941 = vmatprep.subr.bf16.mxu0 0
    %1942 = vmatpush1.bf16.msra.mxu0 0
    %1943 = vmatprep.subr.bf16.mxu0 0
    %1944 = vmatpush1.bf16.msra.mxu0 0
    %1945 = vmatprep.mubr.bf16.mxu0 0
    %1946 = vmatmul.mubr.bf16.gmra.mrb[0].mxu0 %v1890
    %v1947 = vpop.f32.mrb[0].mxu0
    %v1948 = vadd.f32 0.0, %v1947
    %v1949 = vpop.f32.mrb[0].mxu0
    %v1950 = vpop.f32.mrb[0].mxu0
    %v1951 = vadd.f32 0.0, %v1950
    %v1952 = vpop.f32.mrb[0].mxu0
    %1953 = vmatprep.mubr.bf16.mxu0 0
    %1954 = vmatmul.mubr.bf16.gmra.mrb[0].mxu0 %v1893
    %v1955 = vpop.f32.mrb[0].mxu0
    %v1956 = vadd.f32 0.0, %v1955
    %v1957 = vpop.f32.mrb[0].mxu0
    %v1958 = vpop.f32.mrb[0].mxu0
    %v1959 = vadd.f32 0.0, %v1958
    %v1960 = vpop.f32.mrb[0].mxu0
    %1961 = vmatprep.mubr.bf16.mxu0 0
    %1962 = vmatmul.mubr.bf16.gmra.mrb[0].mxu0 %v1896
    %v1963 = vpop.f32.mrb[0].mxu0
    %v1964 = vadd.f32 0.0, %v1963
    %v1965 = vpop.f32.mrb[0].mxu0
    %v1966 = vpop.f32.mrb[0].mxu0
    %v1967 = vadd.f32 0.0, %v1966
    %v1968 = vpop.f32.mrb[0].mxu0
    %1969 = vmatprep.mubr.bf16.mxu0 0
    %1970 = vmatmul.mubr.bf16.gmra.mrb[0].mxu0 %v1899
    %v1971 = vpop.f32.mrb[0].mxu0
    %v1972 = vadd.f32 0.0, %v1971
    %v1973 = vpop.f32.mrb[0].mxu0
    %v1974 = vpop.f32.mrb[0].mxu0
    %v1975 = vadd.f32 0.0, %v1974
    %v1976 = vpop.f32.mrb[0].mxu0
    %1977 = vmatprep.mubr.bf16.mxu0 0
    %1978 = vmatmul.mubr.bf16.gmra.mrb[0].mxu0 %v1902
    %v1979 = vpop.f32.mrb[0].mxu0
    %v1980 = vadd.f32 0.0, %v1979
    %v1981 = vpop.f32.mrb[0].mxu0
    %v1982 = vpop.f32.mrb[0].mxu0
    %v1983 = vadd.f32 0.0, %v1982
    %v1984 = vpop.f32.mrb[0].mxu0
    %1985 = vmatprep.mubr.bf16.mxu0 0
    %1986 = vmatmul.mubr.bf16.gmra.mrb[0].mxu0 %v1905
    %v1987 = vpop.f32.mrb[0].mxu0
    %v1988 = vadd.f32 0.0, %v1987
    %v1989 = vpop.f32.mrb[0].mxu0
    %v1990 = vpop.f32.mrb[0].mxu0
    %v1991 = vadd.f32 0.0, %v1990
    %v1992 = vpop.f32.mrb[0].mxu0
    %1993 = vmatprep.mubr.bf16.mxu0 0
    %1994 = vmatmul.mubr.bf16.gmra.mrb[0].mxu0 %v1908
    %v1995 = vpop.f32.mrb[0].mxu0
    %v1996 = vadd.f32 0.0, %v1995
    %v1997 = vpop.f32.mrb[0].mxu0
    %v1998 = vpop.f32.mrb[0].mxu0
    %v1999 = vadd.f32 0.0, %v1998
    %v2000 = vpop.f32.mrb[0].mxu0
    %2001 = vmatprep.mubr.bf16.mxu0 0
    %2002 = vmatmul.mubr.bf16.gmra.mrb[0].mxu0 %v1911
    %v2003 = vpop.f32.mrb[0].mxu0
    %v2004 = vadd.f32 0.0, %v2003
    %v2005 = vpop.f32.mrb[0].mxu0
    %v2006 = vpop.f32.mrb[0].mxu0
    %v2007 = vadd.f32 0.0, %v2006
    %v2008 = vpop.f32.mrb[0].mxu0
    %2009 = vdwg.mxu0
    %v2010 = vpack.c.bf16 %v1951, %v1948
    %v2011 = vpack.c.bf16 %v1959, %v1956
    %v2012 = vpack.c.bf16 %v1967, %v1964
    %v2013 = vpack.c.bf16 %v1975, %v1972
    %v2014 = vpack.c.bf16 %v1983, %v1980
    %v2015 = vpack.c.bf16 %v1991, %v1988
    %v2016 = vpack.c.bf16 %v1999, %v1996
    %v2017 = vpack.c.bf16 %v2007, %v2004
    %v2034 = vunpack.c.l.b16 %v1816
    %v2035 = vunpack.c.l.b16 %v1817
    %v2036 = vunpack.c.l.b16 %v1818
    %v2037 = vunpack.c.l.b16 %v1819
    %v2038 = vunpack.c.l.b16 %v1820
    %v2039 = vunpack.c.l.b16 %v1821
    %v2040 = vunpack.c.l.b16 %v1822
    %v2041 = vunpack.c.l.b16 %v1823
    %v2042 = vunpack.c.l.b16 %v1824
    %v2043 = vunpack.c.l.b16 %v1825
    %v2044 = vunpack.c.l.b16 %v1826
    %v2045 = vunpack.c.l.b16 %v1827
    %v2046 = vunpack.c.l.b16 %v1828
    %v2047 = vunpack.c.l.b16 %v1829
    %v2048 = vunpack.c.l.b16 %v1830
    %v2049 = vunpack.c.l.b16 %v1831
    %v2050 = vpack.c.b16 %v2035, %v2034
    %v2051 = vpack.c.b16 %v2037, %v2036
    %v2052 = vpack.c.b16 %v2039, %v2038
    %v2053 = vpack.c.b16 %v2041, %v2040
    %v2054 = vpack.c.b16 %v2043, %v2042
    %v2055 = vpack.c.b16 %v2045, %v2044
    %v2056 = vpack.c.b16 %v2047, %v2046
    %v2057 = vpack.c.b16 %v2049, %v2048
    %2066 = vmatprep.subr.bf16.mxu0 0
    %2067 = vmatpush1.bf16.msra.mxu0 %v2010
    %2068 = vmatprep.subr.bf16.mxu0 0
    %2069 = vmatpush1.bf16.msra.mxu0 %v2011
    %2070 = vmatprep.subr.bf16.mxu0 0
    %2071 = vmatpush1.bf16.msra.mxu0 %v2012
    %2072 = vmatprep.subr.bf16.mxu0 0
    %2073 = vmatpush1.bf16.msra.mxu0 %v2013
    %2074 = vmatprep.subr.bf16.mxu0 0
    %2075 = vmatpush1.bf16.msra.mxu0 %v2014
    %2076 = vmatprep.subr.bf16.mxu0 0
    %2077 = vmatpush1.bf16.msra.mxu0 %v2015
    %2078 = vmatprep.subr.bf16.mxu0 0
    %2079 = vmatpush1.bf16.msra.mxu0 %v2016
    %2080 = vmatprep.subr.bf16.mxu0 0
    %2081 = vmatpush1.bf16.msra.mxu0 %v2017
    %2082 = vmatprep.subr.bf16.mxu0 0
    %2083 = vmatpush1.bf16.msra.mxu0 0
    %2084 = vmatprep.subr.bf16.mxu0 0
    %2085 = vmatpush1.bf16.msra.mxu0 0
    %2086 = vmatprep.subr.bf16.mxu0 0
    %2087 = vmatpush1.bf16.msra.mxu0 0
    %2088 = vmatprep.subr.bf16.mxu0 0
    %2089 = vmatpush1.bf16.msra.mxu0 0
    %2090 = vmatprep.subr.bf16.mxu0 0
    %2091 = vmatpush1.bf16.msra.mxu0 0
    %2092 = vmatprep.subr.bf16.mxu0 0
    %2093 = vmatpush1.bf16.msra.mxu0 0
    %2094 = vmatprep.subr.bf16.mxu0 0
    %2095 = vmatpush1.bf16.msra.mxu0 0
    %2096 = vmatprep.subr.bf16.mxu0 0
    %2097 = vmatpush1.bf16.msra.mxu0 0
    %2098 = vmatprep.mubr.bf16.mxu0 0
    %2099 = vmatmul.mubr.bf16.gmra.mrb[0].mxu0 %v2050
    %v2100 = vpop.f32.mrb[0].mxu0
    %v2101 = vadd.f32 %v283, %v2100
    %v2102 = vpop.f32.mrb[0].mxu0
    %v2103 = vpop.f32.mrb[0].mxu0
    %v2104 = vadd.f32 %v283, %v2103
    %v2105 = vpop.f32.mrb[0].mxu0
    %2106 = vmatprep.mubr.bf16.mxu0 0
    %2107 = vmatmul.mubr.bf16.gmra.mrb[0].mxu0 %v2051
    %v2108 = vpop.f32.mrb[0].mxu0
    %v2109 = vadd.f32 %v283, %v2108
    %v2110 = vpop.f32.mrb[0].mxu0
    %v2111 = vpop.f32.mrb[0].mxu0
    %v2112 = vadd.f32 %v283, %v2111
    %v2113 = vpop.f32.mrb[0].mxu0
    %2114 = vmatprep.mubr.bf16.mxu0 0
    %2115 = vmatmul.mubr.bf16.gmra.mrb[0].mxu0 %v2052
    %v2116 = vpop.f32.mrb[0].mxu0
    %v2117 = vadd.f32 %v283, %v2116
    %v2118 = vpop.f32.mrb[0].mxu0
    %v2119 = vpop.f32.mrb[0].mxu0
    %v2120 = vadd.f32 %v283, %v2119
    %v2121 = vpop.f32.mrb[0].mxu0
    %2122 = vmatprep.mubr.bf16.mxu0 0
    %2123 = vmatmul.mubr.bf16.gmra.mrb[0].mxu0 %v2053
    %v2124 = vpop.f32.mrb[0].mxu0
    %v2125 = vadd.f32 %v283, %v2124
    %v2126 = vpop.f32.mrb[0].mxu0
    %v2127 = vpop.f32.mrb[0].mxu0
    %v2128 = vadd.f32 %v283, %v2127
    %v2129 = vpop.f32.mrb[0].mxu0
    %2130 = vmatprep.mubr.bf16.mxu0 0
    %2131 = vmatmul.mubr.bf16.gmra.mrb[0].mxu0 %v2054
    %v2132 = vpop.f32.mrb[0].mxu0
    %v2133 = vadd.f32 %v283, %v2132
    %v2134 = vpop.f32.mrb[0].mxu0
    %v2135 = vpop.f32.mrb[0].mxu0
    %v2136 = vadd.f32 %v283, %v2135
    %v2137 = vpop.f32.mrb[0].mxu0
    %2138 = vmatprep.mubr.bf16.mxu0 0
    %2139 = vmatmul.mubr.bf16.gmra.mrb[0].mxu0 %v2055
    %v2140 = vpop.f32.mrb[0].mxu0
    %v2141 = vadd.f32 %v283, %v2140
    %v2142 = vpop.f32.mrb[0].mxu0
    %v2143 = vpop.f32.mrb[0].mxu0
    %v2144 = vadd.f32 %v283, %v2143
    %v2145 = vpop.f32.mrb[0].mxu0
    %2146 = vmatprep.mubr.bf16.mxu0 0
    %2147 = vmatmul.mubr.bf16.gmra.mrb[0].mxu0 %v2056
    %v2148 = vpop.f32.mrb[0].mxu0
    %v2149 = vadd.f32 %v283, %v2148
    %v2150 = vpop.f32.mrb[0].mxu0
    %v2151 = vpop.f32.mrb[0].mxu0
    %v2152 = vadd.f32 %v283, %v2151
    %v2153 = vpop.f32.mrb[0].mxu0
    %2154 = vmatprep.mubr.bf16.mxu0 0
    %2155 = vmatmul.mubr.bf16.gmra.mrb[0].mxu0 %v2057
    %v2156 = vpop.f32.mrb[0].mxu0
    %v2157 = vadd.f32 %v283, %v2156
    %v2158 = vpop.f32.mrb[0].mxu0
    %v2159 = vpop.f32.mrb[0].mxu0
    %v2160 = vadd.f32 %v283, %v2159
    %v2161 = vpop.f32.mrb[0].mxu0
    %2162 = vdwg.mxu0
    %v2163 = vmax.f32 %v2101, 0.0
    %v2164 = vmax.f32 %v2104, 0.0
    %v2165 = vmax.f32 %v2109, 0.0
    %v2166 = vmax.f32 %v2112, 0.0
    %v2167 = vmax.f32 %v2117, 0.0
    %v2168 = vmax.f32 %v2120, 0.0
    %v2169 = vmax.f32 %v2125, 0.0
    %v2170 = vmax.f32 %v2128, 0.0
    %v2171 = vmax.f32 %v2133, 0.0
    %v2172 = vmax.f32 %v2136, 0.0
    %v2173 = vmax.f32 %v2141, 0.0
    %v2174 = vmax.f32 %v2144, 0.0
    %v2175 = vmax.f32 %v2149, 0.0
    %v2176 = vmax.f32 %v2152, 0.0
    %v2177 = vmax.f32 %v2157, 0.0
    %v2178 = vmax.f32 %v2160, 0.0
    %v2179 = vpack.c.bf16 %v2164, %v2163
    %v2180 = vpack.c.bf16 %v2166, %v2165
    %v2181 = vpack.c.bf16 %v2168, %v2167
    %v2182 = vpack.c.bf16 %v2170, %v2169
    %v2183 = vpack.c.bf16 %v2172, %v2171
    %v2184 = vpack.c.bf16 %v2174, %v2173
    %v2185 = vpack.c.bf16 %v2176, %v2175
    %v2186 = vpack.c.bf16 %v2178, %v2177
    %v2188 = vsel %vm478, %v2179, 0
    %v2191 = vsel %vm478, %v2180, 0
    %v2194 = vsel %vm478, %v2181, 0
    %v2197 = vsel %vm478, %v2182, 0
    %v2200 = vsel %vm478, %v2183, 0
    %v2203 = vsel %vm478, %v2184, 0
    %v2206 = vsel %vm478, %v2185, 0
    %v2209 = vsel %vm478, %v2186, 0
    %2211 = vmatprep.subr.bf16.mxu0 0
    %2212 = vmatpush1.bf16.msra.mxu0 %v470
    %2213 = vmatprep.subr.bf16.mxu0 0
    %2214 = vmatpush1.bf16.msra.mxu0 %v471
    %2215 = vmatprep.subr.bf16.mxu0 0
    %2216 = vmatpush1.bf16.msra.mxu0 %v472
    %2217 = vmatprep.subr.bf16.mxu0 0
    %2218 = vmatpush1.bf16.msra.mxu0 %v473
    %2219 = vmatprep.subr.bf16.mxu0 0
    %2220 = vmatpush1.bf16.msra.mxu0 0
    %2221 = vmatprep.subr.bf16.mxu0 0
    %2222 = vmatpush1.bf16.msra.mxu0 0
    %2223 = vmatprep.subr.bf16.mxu0 0
    %2224 = vmatpush1.bf16.msra.mxu0 0
    %2225 = vmatprep.subr.bf16.mxu0 0
    %2226 = vmatpush1.bf16.msra.mxu0 0
    %2227 = vmatprep.subr.bf16.mxu0 0
    %2228 = vmatpush1.bf16.msra.mxu0 0
    %2229 = vmatprep.subr.bf16.mxu0 0
    %2230 = vmatpush1.bf16.msra.mxu0 0
    %2231 = vmatprep.subr.bf16.mxu0 0
    %2232 = vmatpush1.bf16.msra.mxu0 0
    %2233 = vmatprep.subr.bf16.mxu0 0
    %2234 = vmatpush1.bf16.msra.mxu0 0
    %2235 = vmatprep.subr.bf16.mxu0 0
    %2236 = vmatpush1.bf16.msra.mxu0 0
    %2237 = vmatprep.subr.bf16.mxu0 0
    %2238 = vmatpush1.bf16.msra.mxu0 0
    %2239 = vmatprep.subr.bf16.mxu0 0
    %2240 = vmatpush1.bf16.msra.mxu0 0
    %2241 = vmatprep.subr.bf16.mxu0 0
    %2242 = vmatpush1.bf16.msra.mxu0 0
    %2243 = vmatprep.mubr.bf16.mxu0 0
    %2244 = vmatmul.mubr.bf16.gmra.mrb[0].mxu0 %v2188
    %v2245 = vpop.f32.mrb[0].mxu0
    %v2246 = vadd.f32 0.0, %v2245
    %v2247 = vpop.f32.mrb[0].mxu0
    %v2248 = vpop.f32.mrb[0].mxu0
    %v2249 = vadd.f32 0.0, %v2248
    %v2250 = vpop.f32.mrb[0].mxu0
    %2251 = vmatprep.mubr.bf16.mxu0 0
    %2252 = vmatmul.mubr.bf16.gmra.mrb[0].mxu0 %v2191
    %v2253 = vpop.f32.mrb[0].mxu0
    %v2254 = vadd.f32 0.0, %v2253
    %v2255 = vpop.f32.mrb[0].mxu0
    %v2256 = vpop.f32.mrb[0].mxu0
    %v2257 = vadd.f32 0.0, %v2256
    %v2258 = vpop.f32.mrb[0].mxu0
    %2259 = vmatprep.mubr.bf16.mxu0 0
    %2260 = vmatmul.mubr.bf16.gmra.mrb[0].mxu0 %v2194
    %v2261 = vpop.f32.mrb[0].mxu0
    %v2262 = vadd.f32 0.0, %v2261
    %v2263 = vpop.f32.mrb[0].mxu0
    %v2264 = vpop.f32.mrb[0].mxu0
    %v2265 = vadd.f32 0.0, %v2264
    %v2266 = vpop.f32.mrb[0].mxu0
    %2267 = vmatprep.mubr.bf16.mxu0 0
    %2268 = vmatmul.mubr.bf16.gmra.mrb[0].mxu0 %v2197
    %v2269 = vpop.f32.mrb[0].mxu0
    %v2270 = vadd.f32 0.0, %v2269
    %v2271 = vpop.f32.mrb[0].mxu0
    %v2272 = vpop.f32.mrb[0].mxu0
    %v2273 = vadd.f32 0.0, %v2272
    %v2274 = vpop.f32.mrb[0].mxu0
    %2275 = vmatprep.mubr.bf16.mxu0 0
    %2276 = vmatmul.mubr.bf16.gmra.mrb[0].mxu0 %v2200
    %v2277 = vpop.f32.mrb[0].mxu0
    %v2278 = vadd.f32 0.0, %v2277
    %v2279 = vpop.f32.mrb[0].mxu0
    %v2280 = vpop.f32.mrb[0].mxu0
    %v2281 = vadd.f32 0.0, %v2280
    %v2282 = vpop.f32.mrb[0].mxu0
    %2283 = vmatprep.mubr.bf16.mxu0 0
    %2284 = vmatmul.mubr.bf16.gmra.mrb[0].mxu0 %v2203
    %v2285 = vpop.f32.mrb[0].mxu0
    %v2286 = vadd.f32 0.0, %v2285
    %v2287 = vpop.f32.mrb[0].mxu0
    %v2288 = vpop.f32.mrb[0].mxu0
    %v2289 = vadd.f32 0.0, %v2288
    %v2290 = vpop.f32.mrb[0].mxu0
    %2291 = vmatprep.mubr.bf16.mxu0 0
    %2292 = vmatmul.mubr.bf16.gmra.mrb[0].mxu0 %v2206
    %v2293 = vpop.f32.mrb[0].mxu0
    %v2294 = vadd.f32 0.0, %v2293
    %v2295 = vpop.f32.mrb[0].mxu0
    %v2296 = vpop.f32.mrb[0].mxu0
    %v2297 = vadd.f32 0.0, %v2296
    %v2298 = vpop.f32.mrb[0].mxu0
    %2299 = vmatprep.mubr.bf16.mxu0 0
    %2300 = vmatmul.mubr.bf16.gmra.mrb[0].mxu0 %v2209
    %v2301 = vpop.f32.mrb[0].mxu0
    %v2302 = vadd.f32 0.0, %v2301
    %v2303 = vpop.f32.mrb[0].mxu0
    %v2304 = vpop.f32.mrb[0].mxu0
    %v2305 = vadd.f32 0.0, %v2304
    %v2306 = vpop.f32.mrb[0].mxu0
    %2307 = vdwg.mxu0
    %v2308 = vpack.c.bf16 %v2249, %v2246
    %v2309 = vpack.c.bf16 %v2257, %v2254
    %v2310 = vpack.c.bf16 %v2265, %v2262
    %v2311 = vpack.c.bf16 %v2273, %v2270
    %v2312 = vpack.c.bf16 %v2281, %v2278
    %v2313 = vpack.c.bf16 %v2289, %v2286
    %v2314 = vpack.c.bf16 %v2297, %v2294
    %v2315 = vpack.c.bf16 %v2305, %v2302
    %2316 = vmatprep.subr.bf16.mxu0 0
    %2317 = vmatpush1.bf16.msra.mxu0 %v2308
    %2318 = vmatprep.subr.bf16.mxu0 0
    %2319 = vmatpush1.bf16.msra.mxu0 %v2309
    %2320 = vmatprep.subr.bf16.mxu0 0
    %2321 = vmatpush1.bf16.msra.mxu0 %v2310
    %2322 = vmatprep.subr.bf16.mxu0 0
    %2323 = vmatpush1.bf16.msra.mxu0 %v2311
    %2324 = vmatprep.subr.bf16.mxu0 0
    %2325 = vmatpush1.bf16.msra.mxu0 %v2312
    %2326 = vmatprep.subr.bf16.mxu0 0
    %2327 = vmatpush1.bf16.msra.mxu0 %v2313
    %2328 = vmatprep.subr.bf16.mxu0 0
    %2329 = vmatpush1.bf16.msra.mxu0 %v2314
    %2330 = vmatprep.subr.bf16.mxu0 0
    %2331 = vmatpush1.bf16.msra.mxu0 %v2315
    %2332 = vmatprep.subr.bf16.mxu0 0
    %2333 = vmatpush1.bf16.msra.mxu0 0
    %2334 = vmatprep.subr.bf16.mxu0 0
    %2335 = vmatpush1.bf16.msra.mxu0 0
    %2336 = vmatprep.subr.bf16.mxu0 0
    %2337 = vmatpush1.bf16.msra.mxu0 0
    %2338 = vmatprep.subr.bf16.mxu0 0
    %2339 = vmatpush1.bf16.msra.mxu0 0
    %2340 = vmatprep.subr.bf16.mxu0 0
    %2341 = vmatpush1.bf16.msra.mxu0 0
    %2342 = vmatprep.subr.bf16.mxu0 0
    %2343 = vmatpush1.bf16.msra.mxu0 0
    %2344 = vmatprep.subr.bf16.mxu0 0
    %2345 = vmatpush1.bf16.msra.mxu0 0
    %2346 = vmatprep.subr.bf16.mxu0 0
    %2347 = vmatpush1.bf16.msra.mxu0 0
    %2348 = vmatprep.mubr.bf16.mxu0 0
    %2349 = vmatmul.mubr.bf16.gmra.mrb[0].mxu0 %v2050
    %v2350 = vpop.f32.mrb[0].mxu0
    %v2351 = vadd.f32 %v612, %v2350
    %v2352 = vpop.f32.mrb[0].mxu0
    %v2353 = vpop.f32.mrb[0].mxu0
    %v2354 = vadd.f32 %v612, %v2353
    %v2355 = vpop.f32.mrb[0].mxu0
    %2356 = vmatprep.mubr.bf16.mxu0 0
    %2357 = vmatmul.mubr.bf16.gmra.mrb[0].mxu0 %v2051
    %v2358 = vpop.f32.mrb[0].mxu0
    %v2359 = vadd.f32 %v612, %v2358
    %v2360 = vpop.f32.mrb[0].mxu0
    %v2361 = vpop.f32.mrb[0].mxu0
    %v2362 = vadd.f32 %v612, %v2361
    %v2363 = vpop.f32.mrb[0].mxu0
    %2364 = vmatprep.mubr.bf16.mxu0 0
    %2365 = vmatmul.mubr.bf16.gmra.mrb[0].mxu0 %v2052
    %v2366 = vpop.f32.mrb[0].mxu0
    %v2367 = vadd.f32 %v612, %v2366
    %v2368 = vpop.f32.mrb[0].mxu0
    %v2369 = vpop.f32.mrb[0].mxu0
    %v2370 = vadd.f32 %v612, %v2369
    %v2371 = vpop.f32.mrb[0].mxu0
    %2372 = vmatprep.mubr.bf16.mxu0 0
    %2373 = vmatmul.mubr.bf16.gmra.mrb[0].mxu0 %v2053
    %v2374 = vpop.f32.mrb[0].mxu0
    %v2375 = vadd.f32 %v612, %v2374
    %v2376 = vpop.f32.mrb[0].mxu0
    %v2377 = vpop.f32.mrb[0].mxu0
    %v2378 = vadd.f32 %v612, %v2377
    %v2379 = vpop.f32.mrb[0].mxu0
    %2380 = vmatprep.mubr.bf16.mxu0 0
    %2381 = vmatmul.mubr.bf16.gmra.mrb[0].mxu0 %v2054
    %v2382 = vpop.f32.mrb[0].mxu0
    %v2383 = vadd.f32 %v612, %v2382
    %v2384 = vpop.f32.mrb[0].mxu0
    %v2385 = vpop.f32.mrb[0].mxu0
    %v2386 = vadd.f32 %v612, %v2385
    %v2387 = vpop.f32.mrb[0].mxu0
    %2388 = vmatprep.mubr.bf16.mxu0 0
    %2389 = vmatmul.mubr.bf16.gmra.mrb[0].mxu0 %v2055
    %v2390 = vpop.f32.mrb[0].mxu0
    %v2391 = vadd.f32 %v612, %v2390
    %v2392 = vpop.f32.mrb[0].mxu0
    %v2393 = vpop.f32.mrb[0].mxu0
    %v2394 = vadd.f32 %v612, %v2393
    %v2395 = vpop.f32.mrb[0].mxu0
    %2396 = vmatprep.mubr.bf16.mxu0 0
    %2397 = vmatmul.mubr.bf16.gmra.mrb[0].mxu0 %v2056
    %v2398 = vpop.f32.mrb[0].mxu0
    %v2399 = vadd.f32 %v612, %v2398
    %v2400 = vpop.f32.mrb[0].mxu0
    %v2401 = vpop.f32.mrb[0].mxu0
    %v2402 = vadd.f32 %v612, %v2401
    %v2403 = vpop.f32.mrb[0].mxu0
    %2404 = vmatprep.mubr.bf16.mxu0 0
    %2405 = vmatmul.mubr.bf16.gmra.mrb[0].mxu0 %v2057
    %v2406 = vpop.f32.mrb[0].mxu0
    %v2407 = vadd.f32 %v612, %v2406
    %v2408 = vpop.f32.mrb[0].mxu0
    %v2409 = vpop.f32.mrb[0].mxu0
    %v2410 = vadd.f32 %v612, %v2409
    %v2411 = vpop.f32.mrb[0].mxu0
    %2412 = vdwg.mxu0
    %v2413 = vmax.f32 %v2351, 0.0
    %v2414 = vmax.f32 %v2354, 0.0
    %v2415 = vmax.f32 %v2359, 0.0
    %v2416 = vmax.f32 %v2362, 0.0
    %v2417 = vmax.f32 %v2367, 0.0
    %v2418 = vmax.f32 %v2370, 0.0
    %v2419 = vmax.f32 %v2375, 0.0
    %v2420 = vmax.f32 %v2378, 0.0
    %v2421 = vmax.f32 %v2383, 0.0
    %v2422 = vmax.f32 %v2386, 0.0
    %v2423 = vmax.f32 %v2391, 0.0
    %v2424 = vmax.f32 %v2394, 0.0
    %v2425 = vmax.f32 %v2399, 0.0
    %v2426 = vmax.f32 %v2402, 0.0
    %v2427 = vmax.f32 %v2407, 0.0
    %v2428 = vmax.f32 %v2410, 0.0
    %s2429 = sadd.s32 %s727, 2
    %s2430 = sld [smem:[#allocation3 + %s2429]]
    %v2431 = vstv %s2430
    %vm2432 = vcmp.lt.s32.totalorder %v46, %v2431
    %vm2433 = vcmp.lt.s32.totalorder %v47, %v2431
    %vm2434 = vcmp.lt.s32.totalorder %v48, %v2431
    %vm2435 = vcmp.lt.s32.totalorder %v49, %v2431
    %vm2436 = vcmp.lt.s32.totalorder %v50, %v2431
    %vm2437 = vcmp.lt.s32.totalorder %v51, %v2431
    %vm2438 = vcmp.lt.s32.totalorder %v52, %v2431
    %vm2439 = vcmp.lt.s32.totalorder %v53, %v2431
    %vm2440 = vcmp.lt.s32.totalorder %v54, %v2431
    %vm2441 = vcmp.lt.s32.totalorder %v55, %v2431
    %vm2442 = vcmp.lt.s32.totalorder %v56, %v2431
    %vm2443 = vcmp.lt.s32.totalorder %v57, %v2431
    %vm2444 = vcmp.lt.s32.totalorder %v58, %v2431
    %vm2445 = vcmp.lt.s32.totalorder %v59, %v2431
    %vm2446 = vcmp.lt.s32.totalorder %v60, %v2431
    %vm2447 = vcmp.lt.s32.totalorder %v61, %v2431
    %v2448 = vsel %vm2432, %v2413, -1e+30
    %v2449 = vsel %vm2433, %v2414, -1e+30
    %v2450 = vsel %vm2434, %v2415, -1e+30
    %v2451 = vsel %vm2435, %v2416, -1e+30
    %v2452 = vsel %vm2436, %v2417, -1e+30
    %v2453 = vsel %vm2437, %v2418, -1e+30
    %v2454 = vsel %vm2438, %v2419, -1e+30
    %v2455 = vsel %vm2439, %v2420, -1e+30
    %v2456 = vsel %vm2440, %v2421, -1e+30
    %v2457 = vsel %vm2441, %v2422, -1e+30
    %v2458 = vsel %vm2442, %v2423, -1e+30
    %v2459 = vsel %vm2443, %v2424, -1e+30
    %v2460 = vsel %vm2444, %v2425, -1e+30
    %v2461 = vsel %vm2445, %v2426, -1e+30
    %v2462 = vsel %vm2446, %v2427, -1e+30
    %v2463 = vsel %vm2447, %v2428, -1e+30
    %v2464 = vsel %vm762, %v2448, -inf
    %v2465 = vsel %vm762, %v2449, -inf
    %v2466 = vsel %vm762, %v2450, -inf
    %v2467 = vsel %vm762, %v2451, -inf
    %v2468 = vsel %vm762, %v2452, -inf
    %v2469 = vmax.f32 %v2464, %v2468
    %v2470 = vsel %vm762, %v2453, -inf
    %v2471 = vmax.f32 %v2465, %v2470
    %v2472 = vsel %vm762, %v2454, -inf
    %v2473 = vmax.f32 %v2466, %v2472
    %v2474 = vsel %vm762, %v2455, -inf
    %v2475 = vmax.f32 %v2467, %v2474
    %v2476 = vsel %vm762, %v2456, -inf
    %v2477 = vmax.f32 %v2469, %v2476
    %v2478 = vsel %vm762, %v2457, -inf
    %v2479 = vmax.f32 %v2471, %v2478
    %v2480 = vsel %vm762, %v2458, -inf
    %v2481 = vmax.f32 %v2473, %v2480
    %v2482 = vsel %vm762, %v2459, -inf
    %v2483 = vmax.f32 %v2475, %v2482
    %v2484 = vsel %vm762, %v2460, -inf
    %v2485 = vmax.f32 %v2477, %v2484
    %v2486 = vsel %vm762, %v2461, -inf
    %v2487 = vmax.f32 %v2479, %v2486
    %v2488 = vsel %vm762, %v2462, -inf
    %v2489 = vmax.f32 %v2481, %v2488
    %v2490 = vsel %vm762, %v2463, -inf
    %v2491 = vmax.f32 %v2483, %v2490
    %v2492 = vmax.f32 %v2485, %v2487
    %v2493 = vmax.f32 %v2489, %v2491
    %v2494 = vmax.f32 %v2492, %v2493
    %v2495 = vrot.slane %v2494, 4
    %v2496 = vmax.f32 %v2494, %v2495
    %v2497 = vrot.slane %v2496, 2
    %v2498 = vmax.f32 %v2496, %v2497
    %v2499 = vrot.slane %v2498, 1
    %v2500 = vmax.f32 %v2498, %v2499
    %vm2501 = vcmp.ge.f32.partialorder %v2448, %v2500
    %vm2502 = vcmp.ge.f32.partialorder %v2449, %v2500
    %vm2503 = vcmp.ge.f32.partialorder %v2450, %v2500
    %vm2504 = vcmp.ge.f32.partialorder %v2451, %v2500
    %vm2505 = vcmp.ge.f32.partialorder %v2452, %v2500
    %vm2506 = vcmp.ge.f32.partialorder %v2453, %v2500
    %vm2507 = vcmp.ge.f32.partialorder %v2454, %v2500
    %vm2508 = vcmp.ge.f32.partialorder %v2455, %v2500
    %vm2509 = vcmp.ge.f32.partialorder %v2456, %v2500
    %vm2510 = vcmp.ge.f32.partialorder %v2457, %v2500
    %vm2511 = vcmp.ge.f32.partialorder %v2458, %v2500
    %vm2512 = vcmp.ge.f32.partialorder %v2459, %v2500
    %vm2513 = vcmp.ge.f32.partialorder %v2460, %v2500
    %vm2514 = vcmp.ge.f32.partialorder %v2461, %v2500
    %vm2515 = vcmp.ge.f32.partialorder %v2462, %v2500
    %vm2516 = vcmp.ge.f32.partialorder %v2463, %v2500
    %v2517 = vsel %vm2501, %v46, 128
    %v2518 = vsel %vm2502, %v47, 128
    %v2519 = vsel %vm2503, %v48, 128
    %v2520 = vsel %vm2504, %v49, 128
    %v2521 = vsel %vm2505, %v50, 128
    %v2522 = vsel %vm2506, %v51, 128
    %v2523 = vsel %vm2507, %v52, 128
    %v2524 = vsel %vm2508, %v53, 128
    %v2525 = vsel %vm2509, %v54, 128
    %v2526 = vsel %vm2510, %v55, 128
    %v2527 = vsel %vm2511, %v56, 128
    %v2528 = vsel %vm2512, %v57, 128
    %v2529 = vsel %vm2513, %v58, 128
    %v2530 = vsel %vm2514, %v59, 128
    %v2531 = vsel %vm2515, %v60, 128
    %v2532 = vsel %vm2516, %v61, 128
    %v2533 = vsel %vm762, %v2517, 2147483647
    %v2534 = vsel %vm762, %v2518, 2147483647
    %v2535 = vsel %vm762, %v2519, 2147483647
    %v2536 = vsel %vm762, %v2520, 2147483647
    %v2537 = vsel %vm762, %v2521, 2147483647
    %vm2538 = vcmp.lt.s32.totalorder %v2533, %v2537
    %v2539 = vsel %vm2538, %v2533, %v2537
    %v2540 = vsel %vm762, %v2522, 2147483647
    %vm2541 = vcmp.lt.s32.totalorder %v2534, %v2540
    %v2542 = vsel %vm2541, %v2534, %v2540
    %v2543 = vsel %vm762, %v2523, 2147483647
    %vm2544 = vcmp.lt.s32.totalorder %v2535, %v2543
    %v2545 = vsel %vm2544, %v2535, %v2543
    %v2546 = vsel %vm762, %v2524, 2147483647
    %vm2547 = vcmp.lt.s32.totalorder %v2536, %v2546
    %v2548 = vsel %vm2547, %v2536, %v2546
    %v2549 = vsel %vm762, %v2525, 2147483647
    %vm2550 = vcmp.lt.s32.totalorder %v2539, %v2549
    %v2551 = vsel %vm2550, %v2539, %v2549
    %v2552 = vsel %vm762, %v2526, 2147483647
    %vm2553 = vcmp.lt.s32.totalorder %v2542, %v2552
    %v2554 = vsel %vm2553, %v2542, %v2552
    %v2555 = vsel %vm762, %v2527, 2147483647
    %vm2556 = vcmp.lt.s32.totalorder %v2545, %v2555
    %v2557 = vsel %vm2556, %v2545, %v2555
    %v2558 = vsel %vm762, %v2528, 2147483647
    %vm2559 = vcmp.lt.s32.totalorder %v2548, %v2558
    %v2560 = vsel %vm2559, %v2548, %v2558
    %v2561 = vsel %vm762, %v2529, 2147483647
    %vm2562 = vcmp.lt.s32.totalorder %v2551, %v2561
    %v2563 = vsel %vm2562, %v2551, %v2561
    %v2564 = vsel %vm762, %v2530, 2147483647
    %vm2565 = vcmp.lt.s32.totalorder %v2554, %v2564
    %v2566 = vsel %vm2565, %v2554, %v2564
    %v2567 = vsel %vm762, %v2531, 2147483647
    %vm2568 = vcmp.lt.s32.totalorder %v2557, %v2567
    %v2569 = vsel %vm2568, %v2557, %v2567
    %v2570 = vsel %vm762, %v2532, 2147483647
    %vm2571 = vcmp.lt.s32.totalorder %v2560, %v2570
    %v2572 = vsel %vm2571, %v2560, %v2570
    %vm2573 = vcmp.lt.s32.totalorder %v2563, %v2566
    %v2574 = vsel %vm2573, %v2563, %v2566
    %vm2575 = vcmp.lt.s32.totalorder %v2569, %v2572
    %v2576 = vsel %vm2575, %v2569, %v2572
    %vm2577 = vcmp.lt.s32.totalorder %v2574, %v2576
    %v2578 = vsel %vm2577, %v2574, %v2576
    %v2579 = vrot.slane %v2578, 4
    %vm2580 = vcmp.lt.s32.totalorder %v2578, %v2579
    %v2581 = vsel %vm2580, %v2578, %v2579
    %v2582 = vrot.slane %v2581, 2
    %vm2583 = vcmp.lt.s32.totalorder %v2581, %v2582
    %v2584 = vsel %vm2583, %v2581, %v2582
    %v2585 = vrot.slane %v2584, 1
    %vm2586 = vcmp.lt.s32.totalorder %v2584, %v2585
    %v2587 = vsel %vm2586, %v2584, %v2585
    %2588 = vset.pattern.permute.xlu0 63
    %2589 = vperm.xlu0 %2588, %v2587
    %v2590 = vpop.permute.xlu0 %2589
    %vm2591 = vcmp.eq.s32.totalorder %v63, %v2590
    %v2592 = vsel %vm2591, 1, 0
    %v2593 = vcvt.s32.f32 %v2592
    %2594 = vmatprep.subr.mxu0 0.0
    %2595 = vmatpush1.msra.mxu0 %v2413
    %2596 = vmatprep.subr.mxu0 0.0
    %2597 = vmatpush1.msra.mxu0 %v2414
    %2598 = vmatprep.subr.mxu0 0.0
    %2599 = vmatpush1.msra.mxu0 %v2415
    %2600 = vmatprep.subr.mxu0 0.0
    %2601 = vmatpush1.msra.mxu0 %v2416
    %2602 = vmatprep.subr.mxu0 0.0
    %2603 = vmatpush1.msra.mxu0 %v2417
    %2604 = vmatprep.subr.mxu0 0.0
    %2605 = vmatpush1.msra.mxu0 %v2418
    %2606 = vmatprep.subr.mxu0 0.0
    %2607 = vmatpush1.msra.mxu0 %v2419
    %2608 = vmatprep.subr.mxu0 0.0
    %2609 = vmatpush1.msra.mxu0 %v2420
    %2610 = vmatprep.subr.mxu0 0.0
    %2611 = vmatpush1.msra.mxu0 %v2421
    %2612 = vmatprep.subr.mxu0 0.0
    %2613 = vmatpush1.msra.mxu0 %v2422
    %2614 = vmatprep.subr.mxu0 0.0
    %2615 = vmatpush1.msra.mxu0 %v2423
    %2616 = vmatprep.subr.mxu0 0.0
    %2617 = vmatpush1.msra.mxu0 %v2424
    %2618 = vmatprep.subr.mxu0 0.0
    %2619 = vmatpush1.msra.mxu0 %v2425
    %2620 = vmatprep.subr.mxu0 0.0
    %2621 = vmatpush1.msra.mxu0 %v2426
    %2622 = vmatprep.subr.mxu0 0.0
    %2623 = vmatpush1.msra.mxu0 %v2427
    %2624 = vmatprep.subr.mxu0 0.0
    %2625 = vmatpush1.msra.mxu0 %v2428
    %2626 = vmatprep.subr.mxu0 0.0
    %2627 = vmatpush1.msra.mxu0 0.0
    %2628 = vmatprep.subr.mxu0 0.0
    %2629 = vmatpush1.msra.mxu0 0.0
    %2630 = vmatprep.subr.mxu0 0.0
    %2631 = vmatpush1.msra.mxu0 0.0
    %2632 = vmatprep.subr.mxu0 0.0
    %2633 = vmatpush1.msra.mxu0 0.0
    %2634 = vmatprep.subr.mxu0 0.0
    %2635 = vmatpush1.msra.mxu0 0.0
    %2636 = vmatprep.subr.mxu0 0.0
    %2637 = vmatpush1.msra.mxu0 0.0
    %2638 = vmatprep.subr.mxu0 0.0
    %2639 = vmatpush1.msra.mxu0 0.0
    %2640 = vmatprep.subr.mxu0 0.0
    %2641 = vmatpush1.msra.mxu0 0.0
    %2642 = vmatprep.subr.mxu0 0.0
    %2643 = vmatpush1.msra.mxu0 0.0
    %2644 = vmatprep.subr.mxu0 0.0
    %2645 = vmatpush1.msra.mxu0 0.0
    %2646 = vmatprep.subr.mxu0 0.0
    %2647 = vmatpush1.msra.mxu0 0.0
    %2648 = vmatprep.subr.mxu0 0.0
    %2649 = vmatpush1.msra.mxu0 0.0
    %2650 = vmatprep.subr.mxu0 0.0
    %2651 = vmatpush1.msra.mxu0 0.0
    %2652 = vmatprep.subr.mxu0 0.0
    %2653 = vmatpush1.msra.mxu0 0.0
    %2654 = vmatprep.subr.mxu0 0.0
    %2655 = vmatpush1.msra.mxu0 0.0
    %2656 = vmatprep.subr.mxu0 0.0
    %2657 = vmatpush1.msra.mxu0 0.0
    %2658 = vmatprep.mubr.f32.mxu0 0.0
    %2659 = vmatmul.mubr.f32.gmra.mrb[0].mxu0 %v2593
    %v2660 = vpop.f32.mrb[0].mxu0
    %v2661 = vadd.f32 0.0, %v2660
    %v2662 = vpop.f32.mrb[0].mxu0
    %2663 = vdwg.mxu0
    %2664 = vst.msk [vmem:[#allocation4 + $0x2] sm:$0x1] %vm963, %v2661
    %s2665 = scalar_lea.vmem %s1, 192
    %v2666 = vld [vmem:[%s2665] sm:$0xf]
    %v2667 = vld [vmem:[%s2665 + $0x4] sm:$0xf]
    %v2668 = vld [vmem:[%s2665 + $0x8] sm:$0xf]
    %v2669 = vld [vmem:[%s2665 + $0xc] sm:$0xf]
    %v2670 = vld [vmem:[%s2665 + $0x10] sm:$0xf]
    %v2671 = vld [vmem:[%s2665 + $0x14] sm:$0xf]
    %v2672 = vld [vmem:[%s2665 + $0x18] sm:$0xf]
    %v2673 = vld [vmem:[%s2665 + $0x1c] sm:$0xf]
    %v2674 = vld [vmem:[%s2665 + $0x20] sm:$0xf]
    %v2675 = vld [vmem:[%s2665 + $0x24] sm:$0xf]
    %v2676 = vld [vmem:[%s2665 + $0x28] sm:$0xf]
    %v2677 = vld [vmem:[%s2665 + $0x2c] sm:$0xf]
    %v2678 = vld [vmem:[%s2665 + $0x30] sm:$0xf]
    %v2679 = vld [vmem:[%s2665 + $0x34] sm:$0xf]
    %v2680 = vld [vmem:[%s2665 + $0x38] sm:$0xf]
    %v2681 = vld [vmem:[%s2665 + $0x3c] sm:$0xf]
    %s2682 = scalar_lea.vmem %s2, 192
    %v2683 = vld [vmem:[%s2682] sm:$0xf]
    %v2684 = vld [vmem:[%s2682 + $0x4] sm:$0xf]
    %v2685 = vld [vmem:[%s2682 + $0x8] sm:$0xf]
    %v2686 = vld [vmem:[%s2682 + $0xc] sm:$0xf]
    %v2687 = vld [vmem:[%s2682 + $0x10] sm:$0xf]
    %v2688 = vld [vmem:[%s2682 + $0x14] sm:$0xf]
    %v2689 = vld [vmem:[%s2682 + $0x18] sm:$0xf]
    %v2690 = vld [vmem:[%s2682 + $0x1c] sm:$0xf]
    %v2691 = vld [vmem:[%s2682 + $0x20] sm:$0xf]
    %v2692 = vld [vmem:[%s2682 + $0x24] sm:$0xf]
    %v2693 = vld [vmem:[%s2682 + $0x28] sm:$0xf]
    %v2694 = vld [vmem:[%s2682 + $0x2c] sm:$0xf]
    %v2695 = vld [vmem:[%s2682 + $0x30] sm:$0xf]
    %v2696 = vld [vmem:[%s2682 + $0x34] sm:$0xf]
    %v2697 = vld [vmem:[%s2682 + $0x38] sm:$0xf]
    %v2698 = vld [vmem:[%s2682 + $0x3c] sm:$0xf]
    %v2715 = vunpack.c.l.b16 %v2683
    %v2716 = vunpack.c.l.b16 %v2684
    %v2717 = vunpack.c.l.b16 %v2685
    %v2718 = vunpack.c.l.b16 %v2686
    %v2719 = vunpack.c.l.b16 %v2687
    %v2720 = vunpack.c.l.b16 %v2688
    %v2721 = vunpack.c.l.b16 %v2689
    %v2722 = vunpack.c.l.b16 %v2690
    %v2723 = vunpack.c.l.b16 %v2691
    %v2724 = vunpack.c.l.b16 %v2692
    %v2725 = vunpack.c.l.b16 %v2693
    %v2726 = vunpack.c.l.b16 %v2694
    %v2727 = vunpack.c.l.b16 %v2695
    %v2728 = vunpack.c.l.b16 %v2696
    %v2729 = vunpack.c.l.b16 %v2697
    %v2730 = vunpack.c.l.b16 %v2698
    %v2731 = vpack.c.b16 %v2716, %v2715
    %v2732 = vpack.c.b16 %v2718, %v2717
    %v2733 = vpack.c.b16 %v2720, %v2719
    %v2734 = vpack.c.b16 %v2722, %v2721
    %v2735 = vpack.c.b16 %v2724, %v2723
    %v2736 = vpack.c.b16 %v2726, %v2725
    %v2737 = vpack.c.b16 %v2728, %v2727
    %v2738 = vpack.c.b16 %v2730, %v2729
    %v2740 = vsel %vm145, %v2731, 0
    %v2743 = vsel %vm145, %v2732, 0
    %v2746 = vsel %vm145, %v2733, 0
    %v2749 = vsel %vm145, %v2734, 0
    %v2752 = vsel %vm145, %v2735, 0
    %v2755 = vsel %vm145, %v2736, 0
    %v2758 = vsel %vm145, %v2737, 0
    %v2761 = vsel %vm145, %v2738, 0
    %2763 = vmatprep.subr.bf16.mxu0 0
    %2764 = vmatpush1.bf16.msra.mxu0 %v142
    %2765 = vmatprep.subr.bf16.mxu0 0
    %2766 = vmatpush1.bf16.msra.mxu0 %v172
    %2767 = vmatprep.subr.bf16.mxu0 0
    %2768 = vmatpush1.bf16.msra.mxu0 0
    %2769 = vmatprep.subr.bf16.mxu0 0
    %2770 = vmatpush1.bf16.msra.mxu0 0
    %2771 = vmatprep.subr.bf16.mxu0 0
    %2772 = vmatpush1.bf16.msra.mxu0 0
    %2773 = vmatprep.subr.bf16.mxu0 0
    %2774 = vmatpush1.bf16.msra.mxu0 0
    %2775 = vmatprep.subr.bf16.mxu0 0
    %2776 = vmatpush1.bf16.msra.mxu0 0
    %2777 = vmatprep.subr.bf16.mxu0 0
    %2778 = vmatpush1.bf16.msra.mxu0 0
    %2779 = vmatprep.subr.bf16.mxu0 0
    %2780 = vmatpush1.bf16.msra.mxu0 0
    %2781 = vmatprep.subr.bf16.mxu0 0
    %2782 = vmatpush1.bf16.msra.mxu0 0
    %2783 = vmatprep.subr.bf16.mxu0 0
    %2784 = vmatpush1.bf16.msra.mxu0 0
    %2785 = vmatprep.subr.bf16.mxu0 0
    %2786 = vmatpush1.bf16.msra.mxu0 0
    %2787 = vmatprep.subr.bf16.mxu0 0
    %2788 = vmatpush1.bf16.msra.mxu0 0
    %2789 = vmatprep.subr.bf16.mxu0 0
    %2790 = vmatpush1.bf16.msra.mxu0 0
    %2791 = vmatprep.subr.bf16.mxu0 0
    %2792 = vmatpush1.bf16.msra.mxu0 0
    %2793 = vmatprep.subr.bf16.mxu0 0
    %2794 = vmatpush1.bf16.msra.mxu0 0
    %2795 = vmatprep.mubr.bf16.mxu0 0
    %2796 = vmatmul.mubr.bf16.gmra.mrb[0].mxu0 %v2740
    %v2797 = vpop.f32.mrb[0].mxu0
    %v2798 = vadd.f32 0.0, %v2797
    %v2799 = vpop.f32.mrb[0].mxu0
    %v2800 = vpop.f32.mrb[0].mxu0
    %v2801 = vadd.f32 0.0, %v2800
    %v2802 = vpop.f32.mrb[0].mxu0
    %2803 = vmatprep.mubr.bf16.mxu0 0
    %2804 = vmatmul.mubr.bf16.gmra.mrb[0].mxu0 %v2743
    %v2805 = vpop.f32.mrb[0].mxu0
    %v2806 = vadd.f32 0.0, %v2805
    %v2807 = vpop.f32.mrb[0].mxu0
    %v2808 = vpop.f32.mrb[0].mxu0
    %v2809 = vadd.f32 0.0, %v2808
    %v2810 = vpop.f32.mrb[0].mxu0
    %2811 = vmatprep.mubr.bf16.mxu0 0
    %2812 = vmatmul.mubr.bf16.gmra.mrb[0].mxu0 %v2746
    %v2813 = vpop.f32.mrb[0].mxu0
    %v2814 = vadd.f32 0.0, %v2813
    %v2815 = vpop.f32.mrb[0].mxu0
    %v2816 = vpop.f32.mrb[0].mxu0
    %v2817 = vadd.f32 0.0, %v2816
    %v2818 = vpop.f32.mrb[0].mxu0
    %2819 = vmatprep.mubr.bf16.mxu0 0
    %2820 = vmatmul.mubr.bf16.gmra.mrb[0].mxu0 %v2749
    %v2821 = vpop.f32.mrb[0].mxu0
    %v2822 = vadd.f32 0.0, %v2821
    %v2823 = vpop.f32.mrb[0].mxu0
    %v2824 = vpop.f32.mrb[0].mxu0
    %v2825 = vadd.f32 0.0, %v2824
    %v2826 = vpop.f32.mrb[0].mxu0
    %2827 = vmatprep.mubr.bf16.mxu0 0
    %2828 = vmatmul.mubr.bf16.gmra.mrb[0].mxu0 %v2752
    %v2829 = vpop.f32.mrb[0].mxu0
    %v2830 = vadd.f32 0.0, %v2829
    %v2831 = vpop.f32.mrb[0].mxu0
    %v2832 = vpop.f32.mrb[0].mxu0
    %v2833 = vadd.f32 0.0, %v2832
    %v2834 = vpop.f32.mrb[0].mxu0
    %2835 = vmatprep.mubr.bf16.mxu0 0
    %2836 = vmatmul.mubr.bf16.gmra.mrb[0].mxu0 %v2755
    %v2837 = vpop.f32.mrb[0].mxu0
    %v2838 = vadd.f32 0.0, %v2837
    %v2839 = vpop.f32.mrb[0].mxu0
    %v2840 = vpop.f32.mrb[0].mxu0
    %v2841 = vadd.f32 0.0, %v2840
    %v2842 = vpop.f32.mrb[0].mxu0
    %2843 = vmatprep.mubr.bf16.mxu0 0
    %2844 = vmatmul.mubr.bf16.gmra.mrb[0].mxu0 %v2758
    %v2845 = vpop.f32.mrb[0].mxu0
    %v2846 = vadd.f32 0.0, %v2845
    %v2847 = vpop.f32.mrb[0].mxu0
    %v2848 = vpop.f32.mrb[0].mxu0
    %v2849 = vadd.f32 0.0, %v2848
    %v2850 = vpop.f32.mrb[0].mxu0
    %2851 = vmatprep.mubr.bf16.mxu0 0
    %2852 = vmatmul.mubr.bf16.gmra.mrb[0].mxu0 %v2761
    %v2853 = vpop.f32.mrb[0].mxu0
    %v2854 = vadd.f32 0.0, %v2853
    %v2855 = vpop.f32.mrb[0].mxu0
    %v2856 = vpop.f32.mrb[0].mxu0
    %v2857 = vadd.f32 0.0, %v2856
    %v2858 = vpop.f32.mrb[0].mxu0
    %2859 = vdwg.mxu0
    %v2860 = vpack.c.bf16 %v2801, %v2798
    %v2861 = vpack.c.bf16 %v2809, %v2806
    %v2862 = vpack.c.bf16 %v2817, %v2814
    %v2863 = vpack.c.bf16 %v2825, %v2822
    %v2864 = vpack.c.bf16 %v2833, %v2830
    %v2865 = vpack.c.bf16 %v2841, %v2838
    %v2866 = vpack.c.bf16 %v2849, %v2846
    %v2867 = vpack.c.bf16 %v2857, %v2854
    %v2884 = vunpack.c.l.b16 %v2666
    %v2885 = vunpack.c.l.b16 %v2667
    %v2886 = vunpack.c.l.b16 %v2668
    %v2887 = vunpack.c.l.b16 %v2669
    %v2888 = vunpack.c.l.b16 %v2670
    %v2889 = vunpack.c.l.b16 %v2671
    %v2890 = vunpack.c.l.b16 %v2672
    %v2891 = vunpack.c.l.b16 %v2673
    %v2892 = vunpack.c.l.b16 %v2674
    %v2893 = vunpack.c.l.b16 %v2675
    %v2894 = vunpack.c.l.b16 %v2676
    %v2895 = vunpack.c.l.b16 %v2677
    %v2896 = vunpack.c.l.b16 %v2678
    %v2897 = vunpack.c.l.b16 %v2679
    %v2898 = vunpack.c.l.b16 %v2680
    %v2899 = vunpack.c.l.b16 %v2681
    %v2900 = vpack.c.b16 %v2885, %v2884
    %v2901 = vpack.c.b16 %v2887, %v2886
    %v2902 = vpack.c.b16 %v2889, %v2888
    %v2903 = vpack.c.b16 %v2891, %v2890
    %v2904 = vpack.c.b16 %v2893, %v2892
    %v2905 = vpack.c.b16 %v2895, %v2894
    %v2906 = vpack.c.b16 %v2897, %v2896
    %v2907 = vpack.c.b16 %v2899, %v2898
    %2916 = vmatprep.subr.bf16.mxu0 0
    %2917 = vmatpush1.bf16.msra.mxu0 %v2860
    %2918 = vmatprep.subr.bf16.mxu0 0
    %2919 = vmatpush1.bf16.msra.mxu0 %v2861
    %2920 = vmatprep.subr.bf16.mxu0 0
    %2921 = vmatpush1.bf16.msra.mxu0 %v2862
    %2922 = vmatprep.subr.bf16.mxu0 0
    %2923 = vmatpush1.bf16.msra.mxu0 %v2863
    %2924 = vmatprep.subr.bf16.mxu0 0
    %2925 = vmatpush1.bf16.msra.mxu0 %v2864
    %2926 = vmatprep.subr.bf16.mxu0 0
    %2927 = vmatpush1.bf16.msra.mxu0 %v2865
    %2928 = vmatprep.subr.bf16.mxu0 0
    %2929 = vmatpush1.bf16.msra.mxu0 %v2866
    %2930 = vmatprep.subr.bf16.mxu0 0
    %2931 = vmatpush1.bf16.msra.mxu0 %v2867
    %2932 = vmatprep.subr.bf16.mxu0 0
    %2933 = vmatpush1.bf16.msra.mxu0 0
    %2934 = vmatprep.subr.bf16.mxu0 0
    %2935 = vmatpush1.bf16.msra.mxu0 0
    %2936 = vmatprep.subr.bf16.mxu0 0
    %2937 = vmatpush1.bf16.msra.mxu0 0
    %2938 = vmatprep.subr.bf16.mxu0 0
    %2939 = vmatpush1.bf16.msra.mxu0 0
    %2940 = vmatprep.subr.bf16.mxu0 0
    %2941 = vmatpush1.bf16.msra.mxu0 0
    %2942 = vmatprep.subr.bf16.mxu0 0
    %2943 = vmatpush1.bf16.msra.mxu0 0
    %2944 = vmatprep.subr.bf16.mxu0 0
    %2945 = vmatpush1.bf16.msra.mxu0 0
    %2946 = vmatprep.subr.bf16.mxu0 0
    %2947 = vmatpush1.bf16.msra.mxu0 0
    %2948 = vmatprep.mubr.bf16.mxu0 0
    %2949 = vmatmul.mubr.bf16.gmra.mrb[0].mxu0 %v2900
    %v2950 = vpop.f32.mrb[0].mxu0
    %v2951 = vadd.f32 %v283, %v2950
    %v2952 = vpop.f32.mrb[0].mxu0
    %v2953 = vpop.f32.mrb[0].mxu0
    %v2954 = vadd.f32 %v283, %v2953
    %v2955 = vpop.f32.mrb[0].mxu0
    %2956 = vmatprep.mubr.bf16.mxu0 0
    %2957 = vmatmul.mubr.bf16.gmra.mrb[0].mxu0 %v2901
    %v2958 = vpop.f32.mrb[0].mxu0
    %v2959 = vadd.f32 %v283, %v2958
    %v2960 = vpop.f32.mrb[0].mxu0
    %v2961 = vpop.f32.mrb[0].mxu0
    %v2962 = vadd.f32 %v283, %v2961
    %v2963 = vpop.f32.mrb[0].mxu0
    %2964 = vmatprep.mubr.bf16.mxu0 0
    %2965 = vmatmul.mubr.bf16.gmra.mrb[0].mxu0 %v2902
    %v2966 = vpop.f32.mrb[0].mxu0
    %v2967 = vadd.f32 %v283, %v2966
    %v2968 = vpop.f32.mrb[0].mxu0
    %v2969 = vpop.f32.mrb[0].mxu0
    %v2970 = vadd.f32 %v283, %v2969
    %v2971 = vpop.f32.mrb[0].mxu0
    %2972 = vmatprep.mubr.bf16.mxu0 0
    %2973 = vmatmul.mubr.bf16.gmra.mrb[0].mxu0 %v2903
    %v2974 = vpop.f32.mrb[0].mxu0
    %v2975 = vadd.f32 %v283, %v2974
    %v2976 = vpop.f32.mrb[0].mxu0
    %v2977 = vpop.f32.mrb[0].mxu0
    %v2978 = vadd.f32 %v283, %v2977
    %v2979 = vpop.f32.mrb[0].mxu0
    %2980 = vmatprep.mubr.bf16.mxu0 0
    %2981 = vmatmul.mubr.bf16.gmra.mrb[0].mxu0 %v2904
    %v2982 = vpop.f32.mrb[0].mxu0
    %v2983 = vadd.f32 %v283, %v2982
    %v2984 = vpop.f32.mrb[0].mxu0
    %v2985 = vpop.f32.mrb[0].mxu0
    %v2986 = vadd.f32 %v283, %v2985
    %v2987 = vpop.f32.mrb[0].mxu0
    %2988 = vmatprep.mubr.bf16.mxu0 0
    %2989 = vmatmul.mubr.bf16.gmra.mrb[0].mxu0 %v2905
    %v2990 = vpop.f32.mrb[0].mxu0
    %v2991 = vadd.f32 %v283, %v2990
    %v2992 = vpop.f32.mrb[0].mxu0
    %v2993 = vpop.f32.mrb[0].mxu0
    %v2994 = vadd.f32 %v283, %v2993
    %v2995 = vpop.f32.mrb[0].mxu0
    %2996 = vmatprep.mubr.bf16.mxu0 0
    %2997 = vmatmul.mubr.bf16.gmra.mrb[0].mxu0 %v2906
    %v2998 = vpop.f32.mrb[0].mxu0
    %v2999 = vadd.f32 %v283, %v2998
    %v3000 = vpop.f32.mrb[0].mxu0
    %v3001 = vpop.f32.mrb[0].mxu0
    %v3002 = vadd.f32 %v283, %v3001
    %v3003 = vpop.f32.mrb[0].mxu0
    %3004 = vmatprep.mubr.bf16.mxu0 0
    %3005 = vmatmul.mubr.bf16.gmra.mrb[0].mxu0 %v2907
    %v3006 = vpop.f32.mrb[0].mxu0
    %v3007 = vadd.f32 %v283, %v3006
    %v3008 = vpop.f32.mrb[0].mxu0
    %v3009 = vpop.f32.mrb[0].mxu0
    %v3010 = vadd.f32 %v283, %v3009
    %v3011 = vpop.f32.mrb[0].mxu0
    %3012 = vdwg.mxu0
    %v3013 = vmax.f32 %v2951, 0.0
    %v3014 = vmax.f32 %v2954, 0.0
    %v3015 = vmax.f32 %v2959, 0.0
    %v3016 = vmax.f32 %v2962, 0.0
    %v3017 = vmax.f32 %v2967, 0.0
    %v3018 = vmax.f32 %v2970, 0.0
    %v3019 = vmax.f32 %v2975, 0.0
    %v3020 = vmax.f32 %v2978, 0.0
    %v3021 = vmax.f32 %v2983, 0.0
    %v3022 = vmax.f32 %v2986, 0.0
    %v3023 = vmax.f32 %v2991, 0.0
    %v3024 = vmax.f32 %v2994, 0.0
    %v3025 = vmax.f32 %v2999, 0.0
    %v3026 = vmax.f32 %v3002, 0.0
    %v3027 = vmax.f32 %v3007, 0.0
    %v3028 = vmax.f32 %v3010, 0.0
    %v3029 = vpack.c.bf16 %v3014, %v3013
    %v3030 = vpack.c.bf16 %v3016, %v3015
    %v3031 = vpack.c.bf16 %v3018, %v3017
    %v3032 = vpack.c.bf16 %v3020, %v3019
    %v3033 = vpack.c.bf16 %v3022, %v3021
    %v3034 = vpack.c.bf16 %v3024, %v3023
    %v3035 = vpack.c.bf16 %v3026, %v3025
    %v3036 = vpack.c.bf16 %v3028, %v3027
    %v3038 = vsel %vm478, %v3029, 0
    %v3041 = vsel %vm478, %v3030, 0
    %v3044 = vsel %vm478, %v3031, 0
    %v3047 = vsel %vm478, %v3032, 0
    %v3050 = vsel %vm478, %v3033, 0
    %v3053 = vsel %vm478, %v3034, 0
    %v3056 = vsel %vm478, %v3035, 0
    %v3059 = vsel %vm478, %v3036, 0
    %3061 = vmatprep.subr.bf16.mxu0 0
    %3062 = vmatpush1.bf16.msra.mxu0 %v470
    %3063 = vmatprep.subr.bf16.mxu0 0
    %3064 = vmatpush1.bf16.msra.mxu0 %v471
    %3065 = vmatprep.subr.bf16.mxu0 0
    %3066 = vmatpush1.bf16.msra.mxu0 %v472
    %3067 = vmatprep.subr.bf16.mxu0 0
    %3068 = vmatpush1.bf16.msra.mxu0 %v473
    %3069 = vmatprep.subr.bf16.mxu0 0
    %3070 = vmatpush1.bf16.msra.mxu0 0
    %3071 = vmatprep.subr.bf16.mxu0 0
    %3072 = vmatpush1.bf16.msra.mxu0 0
    %3073 = vmatprep.subr.bf16.mxu0 0
    %3074 = vmatpush1.bf16.msra.mxu0 0
    %3075 = vmatprep.subr.bf16.mxu0 0
    %3076 = vmatpush1.bf16.msra.mxu0 0
    %3077 = vmatprep.subr.bf16.mxu0 0
    %3078 = vmatpush1.bf16.msra.mxu0 0
    %3079 = vmatprep.subr.bf16.mxu0 0
    %3080 = vmatpush1.bf16.msra.mxu0 0
    %3081 = vmatprep.subr.bf16.mxu0 0
    %3082 = vmatpush1.bf16.msra.mxu0 0
    %3083 = vmatprep.subr.bf16.mxu0 0
    %3084 = vmatpush1.bf16.msra.mxu0 0
    %3085 = vmatprep.subr.bf16.mxu0 0
    %3086 = vmatpush1.bf16.msra.mxu0 0
    %3087 = vmatprep.subr.bf16.mxu0 0
    %3088 = vmatpush1.bf16.msra.mxu0 0
    %3089 = vmatprep.subr.bf16.mxu0 0
    %3090 = vmatpush1.bf16.msra.mxu0 0
    %3091 = vmatprep.subr.bf16.mxu0 0
    %3092 = vmatpush1.bf16.msra.mxu0 0
    %3093 = vmatprep.mubr.bf16.mxu0 0
    %3094 = vmatmul.mubr.bf16.gmra.mrb[0].mxu0 %v3038
    %v3095 = vpop.f32.mrb[0].mxu0
    %v3096 = vadd.f32 0.0, %v3095
    %v3097 = vpop.f32.mrb[0].mxu0
    %v3098 = vpop.f32.mrb[0].mxu0
    %v3099 = vadd.f32 0.0, %v3098
    %v3100 = vpop.f32.mrb[0].mxu0
    %3101 = vmatprep.mubr.bf16.mxu0 0
    %3102 = vmatmul.mubr.bf16.gmra.mrb[0].mxu0 %v3041
    %v3103 = vpop.f32.mrb[0].mxu0
    %v3104 = vadd.f32 0.0, %v3103
    %v3105 = vpop.f32.mrb[0].mxu0
    %v3106 = vpop.f32.mrb[0].mxu0
    %v3107 = vadd.f32 0.0, %v3106
    %v3108 = vpop.f32.mrb[0].mxu0
    %3109 = vmatprep.mubr.bf16.mxu0 0
    %3110 = vmatmul.mubr.bf16.gmra.mrb[0].mxu0 %v3044
    %v3111 = vpop.f32.mrb[0].mxu0
    %v3112 = vadd.f32 0.0, %v3111
    %v3113 = vpop.f32.mrb[0].mxu0
    %v3114 = vpop.f32.mrb[0].mxu0
    %v3115 = vadd.f32 0.0, %v3114
    %v3116 = vpop.f32.mrb[0].mxu0
    %3117 = vmatprep.mubr.bf16.mxu0 0
    %3118 = vmatmul.mubr.bf16.gmra.mrb[0].mxu0 %v3047
    %v3119 = vpop.f32.mrb[0].mxu0
    %v3120 = vadd.f32 0.0, %v3119
    %v3121 = vpop.f32.mrb[0].mxu0
    %v3122 = vpop.f32.mrb[0].mxu0
    %v3123 = vadd.f32 0.0, %v3122
    %v3124 = vpop.f32.mrb[0].mxu0
    %3125 = vmatprep.mubr.bf16.mxu0 0
    %3126 = vmatmul.mubr.bf16.gmra.mrb[0].mxu0 %v3050
    %v3127 = vpop.f32.mrb[0].mxu0
    %v3128 = vadd.f32 0.0, %v3127
    %v3129 = vpop.f32.mrb[0].mxu0
    %v3130 = vpop.f32.mrb[0].mxu0
    %v3131 = vadd.f32 0.0, %v3130
    %v3132 = vpop.f32.mrb[0].mxu0
    %3133 = vmatprep.mubr.bf16.mxu0 0
    %3134 = vmatmul.mubr.bf16.gmra.mrb[0].mxu0 %v3053
    %v3135 = vpop.f32.mrb[0].mxu0
    %v3136 = vadd.f32 0.0, %v3135
    %v3137 = vpop.f32.mrb[0].mxu0
    %v3138 = vpop.f32.mrb[0].mxu0
    %v3139 = vadd.f32 0.0, %v3138
    %v3140 = vpop.f32.mrb[0].mxu0
    %3141 = vmatprep.mubr.bf16.mxu0 0
    %3142 = vmatmul.mubr.bf16.gmra.mrb[0].mxu0 %v3056
    %v3143 = vpop.f32.mrb[0].mxu0
    %v3144 = vadd.f32 0.0, %v3143
    %v3145 = vpop.f32.mrb[0].mxu0
    %v3146 = vpop.f32.mrb[0].mxu0
    %v3147 = vadd.f32 0.0, %v3146
    %v3148 = vpop.f32.mrb[0].mxu0
    %3149 = vmatprep.mubr.bf16.mxu0 0
    %3150 = vmatmul.mubr.bf16.gmra.mrb[0].mxu0 %v3059
    %v3151 = vpop.f32.mrb[0].mxu0
    %v3152 = vadd.f32 0.0, %v3151
    %v3153 = vpop.f32.mrb[0].mxu0
    %v3154 = vpop.f32.mrb[0].mxu0
    %v3155 = vadd.f32 0.0, %v3154
    %v3156 = vpop.f32.mrb[0].mxu0
    %3157 = vdwg.mxu0
    %v3158 = vpack.c.bf16 %v3099, %v3096
    %v3159 = vpack.c.bf16 %v3107, %v3104
    %v3160 = vpack.c.bf16 %v3115, %v3112
    %v3161 = vpack.c.bf16 %v3123, %v3120
    %v3162 = vpack.c.bf16 %v3131, %v3128
    %v3163 = vpack.c.bf16 %v3139, %v3136
    %v3164 = vpack.c.bf16 %v3147, %v3144
    %v3165 = vpack.c.bf16 %v3155, %v3152
    %3166 = vmatprep.subr.bf16.mxu0 0
    %3167 = vmatpush1.bf16.msra.mxu0 %v3158
    %3168 = vmatprep.subr.bf16.mxu0 0
    %3169 = vmatpush1.bf16.msra.mxu0 %v3159
    %3170 = vmatprep.subr.bf16.mxu0 0
    %3171 = vmatpush1.bf16.msra.mxu0 %v3160
    %3172 = vmatprep.subr.bf16.mxu0 0
    %3173 = vmatpush1.bf16.msra.mxu0 %v3161
    %3174 = vmatprep.subr.bf16.mxu0 0
    %3175 = vmatpush1.bf16.msra.mxu0 %v3162
    %3176 = vmatprep.subr.bf16.mxu0 0
    %3177 = vmatpush1.bf16.msra.mxu0 %v3163
    %3178 = vmatprep.subr.bf16.mxu0 0
    %3179 = vmatpush1.bf16.msra.mxu0 %v3164
    %3180 = vmatprep.subr.bf16.mxu0 0
    %3181 = vmatpush1.bf16.msra.mxu0 %v3165
    %3182 = vmatprep.subr.bf16.mxu0 0
    %3183 = vmatpush1.bf16.msra.mxu0 0
    %3184 = vmatprep.subr.bf16.mxu0 0
    %3185 = vmatpush1.bf16.msra.mxu0 0
    %3186 = vmatprep.subr.bf16.mxu0 0
    %3187 = vmatpush1.bf16.msra.mxu0 0
    %3188 = vmatprep.subr.bf16.mxu0 0
    %3189 = vmatpush1.bf16.msra.mxu0 0
    %3190 = vmatprep.subr.bf16.mxu0 0
    %3191 = vmatpush1.bf16.msra.mxu0 0
    %3192 = vmatprep.subr.bf16.mxu0 0
    %3193 = vmatpush1.bf16.msra.mxu0 0
    %3194 = vmatprep.subr.bf16.mxu0 0
    %3195 = vmatpush1.bf16.msra.mxu0 0
    %3196 = vmatprep.subr.bf16.mxu0 0
    %3197 = vmatpush1.bf16.msra.mxu0 0
    %3198 = vmatprep.mubr.bf16.mxu0 0
    %3199 = vmatmul.mubr.bf16.gmra.mrb[0].mxu0 %v2900
    %v3200 = vpop.f32.mrb[0].mxu0
    %v3201 = vadd.f32 %v612, %v3200
    %v3202 = vpop.f32.mrb[0].mxu0
    %v3203 = vpop.f32.mrb[0].mxu0
    %v3204 = vadd.f32 %v612, %v3203
    %v3205 = vpop.f32.mrb[0].mxu0
    %3206 = vmatprep.mubr.bf16.mxu0 0
    %3207 = vmatmul.mubr.bf16.gmra.mrb[0].mxu0 %v2901
    %v3208 = vpop.f32.mrb[0].mxu0
    %v3209 = vadd.f32 %v612, %v3208
    %v3210 = vpop.f32.mrb[0].mxu0
    %v3211 = vpop.f32.mrb[0].mxu0
    %v3212 = vadd.f32 %v612, %v3211
    %v3213 = vpop.f32.mrb[0].mxu0
    %3214 = vmatprep.mubr.bf16.mxu0 0
    %3215 = vmatmul.mubr.bf16.gmra.mrb[0].mxu0 %v2902
    %v3216 = vpop.f32.mrb[0].mxu0
    %v3217 = vadd.f32 %v612, %v3216
    %v3218 = vpop.f32.mrb[0].mxu0
    %v3219 = vpop.f32.mrb[0].mxu0
    %v3220 = vadd.f32 %v612, %v3219
    %v3221 = vpop.f32.mrb[0].mxu0
    %3222 = vmatprep.mubr.bf16.mxu0 0
    %3223 = vmatmul.mubr.bf16.gmra.mrb[0].mxu0 %v2903
    %v3224 = vpop.f32.mrb[0].mxu0
    %v3225 = vadd.f32 %v612, %v3224
    %v3226 = vpop.f32.mrb[0].mxu0
    %v3227 = vpop.f32.mrb[0].mxu0
    %v3228 = vadd.f32 %v612, %v3227
    %v3229 = vpop.f32.mrb[0].mxu0
    %3230 = vmatprep.mubr.bf16.mxu0 0
    %3231 = vmatmul.mubr.bf16.gmra.mrb[0].mxu0 %v2904
    %v3232 = vpop.f32.mrb[0].mxu0
    %v3233 = vadd.f32 %v612, %v3232
    %v3234 = vpop.f32.mrb[0].mxu0
    %v3235 = vpop.f32.mrb[0].mxu0
    %v3236 = vadd.f32 %v612, %v3235
    %v3237 = vpop.f32.mrb[0].mxu0
    %3238 = vmatprep.mubr.bf16.mxu0 0
    %3239 = vmatmul.mubr.bf16.gmra.mrb[0].mxu0 %v2905
    %v3240 = vpop.f32.mrb[0].mxu0
    %v3241 = vadd.f32 %v612, %v3240
    %v3242 = vpop.f32.mrb[0].mxu0
    %v3243 = vpop.f32.mrb[0].mxu0
    %v3244 = vadd.f32 %v612, %v3243
    %v3245 = vpop.f32.mrb[0].mxu0
    %3246 = vmatprep.mubr.bf16.mxu0 0
    %3247 = vmatmul.mubr.bf16.gmra.mrb[0].mxu0 %v2906
    %v3248 = vpop.f32.mrb[0].mxu0
    %v3249 = vadd.f32 %v612, %v3248
    %v3250 = vpop.f32.mrb[0].mxu0
    %v3251 = vpop.f32.mrb[0].mxu0
    %v3252 = vadd.f32 %v612, %v3251
    %v3253 = vpop.f32.mrb[0].mxu0
    %3254 = vmatprep.mubr.bf16.mxu0 0
    %3255 = vmatmul.mubr.bf16.gmra.mrb[0].mxu0 %v2907
    %v3256 = vpop.f32.mrb[0].mxu0
    %v3257 = vadd.f32 %v612, %v3256
    %v3258 = vpop.f32.mrb[0].mxu0
    %v3259 = vpop.f32.mrb[0].mxu0
    %v3260 = vadd.f32 %v612, %v3259
    %v3261 = vpop.f32.mrb[0].mxu0
    %3262 = vdwg.mxu0
    %v3263 = vmax.f32 %v3201, 0.0
    %v3264 = vmax.f32 %v3204, 0.0
    %v3265 = vmax.f32 %v3209, 0.0
    %v3266 = vmax.f32 %v3212, 0.0
    %v3267 = vmax.f32 %v3217, 0.0
    %v3268 = vmax.f32 %v3220, 0.0
    %v3269 = vmax.f32 %v3225, 0.0
    %v3270 = vmax.f32 %v3228, 0.0
    %v3271 = vmax.f32 %v3233, 0.0
    %v3272 = vmax.f32 %v3236, 0.0
    %v3273 = vmax.f32 %v3241, 0.0
    %v3274 = vmax.f32 %v3244, 0.0
    %v3275 = vmax.f32 %v3249, 0.0
    %v3276 = vmax.f32 %v3252, 0.0
    %v3277 = vmax.f32 %v3257, 0.0
    %v3278 = vmax.f32 %v3260, 0.0
    %s3279 = sadd.s32 %s727, 3
    %s3280 = sld [smem:[#allocation3 + %s3279]]
    %v3281 = vstv %s3280
    %vm3282 = vcmp.lt.s32.totalorder %v46, %v3281
    %vm3283 = vcmp.lt.s32.totalorder %v47, %v3281
    %vm3284 = vcmp.lt.s32.totalorder %v48, %v3281
    %vm3285 = vcmp.lt.s32.totalorder %v49, %v3281
    %vm3286 = vcmp.lt.s32.totalorder %v50, %v3281
    %vm3287 = vcmp.lt.s32.totalorder %v51, %v3281
    %vm3288 = vcmp.lt.s32.totalorder %v52, %v3281
    %vm3289 = vcmp.lt.s32.totalorder %v53, %v3281
    %vm3290 = vcmp.lt.s32.totalorder %v54, %v3281
    %vm3291 = vcmp.lt.s32.totalorder %v55, %v3281
    %vm3292 = vcmp.lt.s32.totalorder %v56, %v3281
    %vm3293 = vcmp.lt.s32.totalorder %v57, %v3281
    %vm3294 = vcmp.lt.s32.totalorder %v58, %v3281
    %vm3295 = vcmp.lt.s32.totalorder %v59, %v3281
    %vm3296 = vcmp.lt.s32.totalorder %v60, %v3281
    %vm3297 = vcmp.lt.s32.totalorder %v61, %v3281
    %v3298 = vsel %vm3282, %v3263, -1e+30
    %v3299 = vsel %vm3283, %v3264, -1e+30
    %v3300 = vsel %vm3284, %v3265, -1e+30
    %v3301 = vsel %vm3285, %v3266, -1e+30
    %v3302 = vsel %vm3286, %v3267, -1e+30
    %v3303 = vsel %vm3287, %v3268, -1e+30
    %v3304 = vsel %vm3288, %v3269, -1e+30
    %v3305 = vsel %vm3289, %v3270, -1e+30
    %v3306 = vsel %vm3290, %v3271, -1e+30
    %v3307 = vsel %vm3291, %v3272, -1e+30
    %v3308 = vsel %vm3292, %v3273, -1e+30
    %v3309 = vsel %vm3293, %v3274, -1e+30
    %v3310 = vsel %vm3294, %v3275, -1e+30
    %v3311 = vsel %vm3295, %v3276, -1e+30
    %v3312 = vsel %vm3296, %v3277, -1e+30
    %v3313 = vsel %vm3297, %v3278, -1e+30
    %v3314 = vsel %vm762, %v3298, -inf
    %v3315 = vsel %vm762, %v3299, -inf
    %v3316 = vsel %vm762, %v3300, -inf
    %v3317 = vsel %vm762, %v3301, -inf
    %v3318 = vsel %vm762, %v3302, -inf
    %v3319 = vmax.f32 %v3314, %v3318
    %v3320 = vsel %vm762, %v3303, -inf
    %v3321 = vmax.f32 %v3315, %v3320
    %v3322 = vsel %vm762, %v3304, -inf
    %v3323 = vmax.f32 %v3316, %v3322
    %v3324 = vsel %vm762, %v3305, -inf
    %v3325 = vmax.f32 %v3317, %v3324
    %v3326 = vsel %vm762, %v3306, -inf
    %v3327 = vmax.f32 %v3319, %v3326
    %v3328 = vsel %vm762, %v3307, -inf
    %v3329 = vmax.f32 %v3321, %v3328
    %v3330 = vsel %vm762, %v3308, -inf
    %v3331 = vmax.f32 %v3323, %v3330
    %v3332 = vsel %vm762, %v3309, -inf
    %v3333 = vmax.f32 %v3325, %v3332
    %v3334 = vsel %vm762, %v3310, -inf
    %v3335 = vmax.f32 %v3327, %v3334
    %v3336 = vsel %vm762, %v3311, -inf
    %v3337 = vmax.f32 %v3329, %v3336
    %v3338 = vsel %vm762, %v3312, -inf
    %v3339 = vmax.f32 %v3331, %v3338
    %v3340 = vsel %vm762, %v3313, -inf
    %v3341 = vmax.f32 %v3333, %v3340
    %v3342 = vmax.f32 %v3335, %v3337
    %v3343 = vmax.f32 %v3339, %v3341
    %v3344 = vmax.f32 %v3342, %v3343
    %v3345 = vrot.slane %v3344, 4
    %v3346 = vmax.f32 %v3344, %v3345
    %v3347 = vrot.slane %v3346, 2
    %v3348 = vmax.f32 %v3346, %v3347
    %v3349 = vrot.slane %v3348, 1
    %v3350 = vmax.f32 %v3348, %v3349
    %vm3351 = vcmp.ge.f32.partialorder %v3298, %v3350
    %vm3352 = vcmp.ge.f32.partialorder %v3299, %v3350
    %vm3353 = vcmp.ge.f32.partialorder %v3300, %v3350
    %vm3354 = vcmp.ge.f32.partialorder %v3301, %v3350
    %vm3355 = vcmp.ge.f32.partialorder %v3302, %v3350
    %vm3356 = vcmp.ge.f32.partialorder %v3303, %v3350
    %vm3357 = vcmp.ge.f32.partialorder %v3304, %v3350
    %vm3358 = vcmp.ge.f32.partialorder %v3305, %v3350
    %vm3359 = vcmp.ge.f32.partialorder %v3306, %v3350
    %vm3360 = vcmp.ge.f32.partialorder %v3307, %v3350
    %vm3361 = vcmp.ge.f32.partialorder %v3308, %v3350
    %vm3362 = vcmp.ge.f32.partialorder %v3309, %v3350
    %vm3363 = vcmp.ge.f32.partialorder %v3310, %v3350
    %vm3364 = vcmp.ge.f32.partialorder %v3311, %v3350
    %vm3365 = vcmp.ge.f32.partialorder %v3312, %v3350
    %vm3366 = vcmp.ge.f32.partialorder %v3313, %v3350
    %v3367 = vsel %vm3351, %v46, 128
    %v3368 = vsel %vm3352, %v47, 128
    %v3369 = vsel %vm3353, %v48, 128
    %v3370 = vsel %vm3354, %v49, 128
    %v3371 = vsel %vm3355, %v50, 128
    %v3372 = vsel %vm3356, %v51, 128
    %v3373 = vsel %vm3357, %v52, 128
    %v3374 = vsel %vm3358, %v53, 128
    %v3375 = vsel %vm3359, %v54, 128
    %v3376 = vsel %vm3360, %v55, 128
    %v3377 = vsel %vm3361, %v56, 128
    %v3378 = vsel %vm3362, %v57, 128
    %v3379 = vsel %vm3363, %v58, 128
    %v3380 = vsel %vm3364, %v59, 128
    %v3381 = vsel %vm3365, %v60, 128
    %v3382 = vsel %vm3366, %v61, 128
    %v3383 = vsel %vm762, %v3367, 2147483647
    %v3384 = vsel %vm762, %v3368, 2147483647
    %v3385 = vsel %vm762, %v3369, 2147483647
    %v3386 = vsel %vm762, %v3370, 2147483647
    %v3387 = vsel %vm762, %v3371, 2147483647
    %vm3388 = vcmp.lt.s32.totalorder %v3383, %v3387
    %v3389 = vsel %vm3388, %v3383, %v3387
    %v3390 = vsel %vm762, %v3372, 2147483647
    %vm3391 = vcmp.lt.s32.totalorder %v3384, %v3390
    %v3392 = vsel %vm3391, %v3384, %v3390
    %v3393 = vsel %vm762, %v3373, 2147483647
    %vm3394 = vcmp.lt.s32.totalorder %v3385, %v3393
    %v3395 = vsel %vm3394, %v3385, %v3393
    %v3396 = vsel %vm762, %v3374, 2147483647
    %vm3397 = vcmp.lt.s32.totalorder %v3386, %v3396
    %v3398 = vsel %vm3397, %v3386, %v3396
    %v3399 = vsel %vm762, %v3375, 2147483647
    %vm3400 = vcmp.lt.s32.totalorder %v3389, %v3399
    %v3401 = vsel %vm3400, %v3389, %v3399
    %v3402 = vsel %vm762, %v3376, 2147483647
    %vm3403 = vcmp.lt.s32.totalorder %v3392, %v3402
    %v3404 = vsel %vm3403, %v3392, %v3402
    %v3405 = vsel %vm762, %v3377, 2147483647
    %vm3406 = vcmp.lt.s32.totalorder %v3395, %v3405
    %v3407 = vsel %vm3406, %v3395, %v3405
    %v3408 = vsel %vm762, %v3378, 2147483647
    %vm3409 = vcmp.lt.s32.totalorder %v3398, %v3408
    %v3410 = vsel %vm3409, %v3398, %v3408
    %v3411 = vsel %vm762, %v3379, 2147483647
    %vm3412 = vcmp.lt.s32.totalorder %v3401, %v3411
    %v3413 = vsel %vm3412, %v3401, %v3411
    %v3414 = vsel %vm762, %v3380, 2147483647
    %vm3415 = vcmp.lt.s32.totalorder %v3404, %v3414
    %v3416 = vsel %vm3415, %v3404, %v3414
    %v3417 = vsel %vm762, %v3381, 2147483647
    %vm3418 = vcmp.lt.s32.totalorder %v3407, %v3417
    %v3419 = vsel %vm3418, %v3407, %v3417
    %v3420 = vsel %vm762, %v3382, 2147483647
    %vm3421 = vcmp.lt.s32.totalorder %v3410, %v3420
    %v3422 = vsel %vm3421, %v3410, %v3420
    %vm3423 = vcmp.lt.s32.totalorder %v3413, %v3416
    %v3424 = vsel %vm3423, %v3413, %v3416
    %vm3425 = vcmp.lt.s32.totalorder %v3419, %v3422
    %v3426 = vsel %vm3425, %v3419, %v3422
    %vm3427 = vcmp.lt.s32.totalorder %v3424, %v3426
    %v3428 = vsel %vm3427, %v3424, %v3426
    %v3429 = vrot.slane %v3428, 4
    %vm3430 = vcmp.lt.s32.totalorder %v3428, %v3429
    %v3431 = vsel %vm3430, %v3428, %v3429
    %v3432 = vrot.slane %v3431, 2
    %vm3433 = vcmp.lt.s32.totalorder %v3431, %v3432
    %v3434 = vsel %vm3433, %v3431, %v3432
    %v3435 = vrot.slane %v3434, 1
    %vm3436 = vcmp.lt.s32.totalorder %v3434, %v3435
    %v3437 = vsel %vm3436, %v3434, %v3435
    %3438 = vset.pattern.permute.xlu0 63
    %3439 = vperm.xlu0 %3438, %v3437
    %v3440 = vpop.permute.xlu0 %3439
    %vm3441 = vcmp.eq.s32.totalorder %v63, %v3440
    %v3442 = vsel %vm3441, 1, 0
    %v3443 = vcvt.s32.f32 %v3442
    %3444 = vmatprep.subr.mxu0 0.0
    %3445 = vmatpush1.msra.mxu0 %v3263
    %3446 = vmatprep.subr.mxu0 0.0
    %3447 = vmatpush1.msra.mxu0 %v3264
    %3448 = vmatprep.subr.mxu0 0.0
    %3449 = vmatpush1.msra.mxu0 %v3265
    %3450 = vmatprep.subr.mxu0 0.0
    %3451 = vmatpush1.msra.mxu0 %v3266
    %3452 = vmatprep.subr.mxu0 0.0
    %3453 = vmatpush1.msra.mxu0 %v3267
    %3454 = vmatprep.subr.mxu0 0.0
    %3455 = vmatpush1.msra.mxu0 %v3268
    %3456 = vmatprep.subr.mxu0 0.0
    %3457 = vmatpush1.msra.mxu0 %v3269
    %3458 = vmatprep.subr.mxu0 0.0
    %3459 = vmatpush1.msra.mxu0 %v3270
    %3460 = vmatprep.subr.mxu0 0.0
    %3461 = vmatpush1.msra.mxu0 %v3271
    %3462 = vmatprep.subr.mxu0 0.0
    %3463 = vmatpush1.msra.mxu0 %v3272
    %3464 = vmatprep.subr.mxu0 0.0
    %3465 = vmatpush1.msra.mxu0 %v3273
    %3466 = vmatprep.subr.mxu0 0.0
    %3467 = vmatpush1.msra.mxu0 %v3274
    %3468 = vmatprep.subr.mxu0 0.0
    %3469 = vmatpush1.msra.mxu0 %v3275
    %3470 = vmatprep.subr.mxu0 0.0
    %3471 = vmatpush1.msra.mxu0 %v3276
    %3472 = vmatprep.subr.mxu0 0.0
    %3473 = vmatpush1.msra.mxu0 %v3277
    %3474 = vmatprep.subr.mxu0 0.0
    %3475 = vmatpush1.msra.mxu0 %v3278
    %3476 = vmatprep.subr.mxu0 0.0
    %3477 = vmatpush1.msra.mxu0 0.0
    %3478 = vmatprep.subr.mxu0 0.0
    %3479 = vmatpush1.msra.mxu0 0.0
    %3480 = vmatprep.subr.mxu0 0.0
    %3481 = vmatpush1.msra.mxu0 0.0
    %3482 = vmatprep.subr.mxu0 0.0
    %3483 = vmatpush1.msra.mxu0 0.0
    %3484 = vmatprep.subr.mxu0 0.0
    %3485 = vmatpush1.msra.mxu0 0.0
    %3486 = vmatprep.subr.mxu0 0.0
    %3487 = vmatpush1.msra.mxu0 0.0
    %3488 = vmatprep.subr.mxu0 0.0
    %3489 = vmatpush1.msra.mxu0 0.0
    %3490 = vmatprep.subr.mxu0 0.0
    %3491 = vmatpush1.msra.mxu0 0.0
    %3492 = vmatprep.subr.mxu0 0.0
    %3493 = vmatpush1.msra.mxu0 0.0
    %3494 = vmatprep.subr.mxu0 0.0
    %3495 = vmatpush1.msra.mxu0 0.0
    %3496 = vmatprep.subr.mxu0 0.0
    %3497 = vmatpush1.msra.mxu0 0.0
    %3498 = vmatprep.subr.mxu0 0.0
    %3499 = vmatpush1.msra.mxu0 0.0
    %3500 = vmatprep.subr.mxu0 0.0
    %3501 = vmatpush1.msra.mxu0 0.0
    %3502 = vmatprep.subr.mxu0 0.0
    %3503 = vmatpush1.msra.mxu0 0.0
    %3504 = vmatprep.subr.mxu0 0.0
    %3505 = vmatpush1.msra.mxu0 0.0
    %3506 = vmatprep.subr.mxu0 0.0
    %3507 = vmatpush1.msra.mxu0 0.0
    %3508 = vmatprep.mubr.f32.mxu0 0.0
    %3509 = vmatmul.mubr.f32.gmra.mrb[0].mxu0 %v3443
    %v3510 = vpop.f32.mrb[0].mxu0
    %v3511 = vadd.f32 0.0, %v3510
    %v3512 = vpop.f32.mrb[0].mxu0
    %3513 = vdwg.mxu0
    %3514 = vst.msk [vmem:[#allocation4 + $0x3] sm:$0x1] %vm963, %v3511
    // Predicated region
    $region26: #{tpu_custom_call.1} parent=1 // pred_check
      _
    $region27: #{tpu_custom_call.1} parent=1 // pred_check_branch
      %3516 = sbr.rel (0) target = $region29
    $region28: #{tpu_custom_call.1} parent=1 // pred_region
      %s3518 = ssub.s32 64, 64
      %3519 = vsyncadd [#allocation5], %s3518
      %s3521 = sshll.u32 [#allocation4], 4
      %s3522 = int_to_ptr.vmem [resolvable:$true] %s3521
      %3524 = dma.vmem_to_hbm [thread:$0]  %s3522, 64, %s7, [#allocation5]
    $region29: #{tpu_custom_call.1} parent=1 // pred_fallthru
      _
    // Predicated region
    $region30: #{tpu_custom_call.1} parent=1 // pred_check
      _
    $region31: #{tpu_custom_call.1} parent=1 // pred_check_branch
      %3526 = sbr.rel (0) target = $region33
    $region32: #{tpu_custom_call.1} parent=1 // pred_region
      %3527 = dma.done [#allocation5], 64
    $region33: #{tpu_custom_call.1} parent=1 // pred_fallthru
      _
    %3528 = vsyncpa [#allocation5], 1

</llo_original>
